<compile_context>
chip_gen: v7x
topology: tpu7x:2x2x1
jax: 0.10.0
libtpu: 0.0.40
codegen_flags: <defaults>
</compile_context>

<pallas_src>
import numpy as np
import jax
import jax.numpy as jnp
from jax import lax
from jax.experimental import pallas as pl
from jax.experimental.pallas import tpu as pltpu

NEG_SLOPE = 0.2          # LeakyReLU slope assumed for Encoder/Decoder
EPS = 1e-8
LANE = 128

PARAM_KEYS = ("audio_content_map", "fusion_predictor", "clip_text_map",
              "clip_image_map", "emo_encoder", "semantic_emotion_map", "decoder")


# ----------------------------------------------------------------------------
# in-kernel helper: Encoder/Decoder MLP (Linear -> LeakyReLU(0.2) -> Linear)
# weights are bf16: activations cast to the weight dtype at the dot (native
# bf16 MXU path), f32 accumulation, f32 elementwise.
# ----------------------------------------------------------------------------
def _mlp(x, w1, b1, w2, b2):
    h = jnp.dot(x.astype(w1.dtype), w1, preferred_element_type=jnp.float32) + b1
    h = jnp.where(h > 0, h, NEG_SLOPE * h)
    return jnp.dot(h.astype(w2.dtype), w2, preferred_element_type=jnp.float32) + b2


# ----------------------------------------------------------------------------
# The fused CLIPNet.forward kernel (one grid step == one sample)
# ----------------------------------------------------------------------------
def _make_clipnet_kernel(S, D, Hd, lane):
    def kernel(hid_ref, e2v_ref, clip_ref, label_ref, interp_ref,
               acm_w1, acm_b1, acm_w2, acm_b2,
               fp_w1, fp_b1, fp_w2, fp_b2,
               cl_w1, cl_b1, cl_w2, cl_b2,
               emo_w1, emo_b1, emo_w2, emo_b2,
               sem_w1, sem_b1, sem_w2, sem_b2,
               dec_w1e, dec_w1c, dec_b1, dec_w2, dec_b2,
               recon_ref, loss_ref):
        hid = hid_ref[0]          # (S, Wh)   wav2vec2 last_hidden_state
        e2v = e2v_ref[0]          # (Tp, Wh)  emotion2vec frames (zero-padded rows)
        clip = clip_ref[0]        # (2, 512)  row0 = text feature, row1 = image feature
        label = label_ref[0]      # (S, lane) rig targets (zero-padded channels)

        # --- audio content branch ------------------------------------------------
        audio_cont = _mlp(hid, acm_w1[...], acm_b1[...], acm_w2[...], acm_b2[...])   # (S, L)

        # --- emotion intensity branch: F.interpolate(linear, align_corners=True)
        #     folded into a precomputed (S, Tp) matmul + fusion_predictor ----------
        audio_feat = jnp.dot(interp_ref[...], e2v,
                             preferred_element_type=jnp.float32,
                             precision=lax.Precision.HIGHEST)                        # (S, Wh)
        intensity = _mlp(audio_feat, fp_w1[...], fp_b1[...], fp_w2[...], fp_b2[...]) # (S, 1)

        # --- fused CLIP text+image maps (w1 concat along N, w2 block-diagonal) ----
        cw1, cw2 = cl_w1[...], cl_w2[...]
        h = jnp.dot(clip.astype(cw1.dtype), cw1,
                    preferred_element_type=jnp.float32) + cl_b1[...]                 # (2, 2*Ch)
        h = jnp.where(h > 0, h, NEG_SLOPE * h)
        emo2 = jnp.dot(h.astype(cw2.dtype), cw2,
                       preferred_element_type=jnp.float32) + cl_b2[...]              # (2, 2*Hd)
        text_emo = emo2[0:1, 0:Hd]                                                   # (1, Hd)
        image_emo = emo2[1:2, Hd:2 * Hd]                                             # (1, Hd)

        # --- motion emotion embedding ---------------------------------------------
        motion_emo = _mlp(label, emo_w1[...], emo_b1[...], emo_w2[...], emo_b2[...]) # (S, L)
        motion_norm = jnp.sqrt(jnp.sum(motion_emo * motion_emo))

        # --- intensity-scaled emotion features: text & image stacked along M ------
        t_norm = jnp.sqrt(jnp.sum(text_emo * text_emo))
        i_norm = jnp.sqrt(jnp.sum(image_emo * image_emo))
        scaled = jnp.concatenate(
            [text_emo * (intensity / (t_norm + EPS)),
             image_emo * (intensity / (i_norm + EPS))], axis=0)                      # (2S, Hd)
        emo_feat = _mlp(scaled, sem_w1[...], sem_b1[...], sem_w2[...], sem_b2[...])  # (2S, L)

        # --- decoder: cat order [emo_feat, audio_cont]; content half computed once
        w1e, w1c, w2d = dec_w1e[...], dec_w1c[...], dec_w2[...]
        cont_h = jnp.dot(audio_cont.astype(w1c.dtype), w1c,
                         preferred_element_type=jnp.float32)                         # (S, H)
        hd = (jnp.dot(emo_feat.astype(w1e.dtype), w1e,
                      preferred_element_type=jnp.float32)
              + jnp.concatenate([cont_h, cont_h], axis=0) + dec_b1[...])             # (2S, H)
        hd = jnp.where(hd > 0, hd, NEG_SLOPE * hd)
        recon = jnp.dot(hd.astype(w2d.dtype), w2d,
                        preferred_element_type=jnp.float32) + dec_b2[...]            # (2S, lane)
        recon_ref[0] = recon                                                         # lane-dense store

        # --- losses -----------------------------------------------------------------
        label2 = jnp.concatenate([label, label], axis=0)                             # (2S, lane)
        diff = recon - label2                                                        # pad cols are exactly 0
        recon_loss = jnp.sum(diff * diff) * (1.0 / (S * D))                          # mse_text + mse_image
        ef_t, ef_i = emo_feat[:S], emo_feat[S:]
        n_t = jnp.sqrt(jnp.sum(ef_t * ef_t))
        n_i = jnp.sqrt(jnp.sum(ef_i * ef_i))
        sim_t = jnp.sum(ef_t * motion_emo) / (jnp.maximum(n_t, EPS)
                                              * jnp.maximum(motion_norm, EPS))
        sim_i = jnp.sum(ef_i * motion_emo) / (jnp.maximum(n_i, EPS)
                                              * jnp.maximum(motion_norm, EPS))
        emb_loss = 2.0 - sim_i - sim_t
        total = recon_loss + 0.1 * emb_loss

        lane_idx = lax.broadcasted_iota(jnp.int32, (1, lane), 1)
        lv = jnp.where(lane_idx == 0, recon_loss, 0.0)
        lv = jnp.where(lane_idx == 1, emb_loss, lv)
        lv = jnp.where(lane_idx == 2, total, lv)
        loss_ref[0] = lv                                                             # lane-dense store

    return kernel


# ----------------------------------------------------------------------------
# Glue (plain JAX / numpy)
# ----------------------------------------------------------------------------
def make_interp_matrix(t_in, s_out):
    """(s_out, t_in) matrix reproducing F.interpolate(mode='linear', align_corners=True)."""
    if s_out == 1:
        pos = np.zeros((1,), dtype=np.float64)
    else:
        pos = np.arange(s_out, dtype=np.float64) * (t_in - 1) / (s_out - 1)
    lo = np.floor(pos).astype(np.int64)
    hi = np.minimum(lo + 1, t_in - 1)
    w = (pos - lo).astype(np.float32)
    m = np.zeros((s_out, t_in), dtype=np.float32)
    m[np.arange(s_out), lo] += 1.0 - w
    m[np.arange(s_out), hi] += w
    return jnp.asarray(m)


def make_encoder_params(key, d_in, d_hid, d_out, weight_dtype=jnp.bfloat16):
    k1, k2, k3, k4 = jax.random.split(key, 4)
    s = 0.05
    return dict(
        w1=(s * jax.random.normal(k1, (d_in, d_hid), jnp.float32)).astype(weight_dtype),
        b1=s * jax.random.normal(k2, (1, d_hid), jnp.float32),
        w2=(s * jax.random.normal(k3, (d_hid, d_out), jnp.float32)).astype(weight_dtype),
        b2=s * jax.random.normal(k4, (1, d_out), jnp.float32),
    )


def _prep_weights(params, D, lane):
    """Flatten / fuse / pad the Encoder weights for the kernel (bf16 weights, f32 biases)."""
    bf = jnp.bfloat16
    W = lambda x: x.astype(bf)
    F32 = lambda x: x.astype(jnp.float32)
    acm, fp, ctm, cim, emo, sem, dec = (params[k] for k in PARAM_KEYS)

    Ch = ctm["w2"].shape[0]            # CLIP-map hidden (256)
    Hd = ctm["w2"].shape[1]            # args.hidden_dim
    L = dec["w1"].shape[0] // 2        # args.latent_dim

    # fused CLIP text+image map: one matmul per layer serves both branches
    cl_w1 = jnp.concatenate([W(ctm["w1"]), W(cim["w1"])], axis=1)          # (512, 2*Ch)
    cl_b1 = jnp.concatenate([F32(ctm["b1"]), F32(cim["b1"])], axis=1)      # (1, 2*Ch)
    zero = jnp.zeros((Ch, Hd), bf)
    cl_w2 = jnp.concatenate(
        [jnp.concatenate([W(ctm["w2"]), zero], axis=1),
         jnp.concatenate([zero, W(cim["w2"])], axis=1)], axis=0)           # (2*Ch, 2*Hd) block-diag
    cl_b2 = jnp.concatenate([F32(ctm["b2"]), F32(cim["b2"])], axis=1)      # (1, 2*Hd)

    # emo_encoder first layer padded to match the lane-wide zero-padded label
    emo_w1 = jnp.pad(W(emo["w1"]), ((0, lane - D), (0, 0)))                # (lane, H)

    # decoder: split w1 by cat order [emo_feat, audio_cont]; pad w2/b2 to lane width
    dec_w1e = W(dec["w1"][:L])                                             # (L, H)
    dec_w1c = W(dec["w1"][L:])                                             # (L, H)
    dec_w2 = jnp.pad(W(dec["w2"]), ((0, 0), (0, lane - D)))                # (H, lane)
    dec_b2 = jnp.pad(F32(dec["b2"]), ((0, 0), (0, lane - D)))              # (1, lane)

    weights = [
        W(acm["w1"]), F32(acm["b1"]), W(acm["w2"]), F32(acm["b2"]),
        W(fp["w1"]), F32(fp["b1"]), W(fp["w2"]), F32(fp["b2"]),
        cl_w1, cl_b1, cl_w2, cl_b2,
        emo_w1, F32(emo["b1"]), W(emo["w2"]), F32(emo["b2"]),
        W(sem["w1"]), F32(sem["b1"]), W(sem["w2"]), F32(sem["b2"]),
        dec_w1e, dec_w1c, F32(dec["b1"]), dec_w2, dec_b2,
    ]
    return weights, Hd


# ----------------------------------------------------------------------------
# CLIPNet.forward  (pretrained-tower outputs are taken as inputs)
# ----------------------------------------------------------------------------
# TODO(synk): Wav2Vec2Model / emotion2vec / CLIP encoders and the file/image/text
# I/O are not translatable to Pallas; hidden_states, emo2vec_feats, text_feature
# and image_feature stand in for their outputs.
def clipnet_forward(params, hidden_states, emo2vec_feats, text_feature, image_feature, label):
    """hidden_states (B,S,Wh), emo2vec_feats (B,T,Wh), text/image_feature (B,512), label (B,S,D)."""
    B, S, D = label.shape
    T = emo2vec_feats.shape[1]
    lane = max(LANE, ((D + LANE - 1) // LANE) * LANE)
    Tp = ((T + 7) // 8) * 8

    interp = jnp.pad(make_interp_matrix(T, S), ((0, 0), (0, Tp - T)))                      # (S, Tp)
    e2v = jnp.pad(emo2vec_feats.astype(jnp.float32), ((0, 0), (0, Tp - T), (0, 0)))        # (B, Tp, Wh)
    clip_feats = jnp.stack([text_feature, image_feature], axis=1).astype(jnp.float32)      # (B, 2, 512)
    label_p = jnp.pad(label.astype(jnp.float32), ((0, 0), (0, 0), (0, lane - D)))          # (B, S, lane)

    weights, Hd = _prep_weights(params, D, lane)

    data_args = [hidden_states.astype(jnp.float32), e2v, clip_feats, label_p]
    const_args = [interp] + weights

    def per_sample(x):
        nd = x.ndim
        return pl.BlockSpec((1,) + x.shape[1:], lambda b, nd=nd: (b,) + (0,) * (nd - 1))

    def resident(x):      # constant block index -> DMA'd once, VMEM-resident across the grid
        nd = x.ndim
        return pl.BlockSpec(x.shape, lambda b, nd=nd: (0,) * nd)

    kernel = _make_clipnet_kernel(S, D, Hd, lane)

    recon_p, loss_v = pl.pallas_call(
        kernel,
        grid=(B,),
        in_specs=[per_sample(a) for a in data_args] + [resident(a) for a in const_args],
        out_specs=(pl.BlockSpec((1, 2 * S, lane), lambda b: (b, 0, 0)),
                   pl.BlockSpec((1, 1, lane), lambda b: (b, 0, 0))),
        out_shape=(jax.ShapeDtypeStruct((B, 2 * S, lane), jnp.float32),
                   jax.ShapeDtypeStruct((B, 1, lane), jnp.float32)),
        compiler_params=pltpu.CompilerParams(dimension_semantics=("parallel",)),
    )(*data_args, *const_args)

    recon = recon_p[:, :, :D].reshape(B, 2, S, D)
    recon_text, recon_image = recon[:, 0], recon[:, 1]
    losses = loss_v[:, 0, :3]
    return [recon_text, recon_image], [losses[:, 0], losses[:, 1], losses[:, 2]]


# ----------------------------------------------------------------------------
# Pure-JAX reference (same mixed-precision math, for correctness check)
# ----------------------------------------------------------------------------
def _ref_enc(p, x):
    w1, w2 = p["w1"], p["w2"]
    h = jnp.dot(x.astype(w1.dtype), w1, preferred_element_type=jnp.float32) + p["b1"]
    h = jnp.where(h > 0, h, NEG_SLOPE * h)
    return jnp.dot(h.astype(w2.dtype), w2, preferred_element_type=jnp.float32) + p["b2"]


def _ref_forward(params, hidden_states, emo2vec_feats, text_feature, image_feature, label):
    B, S, D = label.shape
    interp = make_interp_matrix(emo2vec_feats.shape[1], S)
    rt_all, ri_all, loss_all = [], [], []
    for b in range(B):
        hid, e2v, lab = hidden_states[b], emo2vec_feats[b], label[b]
        audio_cont = _ref_enc(params["audio_content_map"], hid)
        audio_feature = jnp.dot(interp, e2v, precision=lax.Precision.HIGHEST)
        intensity = _ref_enc(params["fusion_predictor"], audio_feature)
        motion_emo = _ref_enc(params["emo_encoder"], lab)

        def branch(feat, mp):
            emo = _ref_enc(mp, feat[None])                                      # (1, Hd)
            norm = jnp.sqrt(jnp.sum(emo * emo, axis=-1, keepdims=True))
            ef = _ref_enc(params["semantic_emotion_map"], emo * (intensity / (norm + EPS)))
            cat = jnp.concatenate([ef, audio_cont], axis=1)
            recon = _ref_enc(params["decoder"], cat)
            a, m = ef.reshape(-1), motion_emo.reshape(-1)
            sim = jnp.dot(a, m) / (jnp.maximum(jnp.linalg.norm(a), EPS)
                                   * jnp.maximum(jnp.linalg.norm(m), EPS))
            return recon, sim, jnp.mean((recon - lab) ** 2)

        rt, st, mt = branch(text_feature[b], params["clip_text_map"])
        ri, si, mi = branch(image_feature[b], params["clip_image_map"])
        rec = mt + mi
        emb = 2.0 - si - st
        rt_all.append(rt)
        ri_all.append(ri)
        loss_all.append(jnp.stack([rec, emb, rec + 0.1 * emb]))
    return [jnp.stack(rt_all), jnp.stack(ri_all)], jnp.stack(loss_all)


# ----------------------------------------------------------------------------
if __name__ == "__main__":
    # small synthetic sizes consistent with the module's forward
    B = 2                 # samples per pallas_call (grid over batch)
    S = 8                 # seq_len = label.shape[1]
    input_dim = 16        # rig dimension
    hidden_dim = 32
    latent_dim = 8
    wav_hidden = 64       # stands in for wav2vec2 hidden_size (=768 in the real model)
    clip_dim = 512        # CLIP text/image feature dim (hardcoded in the module)
    clip_hidden = 256
    T_frames = 12         # emotion2vec frame count before interpolation

    root = jax.random.PRNGKey(0)
    keys = jax.random.split(root, 16)

    params = {
        "emo_encoder":          make_encoder_params(keys[0], input_dim, hidden_dim, latent_dim),
        "audio_content_map":    make_encoder_params(keys[1], wav_hidden, hidden_dim, latent_dim),
        "fusion_predictor":     make_encoder_params(keys[2], wav_hidden, 256, 1),
        "clip_text_map":        make_encoder_params(keys[3], clip_dim, clip_hidden, hidden_dim),
        "clip_image_map":       make_encoder_params(keys[4], clip_dim, clip_hidden, hidden_dim),
        "semantic_emotion_map": make_encoder_params(keys[5], hidden_dim, hidden_dim, latent_dim),
        "decoder":              make_encoder_params(keys[6], 2 * latent_dim, hidden_dim, input_dim),
    }

    hidden_states = jax.random.normal(keys[7], (B, S, wav_hidden), jnp.float32)    # wav2vec2 output
    emo2vec_feats = jax.random.normal(keys[8], (B, T_frames, wav_hidden), jnp.float32)
    text_feature = jax.random.normal(keys[9], (B, clip_dim), jnp.float32)          # CLIP get_text_features
    image_feature = jax.random.normal(keys[10], (B, clip_dim), jnp.float32)        # CLIP get_image_features
    label = jax.random.normal(keys[11], (B, S, input_dim), jnp.float32)            # rig targets

    fwd = jax.jit(clipnet_forward)
    recons, losses = fwd(params, hidden_states, emo2vec_feats,
                         text_feature, image_feature, label)
    jax.block_until_ready((recons, losses))

    # correctness check against a pure-JAX reference of the same math
    ref_recons, ref_losses = _ref_forward(params, hidden_states, emo2vec_feats,
                                          text_feature, image_feature, label)
    np.testing.assert_allclose(np.asarray(recons[0]), np.asarray(ref_recons[0]), rtol=5e-3, atol=5e-3)
    np.testing.assert_allclose(np.asarray(recons[1]), np.asarray(ref_recons[1]), rtol=5e-3, atol=5e-3)
    for i, got in enumerate(losses):
        np.testing.assert_allclose(np.asarray(got), np.asarray(ref_losses[:, i]), rtol=5e-3, atol=5e-3)

    print("KERNEL_OK")
</pallas_src>

<mosaic_0001>
module attributes {stable_mosaic.version = 11 : i64} {
  func.func @kernel(%arg0: i32, %arg1: memref<1x8x64xf32, #tpu.memory_space<vmem>>, %arg2: memref<1x16x64xf32, #tpu.memory_space<vmem>>, %arg3: memref<1x2x512xf32, #tpu.memory_space<vmem>>, %arg4: memref<1x8x128xf32, #tpu.memory_space<vmem>>, %arg5: memref<8x16xf32, #tpu.memory_space<vmem>>, %arg6: memref<64x32xbf16, #tpu.memory_space<vmem>>, %arg7: memref<1x32xf32, #tpu.memory_space<vmem>>, %arg8: memref<32x8xbf16, #tpu.memory_space<vmem>>, %arg9: memref<1x8xf32, #tpu.memory_space<vmem>>, %arg10: memref<64x256xbf16, #tpu.memory_space<vmem>>, %arg11: memref<1x256xf32, #tpu.memory_space<vmem>>, %arg12: memref<256x1xbf16, #tpu.memory_space<vmem>>, %arg13: memref<1x1xf32, #tpu.memory_space<vmem>>, %arg14: memref<512x512xbf16, #tpu.memory_space<vmem>>, %arg15: memref<1x512xf32, #tpu.memory_space<vmem>>, %arg16: memref<512x64xbf16, #tpu.memory_space<vmem>>, %arg17: memref<1x64xf32, #tpu.memory_space<vmem>>, %arg18: memref<128x32xbf16, #tpu.memory_space<vmem>>, %arg19: memref<1x32xf32, #tpu.memory_space<vmem>>, %arg20: memref<32x8xbf16, #tpu.memory_space<vmem>>, %arg21: memref<1x8xf32, #tpu.memory_space<vmem>>, %arg22: memref<32x32xbf16, #tpu.memory_space<vmem>>, %arg23: memref<1x32xf32, #tpu.memory_space<vmem>>, %arg24: memref<32x8xbf16, #tpu.memory_space<vmem>>, %arg25: memref<1x8xf32, #tpu.memory_space<vmem>>, %arg26: memref<8x32xbf16, #tpu.memory_space<vmem>>, %arg27: memref<8x32xbf16, #tpu.memory_space<vmem>>, %arg28: memref<1x32xf32, #tpu.memory_space<vmem>>, %arg29: memref<32x128xbf16, #tpu.memory_space<vmem>>, %arg30: memref<1x128xf32, #tpu.memory_space<vmem>>, %arg31: memref<1x16x128xf32, #tpu.memory_space<vmem>>, %arg32: memref<1x1x128xf32, #tpu.memory_space<vmem>>) attributes {dimension_semantics = [#tpu.dimension_semantics<parallel>], iteration_bounds = array<i64: 2>, scalar_prefetch = 0 : i64, scratch_operands = 0 : i64, tpu.core_type = #tpu.core_type<tc>, window_params = [{transform_indices = @transform_0, window_bounds = array<i64: 1, 8, 64>}, {transform_indices = @transform_1, window_bounds = array<i64: 1, 16, 64>}, {transform_indices = @transform_2, window_bounds = array<i64: 1, 2, 512>}, {transform_indices = @transform_3, window_bounds = array<i64: 1, 8, 128>}, {pipeline_mode = #tpu.pipeline_mode<synchronous>, transform_indices = @transform_4, window_bounds = array<i64: 8, 16>}, {pipeline_mode = #tpu.pipeline_mode<synchronous>, transform_indices = @transform_5, window_bounds = array<i64: 64, 32>}, {pipeline_mode = #tpu.pipeline_mode<synchronous>, transform_indices = @transform_6, window_bounds = array<i64: 1, 32>}, {pipeline_mode = #tpu.pipeline_mode<synchronous>, transform_indices = @transform_7, window_bounds = array<i64: 32, 8>}, {pipeline_mode = #tpu.pipeline_mode<synchronous>, transform_indices = @transform_8, window_bounds = array<i64: 1, 8>}, {pipeline_mode = #tpu.pipeline_mode<synchronous>, transform_indices = @transform_9, window_bounds = array<i64: 64, 256>}, {pipeline_mode = #tpu.pipeline_mode<synchronous>, transform_indices = @transform_10, window_bounds = array<i64: 1, 256>}, {pipeline_mode = #tpu.pipeline_mode<synchronous>, transform_indices = @transform_11, window_bounds = array<i64: 256, 1>}, {pipeline_mode = #tpu.pipeline_mode<synchronous>, transform_indices = @transform_12, window_bounds = array<i64: 1, 1>}, {pipeline_mode = #tpu.pipeline_mode<synchronous>, transform_indices = @transform_13, window_bounds = array<i64: 512, 512>}, {pipeline_mode = #tpu.pipeline_mode<synchronous>, transform_indices = @transform_14, window_bounds = array<i64: 1, 512>}, {pipeline_mode = #tpu.pipeline_mode<synchronous>, transform_indices = @transform_15, window_bounds = array<i64: 512, 64>}, {pipeline_mode = #tpu.pipeline_mode<synchronous>, transform_indices = @transform_16, window_bounds = array<i64: 1, 64>}, {pipeline_mode = #tpu.pipeline_mode<synchronous>, transform_indices = @transform_17, window_bounds = array<i64: 128, 32>}, {pipeline_mode = #tpu.pipeline_mode<synchronous>, transform_indices = @transform_18, window_bounds = array<i64: 1, 32>}, {pipeline_mode = #tpu.pipeline_mode<synchronous>, transform_indices = @transform_19, window_bounds = array<i64: 32, 8>}, {pipeline_mode = #tpu.pipeline_mode<synchronous>, transform_indices = @transform_20, window_bounds = array<i64: 1, 8>}, {pipeline_mode = #tpu.pipeline_mode<synchronous>, transform_indices = @transform_21, window_bounds = array<i64: 32, 32>}, {pipeline_mode = #tpu.pipeline_mode<synchronous>, transform_indices = @transform_22, window_bounds = array<i64: 1, 32>}, {pipeline_mode = #tpu.pipeline_mode<synchronous>, transform_indices = @transform_23, window_bounds = array<i64: 32, 8>}, {pipeline_mode = #tpu.pipeline_mode<synchronous>, transform_indices = @transform_24, window_bounds = array<i64: 1, 8>}, {pipeline_mode = #tpu.pipeline_mode<synchronous>, transform_indices = @transform_25, window_bounds = array<i64: 8, 32>}, {pipeline_mode = #tpu.pipeline_mode<synchronous>, transform_indices = @transform_26, window_bounds = array<i64: 8, 32>}, {pipeline_mode = #tpu.pipeline_mode<synchronous>, transform_indices = @transform_27, window_bounds = array<i64: 1, 32>}, {pipeline_mode = #tpu.pipeline_mode<synchronous>, transform_indices = @transform_28, window_bounds = array<i64: 32, 128>}, {pipeline_mode = #tpu.pipeline_mode<synchronous>, transform_indices = @transform_29, window_bounds = array<i64: 1, 128>}, {transform_indices = @transform_30, window_bounds = array<i64: 1, 16, 128>}, {transform_indices = @transform_31, window_bounds = array<i64: 1, 1, 128>}]} {
    %c0 = arith.constant 0 : index
    %c0_0 = arith.constant 0 : index
    %c0_1 = arith.constant 0 : index
    %0 = vector.load %arg1[%c0, %c0_0, %c0_1] : memref<1x8x64xf32, #tpu.memory_space<vmem>>, vector<1x8x64xf32>
    %1 = vector.shape_cast %0 : vector<1x8x64xf32> to vector<8x64xf32>
    %c0_2 = arith.constant 0 : index
    %c0_3 = arith.constant 0 : index
    %c0_4 = arith.constant 0 : index
    %2 = vector.load %arg2[%c0_2, %c0_3, %c0_4] : memref<1x16x64xf32, #tpu.memory_space<vmem>>, vector<1x16x64xf32>
    %3 = vector.shape_cast %2 : vector<1x16x64xf32> to vector<16x64xf32>
    %c0_5 = arith.constant 0 : index
    %c0_6 = arith.constant 0 : index
    %c0_7 = arith.constant 0 : index
    %4 = vector.load %arg3[%c0_5, %c0_6, %c0_7] : memref<1x2x512xf32, #tpu.memory_space<vmem>>, vector<1x2x512xf32>
    %5 = vector.shape_cast %4 : vector<1x2x512xf32> to vector<2x512xf32>
    %c0_8 = arith.constant 0 : index
    %c0_9 = arith.constant 0 : index
    %c0_10 = arith.constant 0 : index
    %6 = vector.load %arg4[%c0_8, %c0_9, %c0_10] : memref<1x8x128xf32, #tpu.memory_space<vmem>>, vector<1x8x128xf32>
    %7 = vector.shape_cast %6 : vector<1x8x128xf32> to vector<8x128xf32>
    %c0_11 = arith.constant 0 : index
    %c0_12 = arith.constant 0 : index
    %8 = vector.load %arg6[%c0_11, %c0_12] : memref<64x32xbf16, #tpu.memory_space<vmem>>, vector<64x32xbf16>
    %c0_13 = arith.constant 0 : index
    %c0_14 = arith.constant 0 : index
    %9 = vector.load %arg7[%c0_13, %c0_14] : memref<1x32xf32, #tpu.memory_space<vmem>>, vector<1x32xf32>
    %c0_15 = arith.constant 0 : index
    %c0_16 = arith.constant 0 : index
    %10 = vector.load %arg8[%c0_15, %c0_16] : memref<32x8xbf16, #tpu.memory_space<vmem>>, vector<32x8xbf16>
    %c0_17 = arith.constant 0 : index
    %c0_18 = arith.constant 0 : index
    %11 = vector.load %arg9[%c0_17, %c0_18] : memref<1x8xf32, #tpu.memory_space<vmem>>, vector<1x8xf32>
    %12 = arith.truncf %1 : vector<8x64xf32> to vector<8x64xbf16>
    %cst = arith.constant dense<0.000000e+00> : vector<8x32xf32>
    %13 = tpu.matmul %12, %8, %cst {dimension_numbers = #tpu.dot_dimension_numbers<[1], [0], [0], [1], [0, 0, 1, 1], [], []>} : vector<8x64xbf16>, vector<64x32xbf16>, vector<8x32xf32> -> vector<8x32xf32>
    %14 = vector.broadcast %9 : vector<1x32xf32> to vector<8x32xf32>
    %15 = arith.addf %13, %14 : vector<8x32xf32>
    %cst_19 = arith.constant 0.000000e+00 : f32
    %16 = vector.broadcast %cst_19 : f32 to vector<8x32xf32>
    %17 = arith.cmpf ogt, %15, %16 : vector<8x32xf32>
    %cst_20 = arith.constant 2.000000e-01 : f32
    %18 = vector.broadcast %cst_20 : f32 to vector<8x32xf32>
    %19 = arith.mulf %18, %15 : vector<8x32xf32>
    %20 = arith.select %17, %15, %19 : vector<8x32xi1>, vector<8x32xf32>
    %21 = arith.truncf %20 : vector<8x32xf32> to vector<8x32xbf16>
    %cst_21 = arith.constant dense<0.000000e+00> : vector<8x8xf32>
    %22 = tpu.matmul %21, %10, %cst_21 {dimension_numbers = #tpu.dot_dimension_numbers<[1], [0], [0], [1], [0, 0, 1, 1], [], []>} : vector<8x32xbf16>, vector<32x8xbf16>, vector<8x8xf32> -> vector<8x8xf32>
    %23 = vector.broadcast %11 : vector<1x8xf32> to vector<8x8xf32>
    %24 = arith.addf %22, %23 : vector<8x8xf32>
    %c0_22 = arith.constant 0 : index
    %c0_23 = arith.constant 0 : index
    %25 = vector.load %arg5[%c0_22, %c0_23] : memref<8x16xf32, #tpu.memory_space<vmem>>, vector<8x16xf32>
    %cst_24 = arith.constant dense<0.000000e+00> : vector<8x64xf32>
    %26 = tpu.matmul %25, %3, %cst_24 {dimension_numbers = #tpu.dot_dimension_numbers<[1], [0], [0], [1], [0, 0, 1, 1], [], []>, precision = #tpu.contract_precision<fp32>} : vector<8x16xf32>, vector<16x64xf32>, vector<8x64xf32> -> vector<8x64xf32>
    %c0_25 = arith.constant 0 : index
    %c0_26 = arith.constant 0 : index
    %27 = vector.load %arg10[%c0_25, %c0_26] : memref<64x256xbf16, #tpu.memory_space<vmem>>, vector<64x256xbf16>
    %c0_27 = arith.constant 0 : index
    %c0_28 = arith.constant 0 : index
    %28 = vector.load %arg11[%c0_27, %c0_28] : memref<1x256xf32, #tpu.memory_space<vmem>>, vector<1x256xf32>
    %c0_29 = arith.constant 0 : index
    %c0_30 = arith.constant 0 : index
    %29 = vector.load %arg12[%c0_29, %c0_30] : memref<256x1xbf16, #tpu.memory_space<vmem>>, vector<256x1xbf16>
    %c0_31 = arith.constant 0 : index
    %c0_32 = arith.constant 0 : index
    %30 = vector.load %arg13[%c0_31, %c0_32] : memref<1x1xf32, #tpu.memory_space<vmem>>, vector<1x1xf32>
    %31 = arith.truncf %26 : vector<8x64xf32> to vector<8x64xbf16>
    %cst_33 = arith.constant dense<0.000000e+00> : vector<8x256xf32>
    %32 = tpu.matmul %31, %27, %cst_33 {dimension_numbers = #tpu.dot_dimension_numbers<[1], [0], [0], [1], [0, 0, 1, 1], [], []>} : vector<8x64xbf16>, vector<64x256xbf16>, vector<8x256xf32> -> vector<8x256xf32>
    %33 = vector.broadcast %28 : vector<1x256xf32> to vector<8x256xf32>
    %34 = arith.addf %32, %33 : vector<8x256xf32>
    %cst_34 = arith.constant 0.000000e+00 : f32
    %35 = vector.broadcast %cst_34 : f32 to vector<8x256xf32>
    %36 = arith.cmpf ogt, %34, %35 : vector<8x256xf32>
    %cst_35 = arith.constant 2.000000e-01 : f32
    %37 = vector.broadcast %cst_35 : f32 to vector<8x256xf32>
    %38 = arith.mulf %37, %34 : vector<8x256xf32>
    %39 = arith.select %36, %34, %38 : vector<8x256xi1>, vector<8x256xf32>
    %40 = arith.truncf %39 : vector<8x256xf32> to vector<8x256xbf16>
    %cst_36 = arith.constant dense<0.000000e+00> : vector<8x1xf32>
    %41 = tpu.matmul %40, %29, %cst_36 {dimension_numbers = #tpu.dot_dimension_numbers<[1], [0], [0], [1], [0, 0, 1, 1], [], []>} : vector<8x256xbf16>, vector<256x1xbf16>, vector<8x1xf32> -> vector<8x1xf32>
    %42 = vector.broadcast %30 : vector<1x1xf32> to vector<8x1xf32>
    %43 = arith.addf %41, %42 : vector<8x1xf32>
    %c0_37 = arith.constant 0 : index
    %c0_38 = arith.constant 0 : index
    %44 = vector.load %arg14[%c0_37, %c0_38] : memref<512x512xbf16, #tpu.memory_space<vmem>>, vector<512x512xbf16>
    %c0_39 = arith.constant 0 : index
    %c0_40 = arith.constant 0 : index
    %45 = vector.load %arg16[%c0_39, %c0_40] : memref<512x64xbf16, #tpu.memory_space<vmem>>, vector<512x64xbf16>
    %46 = arith.truncf %5 : vector<2x512xf32> to vector<2x512xbf16>
    %cst_41 = arith.constant dense<0.000000e+00> : vector<2x512xf32>
    %47 = tpu.matmul %46, %44, %cst_41 {dimension_numbers = #tpu.dot_dimension_numbers<[1], [0], [0], [1], [0, 0, 1, 1], [], []>} : vector<2x512xbf16>, vector<512x512xbf16>, vector<2x512xf32> -> vector<2x512xf32>
    %c0_42 = arith.constant 0 : index
    %c0_43 = arith.constant 0 : index
    %48 = vector.load %arg15[%c0_42, %c0_43] : memref<1x512xf32, #tpu.memory_space<vmem>>, vector<1x512xf32>
    %49 = vector.broadcast %48 : vector<1x512xf32> to vector<2x512xf32>
    %50 = arith.addf %47, %49 : vector<2x512xf32>
    %cst_44 = arith.constant 0.000000e+00 : f32
    %51 = vector.broadcast %cst_44 : f32 to vector<2x512xf32>
    %52 = arith.cmpf ogt, %50, %51 : vector<2x512xf32>
    %cst_45 = arith.constant 2.000000e-01 : f32
    %53 = vector.broadcast %cst_45 : f32 to vector<2x512xf32>
    %54 = arith.mulf %53, %50 : vector<2x512xf32>
    %55 = arith.select %52, %50, %54 : vector<2x512xi1>, vector<2x512xf32>
    %56 = arith.truncf %55 : vector<2x512xf32> to vector<2x512xbf16>
    %cst_46 = arith.constant dense<0.000000e+00> : vector<2x64xf32>
    %57 = tpu.matmul %56, %45, %cst_46 {dimension_numbers = #tpu.dot_dimension_numbers<[1], [0], [0], [1], [0, 0, 1, 1], [], []>} : vector<2x512xbf16>, vector<512x64xbf16>, vector<2x64xf32> -> vector<2x64xf32>
    %c0_47 = arith.constant 0 : index
    %c0_48 = arith.constant 0 : index
    %58 = vector.load %arg17[%c0_47, %c0_48] : memref<1x64xf32, #tpu.memory_space<vmem>>, vector<1x64xf32>
    %59 = vector.broadcast %58 : vector<1x64xf32> to vector<2x64xf32>
    %60 = arith.addf %57, %59 : vector<2x64xf32>
    %61 = vector.extract_strided_slice %60 {offsets = [0, 0], sizes = [1, 32], strides = [1, 1]} : vector<2x64xf32> to vector<1x32xf32>
    %62 = vector.extract_strided_slice %60 {offsets = [1, 32], sizes = [1, 32], strides = [1, 1]} : vector<2x64xf32> to vector<1x32xf32>
    %c0_49 = arith.constant 0 : index
    %c0_50 = arith.constant 0 : index
    %63 = vector.load %arg18[%c0_49, %c0_50] : memref<128x32xbf16, #tpu.memory_space<vmem>>, vector<128x32xbf16>
    %c0_51 = arith.constant 0 : index
    %c0_52 = arith.constant 0 : index
    %64 = vector.load %arg19[%c0_51, %c0_52] : memref<1x32xf32, #tpu.memory_space<vmem>>, vector<1x32xf32>
    %c0_53 = arith.constant 0 : index
    %c0_54 = arith.constant 0 : index
    %65 = vector.load %arg20[%c0_53, %c0_54] : memref<32x8xbf16, #tpu.memory_space<vmem>>, vector<32x8xbf16>
    %c0_55 = arith.constant 0 : index
    %c0_56 = arith.constant 0 : index
    %66 = vector.load %arg21[%c0_55, %c0_56] : memref<1x8xf32, #tpu.memory_space<vmem>>, vector<1x8xf32>
    %67 = arith.truncf %7 : vector<8x128xf32> to vector<8x128xbf16>
    %cst_57 = arith.constant dense<0.000000e+00> : vector<8x32xf32>
    %68 = tpu.matmul %67, %63, %cst_57 {dimension_numbers = #tpu.dot_dimension_numbers<[1], [0], [0], [1], [0, 0, 1, 1], [], []>} : vector<8x128xbf16>, vector<128x32xbf16>, vector<8x32xf32> -> vector<8x32xf32>
    %69 = vector.broadcast %64 : vector<1x32xf32> to vector<8x32xf32>
    %70 = arith.addf %68, %69 : vector<8x32xf32>
    %cst_58 = arith.constant 0.000000e+00 : f32
    %71 = vector.broadcast %cst_58 : f32 to vector<8x32xf32>
    %72 = arith.cmpf ogt, %70, %71 : vector<8x32xf32>
    %cst_59 = arith.constant 2.000000e-01 : f32
    %73 = vector.broadcast %cst_59 : f32 to vector<8x32xf32>
    %74 = arith.mulf %73, %70 : vector<8x32xf32>
    %75 = arith.select %72, %70, %74 : vector<8x32xi1>, vector<8x32xf32>
    %76 = arith.truncf %75 : vector<8x32xf32> to vector<8x32xbf16>
    %cst_60 = arith.constant dense<0.000000e+00> : vector<8x8xf32>
    %77 = tpu.matmul %76, %65, %cst_60 {dimension_numbers = #tpu.dot_dimension_numbers<[1], [0], [0], [1], [0, 0, 1, 1], [], []>} : vector<8x32xbf16>, vector<32x8xbf16>, vector<8x8xf32> -> vector<8x8xf32>
    %78 = vector.broadcast %66 : vector<1x8xf32> to vector<8x8xf32>
    %79 = arith.addf %77, %78 : vector<8x8xf32>
    %80 = arith.mulf %79, %79 : vector<8x8xf32>
    %81 = vector.shape_cast %80 : vector<8x8xf32> to vector<1x8x8xf32>
    %cst_61 = arith.constant dense<0.000000e+00> : vector<1xf32>
    %82 = vector.multi_reduction <add>, %81, %cst_61 [1, 2] : vector<1x8x8xf32> to vector<1xf32>
    %83 = vector.shape_cast %82 : vector<1xf32> to vector<1x1x1xf32>
    %84 = vector.extract %83[0, 0, 0] : f32 from vector<1x1x1xf32>
    %85 = math.sqrt %84 : f32
    %86 = arith.mulf %61, %61 : vector<1x32xf32>
    %87 = vector.shape_cast %86 : vector<1x32xf32> to vector<1x1x32xf32>
    %cst_62 = arith.constant dense<0.000000e+00> : vector<1xf32>
    %88 = vector.multi_reduction <add>, %87, %cst_62 [1, 2] : vector<1x1x32xf32> to vector<1xf32>
    %89 = vector.shape_cast %88 : vector<1xf32> to vector<1x1x1xf32>
    %90 = vector.extract %89[0, 0, 0] : f32 from vector<1x1x1xf32>
    %91 = math.sqrt %90 : f32
    %92 = arith.mulf %62, %62 : vector<1x32xf32>
    %93 = vector.shape_cast %92 : vector<1x32xf32> to vector<1x1x32xf32>
    %cst_63 = arith.constant dense<0.000000e+00> : vector<1xf32>
    %94 = vector.multi_reduction <add>, %93, %cst_63 [1, 2] : vector<1x1x32xf32> to vector<1xf32>
    %95 = vector.shape_cast %94 : vector<1xf32> to vector<1x1x1xf32>
    %96 = vector.extract %95[0, 0, 0] : f32 from vector<1x1x1xf32>
    %97 = math.sqrt %96 : f32
    %cst_64 = arith.constant 9.99999993E-9 : f32
    %98 = arith.addf %91, %cst_64 : f32
    %99 = vector.broadcast %98 : f32 to vector<8x1xf32>
    %100 = arith.divf %43, %99 : vector<8x1xf32>
    %101 = vector.broadcast %61 : vector<1x32xf32> to vector<8x32xf32>
    %102 = vector.broadcast %100 : vector<8x1xf32> to vector<8x32xf32>
    %103 = arith.mulf %101, %102 : vector<8x32xf32>
    %cst_65 = arith.constant 9.99999993E-9 : f32
    %104 = arith.addf %97, %cst_65 : f32
    %105 = vector.broadcast %104 : f32 to vector<8x1xf32>
    %106 = arith.divf %43, %105 : vector<8x1xf32>
    %107 = vector.broadcast %62 : vector<1x32xf32> to vector<8x32xf32>
    %108 = vector.broadcast %106 : vector<8x1xf32> to vector<8x32xf32>
    %109 = arith.mulf %107, %108 : vector<8x32xf32>
    %110 = tpu.concatenate %103, %109 in 0 : vector<8x32xf32>, vector<8x32xf32> -> vector<16x32xf32>
    %c0_66 = arith.constant 0 : index
    %c0_67 = arith.constant 0 : index
    %111 = vector.load %arg22[%c0_66, %c0_67] : memref<32x32xbf16, #tpu.memory_space<vmem>>, vector<32x32xbf16>
    %c0_68 = arith.constant 0 : index
    %c0_69 = arith.constant 0 : index
    %112 = vector.load %arg23[%c0_68, %c0_69] : memref<1x32xf32, #tpu.memory_space<vmem>>, vector<1x32xf32>
    %c0_70 = arith.constant 0 : index
    %c0_71 = arith.constant 0 : index
    %113 = vector.load %arg24[%c0_70, %c0_71] : memref<32x8xbf16, #tpu.memory_space<vmem>>, vector<32x8xbf16>
    %c0_72 = arith.constant 0 : index
    %c0_73 = arith.constant 0 : index
    %114 = vector.load %arg25[%c0_72, %c0_73] : memref<1x8xf32, #tpu.memory_space<vmem>>, vector<1x8xf32>
    %115 = arith.truncf %110 : vector<16x32xf32> to vector<16x32xbf16>
    %cst_74 = arith.constant dense<0.000000e+00> : vector<16x32xf32>
    %116 = tpu.matmul %115, %111, %cst_74 {dimension_numbers = #tpu.dot_dimension_numbers<[1], [0], [0], [1], [0, 0, 1, 1], [], []>} : vector<16x32xbf16>, vector<32x32xbf16>, vector<16x32xf32> -> vector<16x32xf32>
    %117 = vector.broadcast %112 : vector<1x32xf32> to vector<16x32xf32>
    %118 = arith.addf %116, %117 : vector<16x32xf32>
    %cst_75 = arith.constant 0.000000e+00 : f32
    %119 = vector.broadcast %cst_75 : f32 to vector<16x32xf32>
    %120 = arith.cmpf ogt, %118, %119 : vector<16x32xf32>
    %cst_76 = arith.constant 2.000000e-01 : f32
    %121 = vector.broadcast %cst_76 : f32 to vector<16x32xf32>
    %122 = arith.mulf %121, %118 : vector<16x32xf32>
    %123 = arith.select %120, %118, %122 : vector<16x32xi1>, vector<16x32xf32>
    %124 = arith.truncf %123 : vector<16x32xf32> to vector<16x32xbf16>
    %cst_77 = arith.constant dense<0.000000e+00> : vector<16x8xf32>
    %125 = tpu.matmul %124, %113, %cst_77 {dimension_numbers = #tpu.dot_dimension_numbers<[1], [0], [0], [1], [0, 0, 1, 1], [], []>} : vector<16x32xbf16>, vector<32x8xbf16>, vector<16x8xf32> -> vector<16x8xf32>
    %126 = vector.broadcast %114 : vector<1x8xf32> to vector<16x8xf32>
    %127 = arith.addf %125, %126 : vector<16x8xf32>
    %c0_78 = arith.constant 0 : index
    %c0_79 = arith.constant 0 : index
    %128 = vector.load %arg26[%c0_78, %c0_79] : memref<8x32xbf16, #tpu.memory_space<vmem>>, vector<8x32xbf16>
    %c0_80 = arith.constant 0 : index
    %c0_81 = arith.constant 0 : index
    %129 = vector.load %arg27[%c0_80, %c0_81] : memref<8x32xbf16, #tpu.memory_space<vmem>>, vector<8x32xbf16>
    %c0_82 = arith.constant 0 : index
    %c0_83 = arith.constant 0 : index
    %130 = vector.load %arg29[%c0_82, %c0_83] : memref<32x128xbf16, #tpu.memory_space<vmem>>, vector<32x128xbf16>
    %131 = arith.truncf %24 : vector<8x8xf32> to vector<8x8xbf16>
    %cst_84 = arith.constant dense<0.000000e+00> : vector<8x32xf32>
    %132 = tpu.matmul %131, %129, %cst_84 {dimension_numbers = #tpu.dot_dimension_numbers<[1], [0], [0], [1], [0, 0, 1, 1], [], []>} : vector<8x8xbf16>, vector<8x32xbf16>, vector<8x32xf32> -> vector<8x32xf32>
    %133 = arith.truncf %127 : vector<16x8xf32> to vector<16x8xbf16>
    %cst_85 = arith.constant dense<0.000000e+00> : vector<16x32xf32>
    %134 = tpu.matmul %133, %128, %cst_85 {dimension_numbers = #tpu.dot_dimension_numbers<[1], [0], [0], [1], [0, 0, 1, 1], [], []>} : vector<16x8xbf16>, vector<8x32xbf16>, vector<16x32xf32> -> vector<16x32xf32>
    %135 = tpu.concatenate %132, %132 in 0 : vector<8x32xf32>, vector<8x32xf32> -> vector<16x32xf32>
    %136 = arith.addf %134, %135 : vector<16x32xf32>
    %c0_86 = arith.constant 0 : index
    %c0_87 = arith.constant 0 : index
    %137 = vector.load %arg28[%c0_86, %c0_87] : memref<1x32xf32, #tpu.memory_space<vmem>>, vector<1x32xf32>
    %138 = vector.broadcast %137 : vector<1x32xf32> to vector<16x32xf32>
    %139 = arith.addf %136, %138 : vector<16x32xf32>
    %cst_88 = arith.constant 0.000000e+00 : f32
    %140 = vector.broadcast %cst_88 : f32 to vector<16x32xf32>
    %141 = arith.cmpf ogt, %139, %140 : vector<16x32xf32>
    %cst_89 = arith.constant 2.000000e-01 : f32
    %142 = vector.broadcast %cst_89 : f32 to vector<16x32xf32>
    %143 = arith.mulf %142, %139 : vector<16x32xf32>
    %144 = arith.select %141, %139, %143 : vector<16x32xi1>, vector<16x32xf32>
    %145 = arith.truncf %144 : vector<16x32xf32> to vector<16x32xbf16>
    %cst_90 = arith.constant dense<0.000000e+00> : vector<16x128xf32>
    %146 = tpu.matmul %145, %130, %cst_90 {dimension_numbers = #tpu.dot_dimension_numbers<[1], [0], [0], [1], [0, 0, 1, 1], [], []>} : vector<16x32xbf16>, vector<32x128xbf16>, vector<16x128xf32> -> vector<16x128xf32>
    %c0_91 = arith.constant 0 : index
    %c0_92 = arith.constant 0 : index
    %147 = vector.load %arg30[%c0_91, %c0_92] : memref<1x128xf32, #tpu.memory_space<vmem>>, vector<1x128xf32>
    %148 = vector.broadcast %147 : vector<1x128xf32> to vector<16x128xf32>
    %149 = arith.addf %146, %148 : vector<16x128xf32>
    %c0_93 = arith.constant 0 : index
    %c0_94 = arith.constant 0 : index
    %c0_95 = arith.constant 0 : index
    %150 = vector.load %arg31[%c0_93, %c0_94, %c0_95] : memref<1x16x128xf32, #tpu.memory_space<vmem>>, vector<1x16x128xf32>
    %151 = vector.shape_cast %150 : vector<1x16x128xf32> to vector<16x128xf32>
    %152 = vector.shape_cast %149 : vector<16x128xf32> to vector<1x16x128xf32>
    tpu.vector_store %arg31[%c0_93, %c0_94, %c0_95], %152 {strides = array<i32>} : memref<1x16x128xf32, #tpu.memory_space<vmem>>, vector<1x16x128xf32>,
    %153 = tpu.concatenate %7, %7 in 0 : vector<8x128xf32>, vector<8x128xf32> -> vector<16x128xf32>
    %154 = arith.subf %149, %153 : vector<16x128xf32>
    %155 = arith.mulf %154, %154 : vector<16x128xf32>
    %156 = vector.shape_cast %155 : vector<16x128xf32> to vector<1x16x128xf32>
    %cst_96 = arith.constant dense<0.000000e+00> : vector<1xf32>
    %157 = vector.multi_reduction <add>, %156, %cst_96 [1, 2] : vector<1x16x128xf32> to vector<1xf32>
    %158 = vector.shape_cast %157 : vector<1xf32> to vector<1x1x1xf32>
    %159 = vector.extract %158[0, 0, 0] : f32 from vector<1x1x1xf32>
    %cst_97 = arith.constant 7.812500e-03 : f32
    %160 = arith.mulf %159, %cst_97 : f32
    %161 = vector.extract_strided_slice %127 {offsets = [0, 0], sizes = [8, 8], strides = [1, 1]} : vector<16x8xf32> to vector<8x8xf32>
    %162 = vector.extract_strided_slice %127 {offsets = [8, 0], sizes = [8, 8], strides = [1, 1]} : vector<16x8xf32> to vector<8x8xf32>
    %163 = arith.mulf %161, %161 : vector<8x8xf32>
    %164 = vector.shape_cast %163 : vector<8x8xf32> to vector<1x8x8xf32>
    %cst_98 = arith.constant dense<0.000000e+00> : vector<1xf32>
    %165 = vector.multi_reduction <add>, %164, %cst_98 [1, 2] : vector<1x8x8xf32> to vector<1xf32>
    %166 = vector.shape_cast %165 : vector<1xf32> to vector<1x1x1xf32>
    %167 = vector.extract %166[0, 0, 0] : f32 from vector<1x1x1xf32>
    %168 = math.sqrt %167 : f32
    %169 = arith.mulf %162, %162 : vector<8x8xf32>
    %170 = vector.shape_cast %169 : vector<8x8xf32> to vector<1x8x8xf32>
    %cst_99 = arith.constant dense<0.000000e+00> : vector<1xf32>
    %171 = vector.multi_reduction <add>, %170, %cst_99 [1, 2] : vector<1x8x8xf32> to vector<1xf32>
    %172 = vector.shape_cast %171 : vector<1xf32> to vector<1x1x1xf32>
    %173 = vector.extract %172[0, 0, 0] : f32 from vector<1x1x1xf32>
    %174 = math.sqrt %173 : f32
    %175 = arith.mulf %161, %79 : vector<8x8xf32>
    %176 = vector.shape_cast %175 : vector<8x8xf32> to vector<1x8x8xf32>
    %cst_100 = arith.constant dense<0.000000e+00> : vector<1xf32>
    %177 = vector.multi_reduction <add>, %176, %cst_100 [1, 2] : vector<1x8x8xf32> to vector<1xf32>
    %178 = vector.shape_cast %177 : vector<1xf32> to vector<1x1x1xf32>
    %179 = vector.extract %178[0, 0, 0] : f32 from vector<1x1x1xf32>
    %cst_101 = arith.constant 9.99999993E-9 : f32
    %180 = arith.maximumf %168, %cst_101 : f32
    %cst_102 = arith.constant 9.99999993E-9 : f32
    %181 = arith.maximumf %85, %cst_102 : f32
    %182 = arith.mulf %180, %181 : f32
    %183 = arith.divf %179, %182 : f32
    %184 = arith.mulf %162, %79 : vector<8x8xf32>
    %185 = vector.shape_cast %184 : vector<8x8xf32> to vector<1x8x8xf32>
    %cst_103 = arith.constant dense<0.000000e+00> : vector<1xf32>
    %186 = vector.multi_reduction <add>, %185, %cst_103 [1, 2] : vector<1x8x8xf32> to vector<1xf32>
    %187 = vector.shape_cast %186 : vector<1xf32> to vector<1x1x1xf32>
    %188 = vector.extract %187[0, 0, 0] : f32 from vector<1x1x1xf32>
    %cst_104 = arith.constant 9.99999993E-9 : f32
    %189 = arith.maximumf %174, %cst_104 : f32
    %cst_105 = arith.constant 9.99999993E-9 : f32
    %190 = arith.maximumf %85, %cst_105 : f32
    %191 = arith.mulf %189, %190 : f32
    %192 = arith.divf %188, %191 : f32
    %cst_106 = arith.constant 2.000000e+00 : f32
    %193 = arith.subf %cst_106, %192 : f32
    %194 = arith.subf %193, %183 : f32
    %cst_107 = arith.constant 1.000000e-01 : f32
    %195 = arith.mulf %cst_107, %194 : f32
    %196 = arith.addf %160, %195 : f32
    %197 = tpu.iota {dimensions = array<i32: 1>} : vector<1x128xi32>
    %c0_i32 = arith.constant 0 : i32
    %198 = vector.broadcast %c0_i32 : i32 to vector<1x128xi32>
    %199 = arith.cmpi eq, %197, %198 : vector<1x128xi32>
    %cst_108 = arith.constant 0.000000e+00 : f32
    %200 = vector.broadcast %160 : f32 to vector<1x128xf32>
    %201 = vector.broadcast %cst_108 : f32 to vector<1x128xf32>
    %202 = arith.select %199, %200, %201 : vector<1x128xi1>, vector<1x128xf32>
    %c1_i32 = arith.constant 1 : i32
    %203 = vector.broadcast %c1_i32 : i32 to vector<1x128xi32>
    %204 = arith.cmpi eq, %197, %203 : vector<1x128xi32>
    %205 = vector.broadcast %194 : f32 to vector<1x128xf32>
    %206 = arith.select %204, %205, %202 : vector<1x128xi1>, vector<1x128xf32>
    %c2_i32 = arith.constant 2 : i32
    %207 = vector.broadcast %c2_i32 : i32 to vector<1x128xi32>
    %208 = arith.cmpi eq, %197, %207 : vector<1x128xi32>
    %209 = vector.broadcast %196 : f32 to vector<1x128xf32>
    %210 = arith.select %208, %209, %206 : vector<1x128xi1>, vector<1x128xf32>
    %c0_109 = arith.constant 0 : index
    %c0_110 = arith.constant 0 : index
    %c0_111 = arith.constant 0 : index
    %211 = vector.load %arg32[%c0_109, %c0_110, %c0_111] : memref<1x1x128xf32, #tpu.memory_space<vmem>>, vector<1x1x128xf32>
    %212 = vector.shape_cast %211 : vector<1x1x128xf32> to vector<1x128xf32>
    %213 = vector.shape_cast %210 : vector<1x128xf32> to vector<1x1x128xf32>
    tpu.vector_store %arg32[%c0_109, %c0_110, %c0_111], %213 {strides = array<i32>} : memref<1x1x128xf32, #tpu.memory_space<vmem>>, vector<1x1x128xf32>,
    return
  }
  func.func @transform_0(%arg0: i32) -> (i32, i32, i32) {
    %c0_i32 = arith.constant 0 : i32
    %c0_i32_0 = arith.constant 0 : i32
    %c0_i32_1 = arith.constant 0 : i32
    return %arg0, %c0_i32, %c0_i32_0 : i32, i32, i32
  }
  func.func @transform_1(%arg0: i32) -> (i32, i32, i32) {
    %c0_i32 = arith.constant 0 : i32
    %c0_i32_0 = arith.constant 0 : i32
    %c0_i32_1 = arith.constant 0 : i32
    return %arg0, %c0_i32, %c0_i32_0 : i32, i32, i32
  }
  func.func @transform_2(%arg0: i32) -> (i32, i32, i32) {
    %c0_i32 = arith.constant 0 : i32
    %c0_i32_0 = arith.constant 0 : i32
    %c0_i32_1 = arith.constant 0 : i32
    return %arg0, %c0_i32, %c0_i32_0 : i32, i32, i32
  }
  func.func @transform_3(%arg0: i32) -> (i32, i32, i32) {
    %c0_i32 = arith.constant 0 : i32
    %c0_i32_0 = arith.constant 0 : i32
    %c0_i32_1 = arith.constant 0 : i32
    return %arg0, %c0_i32, %c0_i32_0 : i32, i32, i32
  }
  func.func @transform_4(%arg0: i32) -> (i32, i32) {
    %c0_i32 = arith.constant 0 : i32
    %c0_i32_0 = arith.constant 0 : i32
    %c0_i32_1 = arith.constant 0 : i32
    return %c0_i32, %c0_i32_0 : i32, i32
  }
  func.func @transform_5(%arg0: i32) -> (i32, i32) {
    %c0_i32 = arith.constant 0 : i32
    %c0_i32_0 = arith.constant 0 : i32
    %c0_i32_1 = arith.constant 0 : i32
    return %c0_i32, %c0_i32_0 : i32, i32
  }
  func.func @transform_6(%arg0: i32) -> (i32, i32) {
    %c0_i32 = arith.constant 0 : i32
    %c0_i32_0 = arith.constant 0 : i32
    %c0_i32_1 = arith.constant 0 : i32
    return %c0_i32, %c0_i32_0 : i32, i32
  }
  func.func @transform_7(%arg0: i32) -> (i32, i32) {
    %c0_i32 = arith.constant 0 : i32
    %c0_i32_0 = arith.constant 0 : i32
    %c0_i32_1 = arith.constant 0 : i32
    return %c0_i32, %c0_i32_0 : i32, i32
  }
  func.func @transform_8(%arg0: i32) -> (i32, i32) {
    %c0_i32 = arith.constant 0 : i32
    %c0_i32_0 = arith.constant 0 : i32
    %c0_i32_1 = arith.constant 0 : i32
    return %c0_i32, %c0_i32_0 : i32, i32
  }
  func.func @transform_9(%arg0: i32) -> (i32, i32) {
    %c0_i32 = arith.constant 0 : i32
    %c0_i32_0 = arith.constant 0 : i32
    %c0_i32_1 = arith.constant 0 : i32
    return %c0_i32, %c0_i32_0 : i32, i32
  }
  func.func @transform_10(%arg0: i32) -> (i32, i32) {
    %c0_i32 = arith.constant 0 : i32
    %c0_i32_0 = arith.constant 0 : i32
    %c0_i32_1 = arith.constant 0 : i32
    return %c0_i32, %c0_i32_0 : i32, i32
  }
  func.func @transform_11(%arg0: i32) -> (i32, i32) {
    %c0_i32 = arith.constant 0 : i32
    %c0_i32_0 = arith.constant 0 : i32
    %c0_i32_1 = arith.constant 0 : i32
    return %c0_i32, %c0_i32_0 : i32, i32
  }
  func.func @transform_12(%arg0: i32) -> (i32, i32) {
    %c0_i32 = arith.constant 0 : i32
    %c0_i32_0 = arith.constant 0 : i32
    %c0_i32_1 = arith.constant 0 : i32
    return %c0_i32, %c0_i32_0 : i32, i32
  }
  func.func @transform_13(%arg0: i32) -> (i32, i32) {
    %c0_i32 = arith.constant 0 : i32
    %c0_i32_0 = arith.constant 0 : i32
    %c0_i32_1 = arith.constant 0 : i32
    return %c0_i32, %c0_i32_0 : i32, i32
  }
  func.func @transform_14(%arg0: i32) -> (i32, i32) {
    %c0_i32 = arith.constant 0 : i32
    %c0_i32_0 = arith.constant 0 : i32
    %c0_i32_1 = arith.constant 0 : i32
    return %c0_i32, %c0_i32_0 : i32, i32
  }
  func.func @transform_15(%arg0: i32) -> (i32, i32) {
    %c0_i32 = arith.constant 0 : i32
    %c0_i32_0 = arith.constant 0 : i32
    %c0_i32_1 = arith.constant 0 : i32
    return %c0_i32, %c0_i32_0 : i32, i32
  }
  func.func @transform_16(%arg0: i32) -> (i32, i32) {
    %c0_i32 = arith.constant 0 : i32
    %c0_i32_0 = arith.constant 0 : i32
    %c0_i32_1 = arith.constant 0 : i32
    return %c0_i32, %c0_i32_0 : i32, i32
  }
  func.func @transform_17(%arg0: i32) -> (i32, i32) {
    %c0_i32 = arith.constant 0 : i32
    %c0_i32_0 = arith.constant 0 : i32
    %c0_i32_1 = arith.constant 0 : i32
    return %c0_i32, %c0_i32_0 : i32, i32
  }
  func.func @transform_18(%arg0: i32) -> (i32, i32) {
    %c0_i32 = arith.constant 0 : i32
    %c0_i32_0 = arith.constant 0 : i32
    %c0_i32_1 = arith.constant 0 : i32
    return %c0_i32, %c0_i32_0 : i32, i32
  }
  func.func @transform_19(%arg0: i32) -> (i32, i32) {
    %c0_i32 = arith.constant 0 : i32
    %c0_i32_0 = arith.constant 0 : i32
    %c0_i32_1 = arith.constant 0 : i32
    return %c0_i32, %c0_i32_0 : i32, i32
  }
  func.func @transform_20(%arg0: i32) -> (i32, i32) {
    %c0_i32 = arith.constant 0 : i32
    %c0_i32_0 = arith.constant 0 : i32
    %c0_i32_1 = arith.constant 0 : i32
    return %c0_i32, %c0_i32_0 : i32, i32
  }
  func.func @transform_21(%arg0: i32) -> (i32, i32) {
    %c0_i32 = arith.constant 0 : i32
    %c0_i32_0 = arith.constant 0 : i32
    %c0_i32_1 = arith.constant 0 : i32
    return %c0_i32, %c0_i32_0 : i32, i32
  }
  func.func @transform_22(%arg0: i32) -> (i32, i32) {
    %c0_i32 = arith.constant 0 : i32
    %c0_i32_0 = arith.constant 0 : i32
    %c0_i32_1 = arith.constant 0 : i32
    return %c0_i32, %c0_i32_0 : i32, i32
  }
  func.func @transform_23(%arg0: i32) -> (i32, i32) {
    %c0_i32 = arith.constant 0 : i32
    %c0_i32_0 = arith.constant 0 : i32
    %c0_i32_1 = arith.constant 0 : i32
    return %c0_i32, %c0_i32_0 : i32, i32
  }
  func.func @transform_24(%arg0: i32) -> (i32, i32) {
    %c0_i32 = arith.constant 0 : i32
    %c0_i32_0 = arith.constant 0 : i32
    %c0_i32_1 = arith.constant 0 : i32
    return %c0_i32, %c0_i32_0 : i32, i32
  }
  func.func @transform_25(%arg0: i32) -> (i32, i32) {
    %c0_i32 = arith.constant 0 : i32
    %c0_i32_0 = arith.constant 0 : i32
    %c0_i32_1 = arith.constant 0 : i32
    return %c0_i32, %c0_i32_0 : i32, i32
  }
  func.func @transform_26(%arg0: i32) -> (i32, i32) {
    %c0_i32 = arith.constant 0 : i32
    %c0_i32_0 = arith.constant 0 : i32
    %c0_i32_1 = arith.constant 0 : i32
    return %c0_i32, %c0_i32_0 : i32, i32
  }
  func.func @transform_27(%arg0: i32) -> (i32, i32) {
    %c0_i32 = arith.constant 0 : i32
    %c0_i32_0 = arith.constant 0 : i32
    %c0_i32_1 = arith.constant 0 : i32
    return %c0_i32, %c0_i32_0 : i32, i32
  }
  func.func @transform_28(%arg0: i32) -> (i32, i32) {
    %c0_i32 = arith.constant 0 : i32
    %c0_i32_0 = arith.constant 0 : i32
    %c0_i32_1 = arith.constant 0 : i32
    return %c0_i32, %c0_i32_0 : i32, i32
  }
  func.func @transform_29(%arg0: i32) -> (i32, i32) {
    %c0_i32 = arith.constant 0 : i32
    %c0_i32_0 = arith.constant 0 : i32
    %c0_i32_1 = arith.constant 0 : i32
    return %c0_i32, %c0_i32_0 : i32, i32
  }
  func.func @transform_30(%arg0: i32) -> (i32, i32, i32) {
    %c0_i32 = arith.constant 0 : i32
    %c0_i32_0 = arith.constant 0 : i32
    %c0_i32_1 = arith.constant 0 : i32
    return %arg0, %c0_i32, %c0_i32_0 : i32, i32, i32
  }
  func.func @transform_31(%arg0: i32) -> (i32, i32, i32) {
    %c0_i32 = arith.constant 0 : i32
    %c0_i32_0 = arith.constant 0 : i32
    %c0_i32_1 = arith.constant 0 : i32
    return %arg0, %c0_i32, %c0_i32_0 : i32, i32, i32
  }
}

</mosaic_0001>

<llo_original>
// kernel: clipnet_forward.1
$region0: #{clipnet_forward.1}
  #allocation0 [shape = 'u32[]', space=smem, size = 0x4, offset = 0x4, fixed_abs, tag = 'smem constant byte address 0x4 - core index']
  #allocation1 [shape = 'u32[144,128]{1,0:T(1,128)}', space=vmem, size = 0x12000, scoped, tag = 'internal scratch']
  #allocation2 [shape = 'f32[1,1]{1,0:T(1,128)S(1)}', space=vmem, size = 0x200, scoped, tag = 'scoped memory for clipnet_forward.1']
  %s0 = inlined_call_operand.smem [shape: u32[32], index: -1, kind: input, shape index: {}]
  %s1 = sld [smem:[%s0]]
  %s2 = scalar_lea.smem %s0, 1
  %s3 = sld [smem:[%s2]]
  %s4 = scalar_lea.smem %s0, 2
  %s5 = sld [smem:[%s4]]
  %s6 = scalar_lea.smem %s0, 3
  %s7 = sld [smem:[%s6]]
  %s8 = scalar_lea.smem %s0, 4
  %s9 = sld [smem:[%s8]]
  %s10 = scalar_lea.smem %s0, 5
  %s11 = sld [smem:[%s10]]
  %s12 = scalar_lea.smem %s0, 6
  %s13 = sld [smem:[%s12]]
  %s14 = scalar_lea.smem %s0, 7
  %s15 = sld [smem:[%s14]]
  %s16 = scalar_lea.smem %s0, 8
  %s17 = sld [smem:[%s16]]
  %s18 = scalar_lea.smem %s0, 9
  %s19 = sld [smem:[%s18]]
  %s20 = scalar_lea.smem %s0, 10
  %s21 = sld [smem:[%s20]]
  %s22 = scalar_lea.smem %s0, 11
  %s23 = sld [smem:[%s22]]
  %s24 = scalar_lea.smem %s0, 12
  %s25 = sld [smem:[%s24]]
  %s26 = scalar_lea.smem %s0, 13
  %s27 = sld [smem:[%s26]]
  %s28 = scalar_lea.smem %s0, 14
  %s29 = sld [smem:[%s28]]
  %s30 = scalar_lea.smem %s0, 15
  %s31 = sld [smem:[%s30]]
  %s32 = scalar_lea.smem %s0, 16
  %s33 = sld [smem:[%s32]]
  %s34 = scalar_lea.smem %s0, 17
  %s35 = sld [smem:[%s34]]
  %s36 = scalar_lea.smem %s0, 18
  %s37 = sld [smem:[%s36]]
  %s38 = scalar_lea.smem %s0, 19
  %s39 = sld [smem:[%s38]]
  %s40 = scalar_lea.smem %s0, 20
  %s41 = sld [smem:[%s40]]
  %s42 = scalar_lea.smem %s0, 21
  %s43 = sld [smem:[%s42]]
  %s44 = scalar_lea.smem %s0, 22
  %s45 = sld [smem:[%s44]]
  %s46 = scalar_lea.smem %s0, 23
  %s47 = sld [smem:[%s46]]
  %s48 = scalar_lea.smem %s0, 24
  %s49 = sld [smem:[%s48]]
  %s50 = scalar_lea.smem %s0, 25
  %s51 = sld [smem:[%s50]]
  %s52 = scalar_lea.smem %s0, 26
  %s53 = sld [smem:[%s52]]
  %s54 = scalar_lea.smem %s0, 27
  %s55 = sld [smem:[%s54]]
  %s56 = scalar_lea.smem %s0, 28
  %s57 = sld [smem:[%s56]]
  %s58 = scalar_lea.smem %s0, 29
  %s59 = sld [smem:[%s58]]
  %s60 = scalar_lea.smem %s0, 30
  %s61 = sld [smem:[%s60]]
  %s62 = scalar_lea.smem %s0, 31
  %s63 = sld [smem:[%s62]]
  %64 = xla_tuple %s61, %s63
  %s65 = sld [smem:[#allocation0]]
  $region161: #{clipnet_forward.1} parent=0
    _
  %s67 = ssub.s32 1, %s65
  %s68 = scalar_select 0, %s67, %s65
  %v69 = vstv %s25
  %70 = vst [vmem:[#allocation2] sm:$0x1] %v69
  loop: start=0, step=1, limit=4
  $region2: #{clipnet_forward.1} parent=0 // loop_pre_header
    _
  $region3: #{clipnet_forward.1} parent=0 // loop_header
    %s72 = sphi 0, %s76
    %p73 = scmp.ge.s32.totalorder %s72, 4
    %s82 = sphi 0, %s84
    %s85 = sphi 0, %s82
    %s86 = sphi 0, %s85
    %s102 = sphi 0, %s86
    %s108 = sphi 0, %s110
    %s111 = sphi 0, %s108
    %s112 = sphi 0, %s111
    %s128 = sphi 0, %s112
    %s134 = sphi 0, %s136
    %s137 = sphi 0, %s134
    %s138 = sphi 0, %s137
    %s154 = sphi 0, %s138
    %s160 = sphi 0, %s162
    %s163 = sphi 0, %s160
    %s164 = sphi 0, %s163
    %s180 = sphi 0, %s164
    %s184 = sphi 0, %s184
    %s186 = sphi 0, %s184
    %s187 = sphi 0, %s186
    %s201 = sphi 0, %s187
    %s205 = sphi 0, %s205
    %s207 = sphi 0, %s205
    %s208 = sphi 0, %s207
    %s222 = sphi 0, %s208
    %s226 = sphi 0, %s226
    %s228 = sphi 0, %s226
    %s229 = sphi 0, %s228
    %s243 = sphi 0, %s229
    %s247 = sphi 0, %s247
    %s249 = sphi 0, %s247
    %s250 = sphi 0, %s249
    %s264 = sphi 0, %s250
    %s268 = sphi 0, %s268
    %s270 = sphi 0, %s268
    %s271 = sphi 0, %s270
    %s285 = sphi 0, %s271
    %s289 = sphi 0, %s289
    %s291 = sphi 0, %s289
    %s292 = sphi 0, %s291
    %s306 = sphi 0, %s292
    %s310 = sphi 0, %s310
    %s312 = sphi 0, %s310
    %s313 = sphi 0, %s312
    %s327 = sphi 0, %s313
    %s331 = sphi 0, %s331
    %s333 = sphi 0, %s331
    %s334 = sphi 0, %s333
    %s348 = sphi 0, %s334
    %s352 = sphi 0, %s352
    %s354 = sphi 0, %s352
    %s355 = sphi 0, %s354
    %s369 = sphi 0, %s355
    %s373 = sphi 0, %s373
    %s375 = sphi 0, %s373
    %s376 = sphi 0, %s375
    %s390 = sphi 0, %s376
    %s394 = sphi 0, %s394
    %s396 = sphi 0, %s394
    %s397 = sphi 0, %s396
    %s411 = sphi 0, %s397
    %s415 = sphi 0, %s415
    %s417 = sphi 0, %s415
    %s418 = sphi 0, %s417
    %s432 = sphi 0, %s418
    %s436 = sphi 0, %s436
    %s438 = sphi 0, %s436
    %s439 = sphi 0, %s438
    %s453 = sphi 0, %s439
    %s457 = sphi 0, %s457
    %s459 = sphi 0, %s457
    %s460 = sphi 0, %s459
    %s474 = sphi 0, %s460
    %s478 = sphi 0, %s478
    %s480 = sphi 0, %s478
    %s481 = sphi 0, %s480
    %s495 = sphi 0, %s481
    %s499 = sphi 0, %s499
    %s501 = sphi 0, %s499
    %s502 = sphi 0, %s501
    %s516 = sphi 0, %s502
    %s520 = sphi 0, %s520
    %s522 = sphi 0, %s520
    %s523 = sphi 0, %s522
    %s537 = sphi 0, %s523
    %s541 = sphi 0, %s541
    %s543 = sphi 0, %s541
    %s544 = sphi 0, %s543
    %s558 = sphi 0, %s544
    %s562 = sphi 0, %s562
    %s564 = sphi 0, %s562
    %s565 = sphi 0, %s564
    %s579 = sphi 0, %s565
    %s583 = sphi 0, %s583
    %s585 = sphi 0, %s583
    %s586 = sphi 0, %s585
    %s600 = sphi 0, %s586
    %s604 = sphi 0, %s604
    %s606 = sphi 0, %s604
    %s607 = sphi 0, %s606
    %s621 = sphi 0, %s607
    %s625 = sphi 0, %s625
    %s627 = sphi 0, %s625
    %s628 = sphi 0, %s627
    %s642 = sphi 0, %s628
    %s646 = sphi 0, %s646
    %s648 = sphi 0, %s646
    %s649 = sphi 0, %s648
    %s663 = sphi 0, %s649
    %s667 = sphi 0, %s667
    %s669 = sphi 0, %s667
    %s670 = sphi 0, %s669
    %s684 = sphi 0, %s670
    %s688 = sphi 0, %s688
    %s690 = sphi 0, %s688
    %s691 = sphi 0, %s690
    %s705 = sphi 0, %s691
    %s709 = sphi 0, %s709
    %s711 = sphi 0, %s709
    %s712 = sphi 0, %s711
    %s726 = sphi 0, %s712
    %s732 = sphi 0, %s734
    %s735 = sphi 0, %s732
    %s736 = sphi 0, %s735
    %s752 = sphi 0, %s736
    %s758 = sphi 0, %s760
    %s761 = sphi 0, %s758
    %s762 = sphi 0, %s761
    %s778 = sphi 0, %s762
  $region4: #{clipnet_forward.1} parent=0 // loop_header_branch
    %75 = sbr.rel (%p73) target = $region8
  $region5: #{clipnet_forward.1} parent=0 // loop_body
    %s77 = ssub.s32 %s72, 1
    %s78 = ssub.s32 %s72, 2
    %s79 = sadd.s32 %s72, 1
    %s80 = ssub.s32 %s72, %s79
    %p81 = scmp.eq.s32.totalorder %s80, 0
    %s83 = sadd.s32 %s82, 1
    %s84 = scalar_select %p81, %s82, %s83
    %p87 = pneg %p81
    %p88 = scmp.eq.s32.totalorder %s72, 1
    %p89 = por %p87, %p88
    %p90 = scmp.ne.s32.totalorder %s82, %s85
    %p91 = scmp.eq.s32.totalorder %s72, 0
    %p92 = por %p90, %p91
    %p93 = scmp.ne.s32.totalorder %s82, %s85
    %p94 = scmp.eq.s32.totalorder %s77, 1
    %p95 = por %p93, %p94
    %p96 = scmp.ne.s32.totalorder %s85, %s86
    %p97 = scmp.eq.s32.totalorder %s77, 0
    %p98 = por %p96, %p97
    %p99 = scmp.ne.s32.totalorder %s85, %s86
    %p100 = scmp.eq.s32.totalorder %s78, 1
    %p101 = por %p99, %p100
    %p103 = scmp.ne.s32.totalorder %s86, %s102
    %p104 = scmp.eq.s32.totalorder %s78, 0
    %p105 = por %p103, %p104
    %s106 = ssub.s32 %s72, %s79
    %p107 = scmp.eq.s32.totalorder %s106, 0
    %s109 = sadd.s32 %s108, 1
    %s110 = scalar_select %p107, %s108, %s109
    %p113 = pneg %p107
    %p114 = scmp.eq.s32.totalorder %s72, 1
    %p115 = por %p113, %p114
    %p116 = scmp.ne.s32.totalorder %s108, %s111
    %p117 = scmp.eq.s32.totalorder %s72, 0
    %p118 = por %p116, %p117
    %p119 = scmp.ne.s32.totalorder %s108, %s111
    %p120 = scmp.eq.s32.totalorder %s77, 1
    %p121 = por %p119, %p120
    %p122 = scmp.ne.s32.totalorder %s111, %s112
    %p123 = scmp.eq.s32.totalorder %s77, 0
    %p124 = por %p122, %p123
    %p125 = scmp.ne.s32.totalorder %s111, %s112
    %p126 = scmp.eq.s32.totalorder %s78, 1
    %p127 = por %p125, %p126
    %p129 = scmp.ne.s32.totalorder %s112, %s128
    %p130 = scmp.eq.s32.totalorder %s78, 0
    %p131 = por %p129, %p130
    %s132 = ssub.s32 %s72, %s79
    %p133 = scmp.eq.s32.totalorder %s132, 0
    %s135 = sadd.s32 %s134, 1
    %s136 = scalar_select %p133, %s134, %s135
    %p139 = pneg %p133
    %p140 = scmp.eq.s32.totalorder %s72, 1
    %p141 = por %p139, %p140
    %p142 = scmp.ne.s32.totalorder %s134, %s137
    %p143 = scmp.eq.s32.totalorder %s72, 0
    %p144 = por %p142, %p143
    %p145 = scmp.ne.s32.totalorder %s134, %s137
    %p146 = scmp.eq.s32.totalorder %s77, 1
    %p147 = por %p145, %p146
    %p148 = scmp.ne.s32.totalorder %s137, %s138
    %p149 = scmp.eq.s32.totalorder %s77, 0
    %p150 = por %p148, %p149
    %p151 = scmp.ne.s32.totalorder %s137, %s138
    %p152 = scmp.eq.s32.totalorder %s78, 1
    %p153 = por %p151, %p152
    %p155 = scmp.ne.s32.totalorder %s138, %s154
    %p156 = scmp.eq.s32.totalorder %s78, 0
    %p157 = por %p155, %p156
    %s158 = ssub.s32 %s72, %s79
    %p159 = scmp.eq.s32.totalorder %s158, 0
    %s161 = sadd.s32 %s160, 1
    %s162 = scalar_select %p159, %s160, %s161
    %p165 = pneg %p159
    %p166 = scmp.eq.s32.totalorder %s72, 1
    %p167 = por %p165, %p166
    %p168 = scmp.ne.s32.totalorder %s160, %s163
    %p169 = scmp.eq.s32.totalorder %s72, 0
    %p170 = por %p168, %p169
    %p171 = scmp.ne.s32.totalorder %s160, %s163
    %p172 = scmp.eq.s32.totalorder %s77, 1
    %p173 = por %p171, %p172
    %p174 = scmp.ne.s32.totalorder %s163, %s164
    %p175 = scmp.eq.s32.totalorder %s77, 0
    %p176 = por %p174, %p175
    %p177 = scmp.ne.s32.totalorder %s163, %s164
    %p178 = scmp.eq.s32.totalorder %s78, 1
    %p179 = por %p177, %p178
    %p181 = scmp.ne.s32.totalorder %s164, %s180
    %p182 = scmp.eq.s32.totalorder %s78, 0
    %p183 = por %p181, %p182
    %s185 = sadd.s32 %s184, 1
    %p188 = scmp.eq.s32.totalorder %s72, 1
    %p189 = scmp.ne.s32.totalorder %s184, %s186
    %p190 = scmp.eq.s32.totalorder %s72, 0
    %p191 = por %p189, %p190
    %p192 = scmp.ne.s32.totalorder %s184, %s186
    %p193 = scmp.eq.s32.totalorder %s77, 1
    %p194 = por %p192, %p193
    %p195 = scmp.ne.s32.totalorder %s186, %s187
    %p196 = scmp.eq.s32.totalorder %s77, 0
    %p197 = por %p195, %p196
    %p198 = scmp.ne.s32.totalorder %s186, %s187
    %p199 = scmp.eq.s32.totalorder %s78, 1
    %p200 = por %p198, %p199
    %p202 = scmp.ne.s32.totalorder %s187, %s201
    %p203 = scmp.eq.s32.totalorder %s78, 0
    %p204 = por %p202, %p203
    %s206 = sadd.s32 %s205, 1
    %p209 = scmp.eq.s32.totalorder %s72, 1
    %p210 = scmp.ne.s32.totalorder %s205, %s207
    %p211 = scmp.eq.s32.totalorder %s72, 0
    %p212 = por %p210, %p211
    %p213 = scmp.ne.s32.totalorder %s205, %s207
    %p214 = scmp.eq.s32.totalorder %s77, 1
    %p215 = por %p213, %p214
    %p216 = scmp.ne.s32.totalorder %s207, %s208
    %p217 = scmp.eq.s32.totalorder %s77, 0
    %p218 = por %p216, %p217
    %p219 = scmp.ne.s32.totalorder %s207, %s208
    %p220 = scmp.eq.s32.totalorder %s78, 1
    %p221 = por %p219, %p220
    %p223 = scmp.ne.s32.totalorder %s208, %s222
    %p224 = scmp.eq.s32.totalorder %s78, 0
    %p225 = por %p223, %p224
    %s227 = sadd.s32 %s226, 1
    %p230 = scmp.eq.s32.totalorder %s72, 1
    %p231 = scmp.ne.s32.totalorder %s226, %s228
    %p232 = scmp.eq.s32.totalorder %s72, 0
    %p233 = por %p231, %p232
    %p234 = scmp.ne.s32.totalorder %s226, %s228
    %p235 = scmp.eq.s32.totalorder %s77, 1
    %p236 = por %p234, %p235
    %p237 = scmp.ne.s32.totalorder %s228, %s229
    %p238 = scmp.eq.s32.totalorder %s77, 0
    %p239 = por %p237, %p238
    %p240 = scmp.ne.s32.totalorder %s228, %s229
    %p241 = scmp.eq.s32.totalorder %s78, 1
    %p242 = por %p240, %p241
    %p244 = scmp.ne.s32.totalorder %s229, %s243
    %p245 = scmp.eq.s32.totalorder %s78, 0
    %p246 = por %p244, %p245
    %s248 = sadd.s32 %s247, 1
    %p251 = scmp.eq.s32.totalorder %s72, 1
    %p252 = scmp.ne.s32.totalorder %s247, %s249
    %p253 = scmp.eq.s32.totalorder %s72, 0
    %p254 = por %p252, %p253
    %p255 = scmp.ne.s32.totalorder %s247, %s249
    %p256 = scmp.eq.s32.totalorder %s77, 1
    %p257 = por %p255, %p256
    %p258 = scmp.ne.s32.totalorder %s249, %s250
    %p259 = scmp.eq.s32.totalorder %s77, 0
    %p260 = por %p258, %p259
    %p261 = scmp.ne.s32.totalorder %s249, %s250
    %p262 = scmp.eq.s32.totalorder %s78, 1
    %p263 = por %p261, %p262
    %p265 = scmp.ne.s32.totalorder %s250, %s264
    %p266 = scmp.eq.s32.totalorder %s78, 0
    %p267 = por %p265, %p266
    %s269 = sadd.s32 %s268, 1
    %p272 = scmp.eq.s32.totalorder %s72, 1
    %p273 = scmp.ne.s32.totalorder %s268, %s270
    %p274 = scmp.eq.s32.totalorder %s72, 0
    %p275 = por %p273, %p274
    %p276 = scmp.ne.s32.totalorder %s268, %s270
    %p277 = scmp.eq.s32.totalorder %s77, 1
    %p278 = por %p276, %p277
    %p279 = scmp.ne.s32.totalorder %s270, %s271
    %p280 = scmp.eq.s32.totalorder %s77, 0
    %p281 = por %p279, %p280
    %p282 = scmp.ne.s32.totalorder %s270, %s271
    %p283 = scmp.eq.s32.totalorder %s78, 1
    %p284 = por %p282, %p283
    %p286 = scmp.ne.s32.totalorder %s271, %s285
    %p287 = scmp.eq.s32.totalorder %s78, 0
    %p288 = por %p286, %p287
    %s290 = sadd.s32 %s289, 1
    %p293 = scmp.eq.s32.totalorder %s72, 1
    %p294 = scmp.ne.s32.totalorder %s289, %s291
    %p295 = scmp.eq.s32.totalorder %s72, 0
    %p296 = por %p294, %p295
    %p297 = scmp.ne.s32.totalorder %s289, %s291
    %p298 = scmp.eq.s32.totalorder %s77, 1
    %p299 = por %p297, %p298
    %p300 = scmp.ne.s32.totalorder %s291, %s292
    %p301 = scmp.eq.s32.totalorder %s77, 0
    %p302 = por %p300, %p301
    %p303 = scmp.ne.s32.totalorder %s291, %s292
    %p304 = scmp.eq.s32.totalorder %s78, 1
    %p305 = por %p303, %p304
    %p307 = scmp.ne.s32.totalorder %s292, %s306
    %p308 = scmp.eq.s32.totalorder %s78, 0
    %p309 = por %p307, %p308
    %s311 = sadd.s32 %s310, 1
    %p314 = scmp.eq.s32.totalorder %s72, 1
    %p315 = scmp.ne.s32.totalorder %s310, %s312
    %p316 = scmp.eq.s32.totalorder %s72, 0
    %p317 = por %p315, %p316
    %p318 = scmp.ne.s32.totalorder %s310, %s312
    %p319 = scmp.eq.s32.totalorder %s77, 1
    %p320 = por %p318, %p319
    %p321 = scmp.ne.s32.totalorder %s312, %s313
    %p322 = scmp.eq.s32.totalorder %s77, 0
    %p323 = por %p321, %p322
    %p324 = scmp.ne.s32.totalorder %s312, %s313
    %p325 = scmp.eq.s32.totalorder %s78, 1
    %p326 = por %p324, %p325
    %p328 = scmp.ne.s32.totalorder %s313, %s327
    %p329 = scmp.eq.s32.totalorder %s78, 0
    %p330 = por %p328, %p329
    %s332 = sadd.s32 %s331, 1
    %p335 = scmp.eq.s32.totalorder %s72, 1
    %p336 = scmp.ne.s32.totalorder %s331, %s333
    %p337 = scmp.eq.s32.totalorder %s72, 0
    %p338 = por %p336, %p337
    %p339 = scmp.ne.s32.totalorder %s331, %s333
    %p340 = scmp.eq.s32.totalorder %s77, 1
    %p341 = por %p339, %p340
    %p342 = scmp.ne.s32.totalorder %s333, %s334
    %p343 = scmp.eq.s32.totalorder %s77, 0
    %p344 = por %p342, %p343
    %p345 = scmp.ne.s32.totalorder %s333, %s334
    %p346 = scmp.eq.s32.totalorder %s78, 1
    %p347 = por %p345, %p346
    %p349 = scmp.ne.s32.totalorder %s334, %s348
    %p350 = scmp.eq.s32.totalorder %s78, 0
    %p351 = por %p349, %p350
    %s353 = sadd.s32 %s352, 1
    %p356 = scmp.eq.s32.totalorder %s72, 1
    %p357 = scmp.ne.s32.totalorder %s352, %s354
    %p358 = scmp.eq.s32.totalorder %s72, 0
    %p359 = por %p357, %p358
    %p360 = scmp.ne.s32.totalorder %s352, %s354
    %p361 = scmp.eq.s32.totalorder %s77, 1
    %p362 = por %p360, %p361
    %p363 = scmp.ne.s32.totalorder %s354, %s355
    %p364 = scmp.eq.s32.totalorder %s77, 0
    %p365 = por %p363, %p364
    %p366 = scmp.ne.s32.totalorder %s354, %s355
    %p367 = scmp.eq.s32.totalorder %s78, 1
    %p368 = por %p366, %p367
    %p370 = scmp.ne.s32.totalorder %s355, %s369
    %p371 = scmp.eq.s32.totalorder %s78, 0
    %p372 = por %p370, %p371
    %s374 = sadd.s32 %s373, 1
    %p377 = scmp.eq.s32.totalorder %s72, 1
    %p378 = scmp.ne.s32.totalorder %s373, %s375
    %p379 = scmp.eq.s32.totalorder %s72, 0
    %p380 = por %p378, %p379
    %p381 = scmp.ne.s32.totalorder %s373, %s375
    %p382 = scmp.eq.s32.totalorder %s77, 1
    %p383 = por %p381, %p382
    %p384 = scmp.ne.s32.totalorder %s375, %s376
    %p385 = scmp.eq.s32.totalorder %s77, 0
    %p386 = por %p384, %p385
    %p387 = scmp.ne.s32.totalorder %s375, %s376
    %p388 = scmp.eq.s32.totalorder %s78, 1
    %p389 = por %p387, %p388
    %p391 = scmp.ne.s32.totalorder %s376, %s390
    %p392 = scmp.eq.s32.totalorder %s78, 0
    %p393 = por %p391, %p392
    %s395 = sadd.s32 %s394, 1
    %p398 = scmp.eq.s32.totalorder %s72, 1
    %p399 = scmp.ne.s32.totalorder %s394, %s396
    %p400 = scmp.eq.s32.totalorder %s72, 0
    %p401 = por %p399, %p400
    %p402 = scmp.ne.s32.totalorder %s394, %s396
    %p403 = scmp.eq.s32.totalorder %s77, 1
    %p404 = por %p402, %p403
    %p405 = scmp.ne.s32.totalorder %s396, %s397
    %p406 = scmp.eq.s32.totalorder %s77, 0
    %p407 = por %p405, %p406
    %p408 = scmp.ne.s32.totalorder %s396, %s397
    %p409 = scmp.eq.s32.totalorder %s78, 1
    %p410 = por %p408, %p409
    %p412 = scmp.ne.s32.totalorder %s397, %s411
    %p413 = scmp.eq.s32.totalorder %s78, 0
    %p414 = por %p412, %p413
    %s416 = sadd.s32 %s415, 1
    %p419 = scmp.eq.s32.totalorder %s72, 1
    %p420 = scmp.ne.s32.totalorder %s415, %s417
    %p421 = scmp.eq.s32.totalorder %s72, 0
    %p422 = por %p420, %p421
    %p423 = scmp.ne.s32.totalorder %s415, %s417
    %p424 = scmp.eq.s32.totalorder %s77, 1
    %p425 = por %p423, %p424
    %p426 = scmp.ne.s32.totalorder %s417, %s418
    %p427 = scmp.eq.s32.totalorder %s77, 0
    %p428 = por %p426, %p427
    %p429 = scmp.ne.s32.totalorder %s417, %s418
    %p430 = scmp.eq.s32.totalorder %s78, 1
    %p431 = por %p429, %p430
    %p433 = scmp.ne.s32.totalorder %s418, %s432
    %p434 = scmp.eq.s32.totalorder %s78, 0
    %p435 = por %p433, %p434
    %s437 = sadd.s32 %s436, 1
    %p440 = scmp.eq.s32.totalorder %s72, 1
    %p441 = scmp.ne.s32.totalorder %s436, %s438
    %p442 = scmp.eq.s32.totalorder %s72, 0
    %p443 = por %p441, %p442
    %p444 = scmp.ne.s32.totalorder %s436, %s438
    %p445 = scmp.eq.s32.totalorder %s77, 1
    %p446 = por %p444, %p445
    %p447 = scmp.ne.s32.totalorder %s438, %s439
    %p448 = scmp.eq.s32.totalorder %s77, 0
    %p449 = por %p447, %p448
    %p450 = scmp.ne.s32.totalorder %s438, %s439
    %p451 = scmp.eq.s32.totalorder %s78, 1
    %p452 = por %p450, %p451
    %p454 = scmp.ne.s32.totalorder %s439, %s453
    %p455 = scmp.eq.s32.totalorder %s78, 0
    %p456 = por %p454, %p455
    %s458 = sadd.s32 %s457, 1
    %p461 = scmp.eq.s32.totalorder %s72, 1
    %p462 = scmp.ne.s32.totalorder %s457, %s459
    %p463 = scmp.eq.s32.totalorder %s72, 0
    %p464 = por %p462, %p463
    %p465 = scmp.ne.s32.totalorder %s457, %s459
    %p466 = scmp.eq.s32.totalorder %s77, 1
    %p467 = por %p465, %p466
    %p468 = scmp.ne.s32.totalorder %s459, %s460
    %p469 = scmp.eq.s32.totalorder %s77, 0
    %p470 = por %p468, %p469
    %p471 = scmp.ne.s32.totalorder %s459, %s460
    %p472 = scmp.eq.s32.totalorder %s78, 1
    %p473 = por %p471, %p472
    %p475 = scmp.ne.s32.totalorder %s460, %s474
    %p476 = scmp.eq.s32.totalorder %s78, 0
    %p477 = por %p475, %p476
    %s479 = sadd.s32 %s478, 1
    %p482 = scmp.eq.s32.totalorder %s72, 1
    %p483 = scmp.ne.s32.totalorder %s478, %s480
    %p484 = scmp.eq.s32.totalorder %s72, 0
    %p485 = por %p483, %p484
    %p486 = scmp.ne.s32.totalorder %s478, %s480
    %p487 = scmp.eq.s32.totalorder %s77, 1
    %p488 = por %p486, %p487
    %p489 = scmp.ne.s32.totalorder %s480, %s481
    %p490 = scmp.eq.s32.totalorder %s77, 0
    %p491 = por %p489, %p490
    %p492 = scmp.ne.s32.totalorder %s480, %s481
    %p493 = scmp.eq.s32.totalorder %s78, 1
    %p494 = por %p492, %p493
    %p496 = scmp.ne.s32.totalorder %s481, %s495
    %p497 = scmp.eq.s32.totalorder %s78, 0
    %p498 = por %p496, %p497
    %s500 = sadd.s32 %s499, 1
    %p503 = scmp.eq.s32.totalorder %s72, 1
    %p504 = scmp.ne.s32.totalorder %s499, %s501
    %p505 = scmp.eq.s32.totalorder %s72, 0
    %p506 = por %p504, %p505
    %p507 = scmp.ne.s32.totalorder %s499, %s501
    %p508 = scmp.eq.s32.totalorder %s77, 1
    %p509 = por %p507, %p508
    %p510 = scmp.ne.s32.totalorder %s501, %s502
    %p511 = scmp.eq.s32.totalorder %s77, 0
    %p512 = por %p510, %p511
    %p513 = scmp.ne.s32.totalorder %s501, %s502
    %p514 = scmp.eq.s32.totalorder %s78, 1
    %p515 = por %p513, %p514
    %p517 = scmp.ne.s32.totalorder %s502, %s516
    %p518 = scmp.eq.s32.totalorder %s78, 0
    %p519 = por %p517, %p518
    %s521 = sadd.s32 %s520, 1
    %p524 = scmp.eq.s32.totalorder %s72, 1
    %p525 = scmp.ne.s32.totalorder %s520, %s522
    %p526 = scmp.eq.s32.totalorder %s72, 0
    %p527 = por %p525, %p526
    %p528 = scmp.ne.s32.totalorder %s520, %s522
    %p529 = scmp.eq.s32.totalorder %s77, 1
    %p530 = por %p528, %p529
    %p531 = scmp.ne.s32.totalorder %s522, %s523
    %p532 = scmp.eq.s32.totalorder %s77, 0
    %p533 = por %p531, %p532
    %p534 = scmp.ne.s32.totalorder %s522, %s523
    %p535 = scmp.eq.s32.totalorder %s78, 1
    %p536 = por %p534, %p535
    %p538 = scmp.ne.s32.totalorder %s523, %s537
    %p539 = scmp.eq.s32.totalorder %s78, 0
    %p540 = por %p538, %p539
    %s542 = sadd.s32 %s541, 1
    %p545 = scmp.eq.s32.totalorder %s72, 1
    %p546 = scmp.ne.s32.totalorder %s541, %s543
    %p547 = scmp.eq.s32.totalorder %s72, 0
    %p548 = por %p546, %p547
    %p549 = scmp.ne.s32.totalorder %s541, %s543
    %p550 = scmp.eq.s32.totalorder %s77, 1
    %p551 = por %p549, %p550
    %p552 = scmp.ne.s32.totalorder %s543, %s544
    %p553 = scmp.eq.s32.totalorder %s77, 0
    %p554 = por %p552, %p553
    %p555 = scmp.ne.s32.totalorder %s543, %s544
    %p556 = scmp.eq.s32.totalorder %s78, 1
    %p557 = por %p555, %p556
    %p559 = scmp.ne.s32.totalorder %s544, %s558
    %p560 = scmp.eq.s32.totalorder %s78, 0
    %p561 = por %p559, %p560
    %s563 = sadd.s32 %s562, 1
    %p566 = scmp.eq.s32.totalorder %s72, 1
    %p567 = scmp.ne.s32.totalorder %s562, %s564
    %p568 = scmp.eq.s32.totalorder %s72, 0
    %p569 = por %p567, %p568
    %p570 = scmp.ne.s32.totalorder %s562, %s564
    %p571 = scmp.eq.s32.totalorder %s77, 1
    %p572 = por %p570, %p571
    %p573 = scmp.ne.s32.totalorder %s564, %s565
    %p574 = scmp.eq.s32.totalorder %s77, 0
    %p575 = por %p573, %p574
    %p576 = scmp.ne.s32.totalorder %s564, %s565
    %p577 = scmp.eq.s32.totalorder %s78, 1
    %p578 = por %p576, %p577
    %p580 = scmp.ne.s32.totalorder %s565, %s579
    %p581 = scmp.eq.s32.totalorder %s78, 0
    %p582 = por %p580, %p581
    %s584 = sadd.s32 %s583, 1
    %p587 = scmp.eq.s32.totalorder %s72, 1
    %p588 = scmp.ne.s32.totalorder %s583, %s585
    %p589 = scmp.eq.s32.totalorder %s72, 0
    %p590 = por %p588, %p589
    %p591 = scmp.ne.s32.totalorder %s583, %s585
    %p592 = scmp.eq.s32.totalorder %s77, 1
    %p593 = por %p591, %p592
    %p594 = scmp.ne.s32.totalorder %s585, %s586
    %p595 = scmp.eq.s32.totalorder %s77, 0
    %p596 = por %p594, %p595
    %p597 = scmp.ne.s32.totalorder %s585, %s586
    %p598 = scmp.eq.s32.totalorder %s78, 1
    %p599 = por %p597, %p598
    %p601 = scmp.ne.s32.totalorder %s586, %s600
    %p602 = scmp.eq.s32.totalorder %s78, 0
    %p603 = por %p601, %p602
    %s605 = sadd.s32 %s604, 1
    %p608 = scmp.eq.s32.totalorder %s72, 1
    %p609 = scmp.ne.s32.totalorder %s604, %s606
    %p610 = scmp.eq.s32.totalorder %s72, 0
    %p611 = por %p609, %p610
    %p612 = scmp.ne.s32.totalorder %s604, %s606
    %p613 = scmp.eq.s32.totalorder %s77, 1
    %p614 = por %p612, %p613
    %p615 = scmp.ne.s32.totalorder %s606, %s607
    %p616 = scmp.eq.s32.totalorder %s77, 0
    %p617 = por %p615, %p616
    %p618 = scmp.ne.s32.totalorder %s606, %s607
    %p619 = scmp.eq.s32.totalorder %s78, 1
    %p620 = por %p618, %p619
    %p622 = scmp.ne.s32.totalorder %s607, %s621
    %p623 = scmp.eq.s32.totalorder %s78, 0
    %p624 = por %p622, %p623
    %s626 = sadd.s32 %s625, 1
    %p629 = scmp.eq.s32.totalorder %s72, 1
    %p630 = scmp.ne.s32.totalorder %s625, %s627
    %p631 = scmp.eq.s32.totalorder %s72, 0
    %p632 = por %p630, %p631
    %p633 = scmp.ne.s32.totalorder %s625, %s627
    %p634 = scmp.eq.s32.totalorder %s77, 1
    %p635 = por %p633, %p634
    %p636 = scmp.ne.s32.totalorder %s627, %s628
    %p637 = scmp.eq.s32.totalorder %s77, 0
    %p638 = por %p636, %p637
    %p639 = scmp.ne.s32.totalorder %s627, %s628
    %p640 = scmp.eq.s32.totalorder %s78, 1
    %p641 = por %p639, %p640
    %p643 = scmp.ne.s32.totalorder %s628, %s642
    %p644 = scmp.eq.s32.totalorder %s78, 0
    %p645 = por %p643, %p644
    %s647 = sadd.s32 %s646, 1
    %p650 = scmp.eq.s32.totalorder %s72, 1
    %p651 = scmp.ne.s32.totalorder %s646, %s648
    %p652 = scmp.eq.s32.totalorder %s72, 0
    %p653 = por %p651, %p652
    %p654 = scmp.ne.s32.totalorder %s646, %s648
    %p655 = scmp.eq.s32.totalorder %s77, 1
    %p656 = por %p654, %p655
    %p657 = scmp.ne.s32.totalorder %s648, %s649
    %p658 = scmp.eq.s32.totalorder %s77, 0
    %p659 = por %p657, %p658
    %p660 = scmp.ne.s32.totalorder %s648, %s649
    %p661 = scmp.eq.s32.totalorder %s78, 1
    %p662 = por %p660, %p661
    %p664 = scmp.ne.s32.totalorder %s649, %s663
    %p665 = scmp.eq.s32.totalorder %s78, 0
    %p666 = por %p664, %p665
    %s668 = sadd.s32 %s667, 1
    %p671 = scmp.eq.s32.totalorder %s72, 1
    %p672 = scmp.ne.s32.totalorder %s667, %s669
    %p673 = scmp.eq.s32.totalorder %s72, 0
    %p674 = por %p672, %p673
    %p675 = scmp.ne.s32.totalorder %s667, %s669
    %p676 = scmp.eq.s32.totalorder %s77, 1
    %p677 = por %p675, %p676
    %p678 = scmp.ne.s32.totalorder %s669, %s670
    %p679 = scmp.eq.s32.totalorder %s77, 0
    %p680 = por %p678, %p679
    %p681 = scmp.ne.s32.totalorder %s669, %s670
    %p682 = scmp.eq.s32.totalorder %s78, 1
    %p683 = por %p681, %p682
    %p685 = scmp.ne.s32.totalorder %s670, %s684
    %p686 = scmp.eq.s32.totalorder %s78, 0
    %p687 = por %p685, %p686
    %s689 = sadd.s32 %s688, 1
    %p692 = scmp.eq.s32.totalorder %s72, 1
    %p693 = scmp.ne.s32.totalorder %s688, %s690
    %p694 = scmp.eq.s32.totalorder %s72, 0
    %p695 = por %p693, %p694
    %p696 = scmp.ne.s32.totalorder %s688, %s690
    %p697 = scmp.eq.s32.totalorder %s77, 1
    %p698 = por %p696, %p697
    %p699 = scmp.ne.s32.totalorder %s690, %s691
    %p700 = scmp.eq.s32.totalorder %s77, 0
    %p701 = por %p699, %p700
    %p702 = scmp.ne.s32.totalorder %s690, %s691
    %p703 = scmp.eq.s32.totalorder %s78, 1
    %p704 = por %p702, %p703
    %p706 = scmp.ne.s32.totalorder %s691, %s705
    %p707 = scmp.eq.s32.totalorder %s78, 0
    %p708 = por %p706, %p707
    %s710 = sadd.s32 %s709, 1
    %p713 = scmp.eq.s32.totalorder %s72, 1
    %p714 = scmp.ne.s32.totalorder %s709, %s711
    %p715 = scmp.eq.s32.totalorder %s72, 0
    %p716 = por %p714, %p715
    %p717 = scmp.ne.s32.totalorder %s709, %s711
    %p718 = scmp.eq.s32.totalorder %s77, 1
    %p719 = por %p717, %p718
    %p720 = scmp.ne.s32.totalorder %s711, %s712
    %p721 = scmp.eq.s32.totalorder %s77, 0
    %p722 = por %p720, %p721
    %p723 = scmp.ne.s32.totalorder %s711, %s712
    %p724 = scmp.eq.s32.totalorder %s78, 1
    %p725 = por %p723, %p724
    %p727 = scmp.ne.s32.totalorder %s712, %s726
    %p728 = scmp.eq.s32.totalorder %s78, 0
    %p729 = por %p727, %p728
    %s730 = ssub.s32 %s72, %s79
    %p731 = scmp.eq.s32.totalorder %s730, 0
    %s733 = sadd.s32 %s732, 1
    %s734 = scalar_select %p731, %s732, %s733
    %p737 = pneg %p731
    %p738 = scmp.eq.s32.totalorder %s72, 1
    %p739 = por %p737, %p738
    %p740 = scmp.ne.s32.totalorder %s732, %s735
    %p741 = scmp.eq.s32.totalorder %s72, 0
    %p742 = por %p740, %p741
    %p743 = scmp.ne.s32.totalorder %s732, %s735
    %p744 = scmp.eq.s32.totalorder %s77, 1
    %p745 = por %p743, %p744
    %p746 = scmp.ne.s32.totalorder %s735, %s736
    %p747 = scmp.eq.s32.totalorder %s77, 0
    %p748 = por %p746, %p747
    %p749 = scmp.ne.s32.totalorder %s735, %s736
    %p750 = scmp.eq.s32.totalorder %s78, 1
    %p751 = por %p749, %p750
    %p753 = scmp.ne.s32.totalorder %s736, %s752
    %p754 = scmp.eq.s32.totalorder %s78, 0
    %p755 = por %p753, %p754
    %s756 = ssub.s32 %s72, %s79
    %p757 = scmp.eq.s32.totalorder %s756, 0
    %s759 = sadd.s32 %s758, 1
    %s760 = scalar_select %p757, %s758, %s759
    %p763 = pneg %p757
    %p764 = scmp.eq.s32.totalorder %s72, 1
    %p765 = por %p763, %p764
    %p766 = scmp.ne.s32.totalorder %s758, %s761
    %p767 = scmp.eq.s32.totalorder %s72, 0
    %p768 = por %p766, %p767
    %p769 = scmp.ne.s32.totalorder %s758, %s761
    %p770 = scmp.eq.s32.totalorder %s77, 1
    %p771 = por %p769, %p770
    %p772 = scmp.ne.s32.totalorder %s761, %s762
    %p773 = scmp.eq.s32.totalorder %s77, 0
    %p774 = por %p772, %p773
    %p775 = scmp.ne.s32.totalorder %s761, %s762
    %p776 = scmp.eq.s32.totalorder %s78, 1
    %p777 = por %p775, %p776
    %p779 = scmp.ne.s32.totalorder %s762, %s778
    %p780 = scmp.eq.s32.totalorder %s78, 0
    %p781 = por %p779, %p780
    %p782 = scmp.le.s32.totalorder 1, %s72
    %p783 = scmp.lt.s32.totalorder %s72, 3
    %p784 = pnand %p782, %p783
    %p785 = pneg %p784
    // Predicated region
    $region9: #{clipnet_forward.1} parent=5 // pred_check
      _
    $region10: #{clipnet_forward.1} parent=5 // pred_check_branch
      %787 = sbr.rel (%p784) target = $region12
    $region11: #{clipnet_forward.1} parent=5 // pred_region
      %s788 = ssub.s32 %s72, 1
      // Predicated region
      $region13: #{clipnet_forward.1} parent=11 // pred_check
        %p789 = pneg %p197
      $region14: #{clipnet_forward.1} parent=11 // pred_check_branch
        %791 = sbr.rel (%p789) target = $region16
      $region15: #{clipnet_forward.1} parent=11 // pred_region
        _
      $region16: #{clipnet_forward.1} parent=11 // pred_fallthru
        _
      // Predicated region
      $region17: #{clipnet_forward.1} parent=11 // pred_check
        %p792 = pneg %p218
      $region18: #{clipnet_forward.1} parent=11 // pred_check_branch
        %794 = sbr.rel (%p792) target = $region20
      $region19: #{clipnet_forward.1} parent=11 // pred_region
        _
      $region20: #{clipnet_forward.1} parent=11 // pred_fallthru
        _
      // Predicated region
      $region21: #{clipnet_forward.1} parent=11 // pred_check
        %p795 = pneg %p239
      $region22: #{clipnet_forward.1} parent=11 // pred_check_branch
        %797 = sbr.rel (%p795) target = $region24
      $region23: #{clipnet_forward.1} parent=11 // pred_region
        _
      $region24: #{clipnet_forward.1} parent=11 // pred_fallthru
        _
      // Predicated region
      $region25: #{clipnet_forward.1} parent=11 // pred_check
        %p798 = pneg %p260
      $region26: #{clipnet_forward.1} parent=11 // pred_check_branch
        %800 = sbr.rel (%p798) target = $region28
      $region27: #{clipnet_forward.1} parent=11 // pred_region
        _
      $region28: #{clipnet_forward.1} parent=11 // pred_fallthru
        _
      // Predicated region
      $region29: #{clipnet_forward.1} parent=11 // pred_check
        %p801 = pneg %p281
      $region30: #{clipnet_forward.1} parent=11 // pred_check_branch
        %803 = sbr.rel (%p801) target = $region32
      $region31: #{clipnet_forward.1} parent=11 // pred_region
        _
      $region32: #{clipnet_forward.1} parent=11 // pred_fallthru
        _
      // Predicated region
      $region33: #{clipnet_forward.1} parent=11 // pred_check
        %p804 = pneg %p302
      $region34: #{clipnet_forward.1} parent=11 // pred_check_branch
        %806 = sbr.rel (%p804) target = $region36
      $region35: #{clipnet_forward.1} parent=11 // pred_region
        _
      $region36: #{clipnet_forward.1} parent=11 // pred_fallthru
        _
      // Predicated region
      $region37: #{clipnet_forward.1} parent=11 // pred_check
        %p807 = pneg %p323
      $region38: #{clipnet_forward.1} parent=11 // pred_check_branch
        %809 = sbr.rel (%p807) target = $region40
      $region39: #{clipnet_forward.1} parent=11 // pred_region
        _
      $region40: #{clipnet_forward.1} parent=11 // pred_fallthru
        _
      // Predicated region
      $region41: #{clipnet_forward.1} parent=11 // pred_check
        %p810 = pneg %p344
      $region42: #{clipnet_forward.1} parent=11 // pred_check_branch
        %812 = sbr.rel (%p810) target = $region44
      $region43: #{clipnet_forward.1} parent=11 // pred_region
        _
      $region44: #{clipnet_forward.1} parent=11 // pred_fallthru
        _
      // Predicated region
      $region45: #{clipnet_forward.1} parent=11 // pred_check
        %p813 = pneg %p365
      $region46: #{clipnet_forward.1} parent=11 // pred_check_branch
        %815 = sbr.rel (%p813) target = $region48
      $region47: #{clipnet_forward.1} parent=11 // pred_region
        _
      $region48: #{clipnet_forward.1} parent=11 // pred_fallthru
        _
      // Predicated region
      $region49: #{clipnet_forward.1} parent=11 // pred_check
        %p816 = pneg %p386
      $region50: #{clipnet_forward.1} parent=11 // pred_check_branch
        %818 = sbr.rel (%p816) target = $region52
      $region51: #{clipnet_forward.1} parent=11 // pred_region
        _
      $region52: #{clipnet_forward.1} parent=11 // pred_fallthru
        _
      // Predicated region
      $region53: #{clipnet_forward.1} parent=11 // pred_check
        %p819 = pneg %p407
      $region54: #{clipnet_forward.1} parent=11 // pred_check_branch
        %821 = sbr.rel (%p819) target = $region56
      $region55: #{clipnet_forward.1} parent=11 // pred_region
        _
      $region56: #{clipnet_forward.1} parent=11 // pred_fallthru
        _
      // Predicated region
      $region57: #{clipnet_forward.1} parent=11 // pred_check
        %p822 = pneg %p428
      $region58: #{clipnet_forward.1} parent=11 // pred_check_branch
        %824 = sbr.rel (%p822) target = $region60
      $region59: #{clipnet_forward.1} parent=11 // pred_region
        _
      $region60: #{clipnet_forward.1} parent=11 // pred_fallthru
        _
      // Predicated region
      $region61: #{clipnet_forward.1} parent=11 // pred_check
        %p825 = pneg %p449
      $region62: #{clipnet_forward.1} parent=11 // pred_check_branch
        %827 = sbr.rel (%p825) target = $region64
      $region63: #{clipnet_forward.1} parent=11 // pred_region
        _
      $region64: #{clipnet_forward.1} parent=11 // pred_fallthru
        _
      // Predicated region
      $region65: #{clipnet_forward.1} parent=11 // pred_check
        %p828 = pneg %p470
      $region66: #{clipnet_forward.1} parent=11 // pred_check_branch
        %830 = sbr.rel (%p828) target = $region68
      $region67: #{clipnet_forward.1} parent=11 // pred_region
        _
      $region68: #{clipnet_forward.1} parent=11 // pred_fallthru
        _
      // Predicated region
      $region69: #{clipnet_forward.1} parent=11 // pred_check
        %p831 = pneg %p491
      $region70: #{clipnet_forward.1} parent=11 // pred_check_branch
        %833 = sbr.rel (%p831) target = $region72
      $region71: #{clipnet_forward.1} parent=11 // pred_region
        _
      $region72: #{clipnet_forward.1} parent=11 // pred_fallthru
        _
      // Predicated region
      $region73: #{clipnet_forward.1} parent=11 // pred_check
        %p834 = pneg %p512
      $region74: #{clipnet_forward.1} parent=11 // pred_check_branch
        %836 = sbr.rel (%p834) target = $region76
      $region75: #{clipnet_forward.1} parent=11 // pred_region
        _
      $region76: #{clipnet_forward.1} parent=11 // pred_fallthru
        _
      // Predicated region
      $region77: #{clipnet_forward.1} parent=11 // pred_check
        %p837 = pneg %p533
      $region78: #{clipnet_forward.1} parent=11 // pred_check_branch
        %839 = sbr.rel (%p837) target = $region80
      $region79: #{clipnet_forward.1} parent=11 // pred_region
        _
      $region80: #{clipnet_forward.1} parent=11 // pred_fallthru
        _
      // Predicated region
      $region81: #{clipnet_forward.1} parent=11 // pred_check
        %p840 = pneg %p554
      $region82: #{clipnet_forward.1} parent=11 // pred_check_branch
        %842 = sbr.rel (%p840) target = $region84
      $region83: #{clipnet_forward.1} parent=11 // pred_region
        _
      $region84: #{clipnet_forward.1} parent=11 // pred_fallthru
        _
      // Predicated region
      $region85: #{clipnet_forward.1} parent=11 // pred_check
        %p843 = pneg %p575
      $region86: #{clipnet_forward.1} parent=11 // pred_check_branch
        %845 = sbr.rel (%p843) target = $region88
      $region87: #{clipnet_forward.1} parent=11 // pred_region
        _
      $region88: #{clipnet_forward.1} parent=11 // pred_fallthru
        _
      // Predicated region
      $region89: #{clipnet_forward.1} parent=11 // pred_check
        %p846 = pneg %p596
      $region90: #{clipnet_forward.1} parent=11 // pred_check_branch
        %848 = sbr.rel (%p846) target = $region92
      $region91: #{clipnet_forward.1} parent=11 // pred_region
        _
      $region92: #{clipnet_forward.1} parent=11 // pred_fallthru
        _
      // Predicated region
      $region93: #{clipnet_forward.1} parent=11 // pred_check
        %p849 = pneg %p617
      $region94: #{clipnet_forward.1} parent=11 // pred_check_branch
        %851 = sbr.rel (%p849) target = $region96
      $region95: #{clipnet_forward.1} parent=11 // pred_region
        _
      $region96: #{clipnet_forward.1} parent=11 // pred_fallthru
        _
      // Predicated region
      $region97: #{clipnet_forward.1} parent=11 // pred_check
        %p852 = pneg %p638
      $region98: #{clipnet_forward.1} parent=11 // pred_check_branch
        %854 = sbr.rel (%p852) target = $region100
      $region99: #{clipnet_forward.1} parent=11 // pred_region
        _
      $region100: #{clipnet_forward.1} parent=11 // pred_fallthru
        _
      // Predicated region
      $region101: #{clipnet_forward.1} parent=11 // pred_check
        %p855 = pneg %p659
      $region102: #{clipnet_forward.1} parent=11 // pred_check_branch
        %857 = sbr.rel (%p855) target = $region104
      $region103: #{clipnet_forward.1} parent=11 // pred_region
        _
      $region104: #{clipnet_forward.1} parent=11 // pred_fallthru
        _
      // Predicated region
      $region105: #{clipnet_forward.1} parent=11 // pred_check
        %p858 = pneg %p680
      $region106: #{clipnet_forward.1} parent=11 // pred_check_branch
        %860 = sbr.rel (%p858) target = $region108
      $region107: #{clipnet_forward.1} parent=11 // pred_region
        _
      $region108: #{clipnet_forward.1} parent=11 // pred_fallthru
        _
      // Predicated region
      $region109: #{clipnet_forward.1} parent=11 // pred_check
        %p861 = pneg %p701
      $region110: #{clipnet_forward.1} parent=11 // pred_check_branch
        %863 = sbr.rel (%p861) target = $region112
      $region111: #{clipnet_forward.1} parent=11 // pred_region
        _
      $region112: #{clipnet_forward.1} parent=11 // pred_fallthru
        _
      // Predicated region
      $region113: #{clipnet_forward.1} parent=11 // pred_check
        %p864 = pneg %p722
      $region114: #{clipnet_forward.1} parent=11 // pred_check_branch
        %866 = sbr.rel (%p864) target = $region116
      $region115: #{clipnet_forward.1} parent=11 // pred_region
        _
      $region116: #{clipnet_forward.1} parent=11 // pred_fallthru
        _
    $region12: #{clipnet_forward.1} parent=5 // pred_fallthru
      _
    %p867 = scmp.lt.s32.totalorder %s72, 2
    // Predicated region
    $region117: #{clipnet_forward.1} parent=5 // pred_check
      %p868 = pneg %p867
    $region118: #{clipnet_forward.1} parent=5 // pred_check_branch
      %870 = sbr.rel (%p868) target = $region120
    $region119: #{clipnet_forward.1} parent=5 // pred_region
      // Predicated region
      $region121: #{clipnet_forward.1} parent=119 // pred_check
        %p871 = pneg %p92
      $region122: #{clipnet_forward.1} parent=119 // pred_check_branch
        %873 = sbr.rel (%p871) target = $region124
      $region123: #{clipnet_forward.1} parent=119 // pred_region
        %p874 = scmp.lt.s32.totalorder %s72, 1
        %s875 = scalar_select %p874, %s72, 1
        %s876 = smul.addr %s875, 8
        %s877 = scalar_lea.vmem %s1, %s876
      $region124: #{clipnet_forward.1} parent=119 // pred_fallthru
        _
      // Predicated region
      $region125: #{clipnet_forward.1} parent=119 // pred_check
        %p878 = pneg %p118
      $region126: #{clipnet_forward.1} parent=119 // pred_check_branch
        %880 = sbr.rel (%p878) target = $region128
      $region127: #{clipnet_forward.1} parent=119 // pred_region
        %p881 = scmp.lt.s32.totalorder %s72, 1
        %s882 = scalar_select %p881, %s72, 1
        %s883 = smul.addr %s882, 2
        %s884 = smul.addr %s883, 8
        %s885 = scalar_lea.vmem %s3, %s884
      $region128: #{clipnet_forward.1} parent=119 // pred_fallthru
        _
      // Predicated region
      $region129: #{clipnet_forward.1} parent=119 // pred_check
        %p886 = pneg %p144
      $region130: #{clipnet_forward.1} parent=119 // pred_check_branch
        %888 = sbr.rel (%p886) target = $region132
      $region131: #{clipnet_forward.1} parent=119 // pred_region
        %p889 = scmp.lt.s32.totalorder %s72, 1
        %s890 = scalar_select %p889, %s72, 1
        %s891 = smul.addr %s890, 4
        %s892 = smul.addr %s891, 2
        %s893 = scalar_lea.vmem %s5, %s892
      $region132: #{clipnet_forward.1} parent=119 // pred_fallthru
        _
      // Predicated region
      $region133: #{clipnet_forward.1} parent=119 // pred_check
        %p894 = pneg %p170
      $region134: #{clipnet_forward.1} parent=119 // pred_check_branch
        %896 = sbr.rel (%p894) target = $region136
      $region135: #{clipnet_forward.1} parent=119 // pred_region
        %p897 = scmp.lt.s32.totalorder %s72, 1
        %s898 = scalar_select %p897, %s72, 1
        %s899 = smul.addr %s898, 8
        %s900 = scalar_lea.vmem %s7, %s899
      $region136: #{clipnet_forward.1} parent=119 // pred_fallthru
        _
    $region120: #{clipnet_forward.1} parent=5 // pred_fallthru
      _
    %p901 = scmp.le.s32.totalorder 1, %s72
    %p902 = scmp.lt.s32.totalorder %s72, 3
    %p903 = pnand %p901, %p902
    %p904 = pneg %p903
    // Predicated region
    $region137: #{clipnet_forward.1} parent=5 // pred_check
      _
    $region138: #{clipnet_forward.1} parent=5 // pred_check_branch
      %906 = sbr.rel (%p903) target = $region140
    $region139: #{clipnet_forward.1} parent=5 // pred_region
      %s907 = ssub.s32 %s72, 1
      %p908 = scmp.lt.s32.totalorder %s77, 1
      %s909 = scalar_select %p908, %s77, 1
      %s910 = smul.addr %s909, 8
      %s911 = scalar_lea.vmem %s1, %s910
      %p912 = pneg %p98
      %p913 = pneg %p95
      %p914 = scmp.lt.s32.totalorder %s77, 1
      %s915 = scalar_select %p914, %s77, 1
      %s916 = smul.addr %s915, 2
      %s917 = smul.addr %s916, 8
      %s918 = scalar_lea.vmem %s3, %s917
      %p919 = pneg %p124
      %p920 = pneg %p121
      %p921 = scmp.lt.s32.totalorder %s77, 1
      %s922 = scalar_select %p921, %s77, 1
      %s923 = smul.addr %s922, 4
      %s924 = smul.addr %s923, 2
      %s925 = scalar_lea.vmem %s5, %s924
      %p926 = pneg %p150
      %p927 = pneg %p147
      %p928 = scmp.lt.s32.totalorder %s77, 1
      %s929 = scalar_select %p928, %s77, 1
      %s930 = smul.addr %s929, 8
      %s931 = scalar_lea.vmem %s7, %s930
      %p932 = pneg %p176
      %p933 = pneg %p173
      %p934 = pneg %p197
      %p935 = pneg %p194
      %p936 = pneg %p218
      %p937 = pneg %p215
      %p938 = pneg %p239
      %p939 = pneg %p236
      %p940 = pneg %p260
      %p941 = pneg %p257
      %p942 = pneg %p281
      %p943 = pneg %p278
      %p944 = pneg %p302
      %p945 = pneg %p299
      %p946 = pneg %p323
      %p947 = pneg %p320
      %p948 = pneg %p344
      %p949 = pneg %p341
      %p950 = pneg %p365
      %p951 = pneg %p362
      %p952 = pneg %p386
      %p953 = pneg %p383
      %p954 = pneg %p407
      %p955 = pneg %p404
      %p956 = pneg %p428
      %p957 = pneg %p425
      %p958 = pneg %p449
      %p959 = pneg %p446
      %p960 = pneg %p470
      %p961 = pneg %p467
      %p962 = pneg %p491
      %p963 = pneg %p488
      %p964 = pneg %p512
      %p965 = pneg %p509
      %p966 = pneg %p533
      %p967 = pneg %p530
      %p968 = pneg %p554
      %p969 = pneg %p551
      %p970 = pneg %p575
      %p971 = pneg %p572
      %p972 = pneg %p596
      %p973 = pneg %p593
      %p974 = pneg %p617
      %p975 = pneg %p614
      %p976 = pneg %p638
      %p977 = pneg %p635
      %p978 = pneg %p659
      %p979 = pneg %p656
      %p980 = pneg %p680
      %p981 = pneg %p677
      %p982 = pneg %p701
      %p983 = pneg %p698
      %p984 = pneg %p722
      %p985 = pneg %p719
      %p986 = pneg %p748
      %p987 = pneg %p745
      %p988 = scmp.lt.s32.totalorder %s77, 1
      %s989 = scalar_select %p988, %s77, 1
      %s990 = smul.addr %s989, 2
      %s991 = smul.addr %s990, 8
      %s992 = scalar_lea.vmem %s61, %s991
      %p993 = pneg %p774
      %p994 = pneg %p771
      %p995 = scmp.lt.s32.totalorder %s77, 1
      %s996 = scalar_select %p995, %s77, 1
      %s997 = scalar_lea.vmem %s63, %s996
      %p998 = scmp.lt.s32.totalorder %s77, 1
      %s999 = scalar_select %p998, %s77, 1
      %s1000 = smul.addr %s999, 8
      %s1001 = scalar_lea.vmem %s1, %s1000
      %p1002 = scmp.lt.s32.totalorder %s77, 1
      %s1003 = scalar_select %p1002, %s77, 1
      %s1004 = smul.addr %s1003, 2
      %s1005 = smul.addr %s1004, 8
      %s1006 = scalar_lea.vmem %s3, %s1005
      %p1007 = scmp.lt.s32.totalorder %s77, 1
      %s1008 = scalar_select %p1007, %s77, 1
      %s1009 = smul.addr %s1008, 4
      %s1010 = smul.addr %s1009, 2
      %s1011 = scalar_lea.vmem %s5, %s1010
      %p1012 = scmp.lt.s32.totalorder %s77, 1
      %s1013 = scalar_select %p1012, %s77, 1
      %s1014 = smul.addr %s1013, 8
      %s1015 = scalar_lea.vmem %s7, %s1014
      %p1016 = scmp.lt.s32.totalorder %s77, 1
      %s1017 = scalar_select %p1016, %s77, 1
      %s1018 = smul.addr %s1017, 2
      %s1019 = smul.addr %s1018, 8
      %s1020 = scalar_lea.vmem %s61, %s1019
      %p1021 = scmp.lt.s32.totalorder %s77, 1
      %s1022 = scalar_select %p1021, %s77, 1
      %s1023 = scalar_lea.vmem %s63, %s1022
      %v1025 = vld [vmem:[%s1001] sm:$0xff]
      %v1026 = vld [vmem:[%s1006] sm:$0xff]
      %v1027 = vld [vmem:[%s1006 + $0x8] sm:$0xff]
      %v1028 = vld [vmem:[%s1011] sm:$0xff]
      %v1029 = vld [vmem:[%s1015] sm:$0xff]
      %v1030 = vld [vmem:[%s11] sm:$0xf]
      %v1031 = vld [vmem:[%s11 + $0x4] sm:$0xf]
      %v1032 = vld [vmem:[%s11 + $0x8] sm:$0xf]
      %v1033 = vld [vmem:[%s11 + $0xc] sm:$0xf]
      %v1034 = vld [vmem:[%s11 + $0x10] sm:$0xf]
      %v1035 = vld [vmem:[%s11 + $0x14] sm:$0xf]
      %v1036 = vld [vmem:[%s11 + $0x18] sm:$0xf]
      %v1037 = vld [vmem:[%s11 + $0x1c] sm:$0xf]
      %v1038 = vld [vmem:[%s13] sm:$0x1]
      %v1039 = vld [vmem:[%s15] sm:$0xf]
      %v1040 = vld [vmem:[%s15 + $0x4] sm:$0xf]
      %v1041 = vld [vmem:[%s15 + $0x8] sm:$0xf]
      %v1042 = vld [vmem:[%s15 + $0xc] sm:$0xf]
      %v1043 = vld [vmem:[%s17] sm:$0x1]
      %v1044 = vpack.c.bf16 %v1025, %v1025
      %v1046 = vlaneseq
      %v1047 = vshrl.u32 %v1046, 7
      %v1048 = vsub.s32 0, %v1047
      %v1049 = vrot.slane %v1038, %v1048
      %v1059 = vunpack.c.l.b16 %v1030
      %v1060 = vunpack.c.l.b16 %v1031
      %v1061 = vunpack.c.l.b16 %v1032
      %v1062 = vunpack.c.l.b16 %v1033
      %v1063 = vunpack.c.l.b16 %v1034
      %v1064 = vunpack.c.l.b16 %v1035
      %v1065 = vunpack.c.l.b16 %v1036
      %v1066 = vunpack.c.l.b16 %v1037
      %v1067 = vpack.c.b16 %v1060, %v1059
      %v1068 = vpack.c.b16 %v1062, %v1061
      %v1069 = vpack.c.b16 %v1064, %v1063
      %v1070 = vpack.c.b16 %v1066, %v1065
      %vm1075 = vcmask 523264
      %v1077 = vsel %vm1075, %v1044, 0
      %1079 = vmatprep.subr.bf16.mxu0 0
      %1080 = vmatpush1.bf16.msra.mxu0 %v1067
      %1081 = vmatprep.subr.bf16.mxu0 0
      %1082 = vmatpush1.bf16.msra.mxu0 %v1068
      %1083 = vmatprep.subr.bf16.mxu0 0
      %1084 = vmatpush1.bf16.msra.mxu0 %v1069
      %1085 = vmatprep.subr.bf16.mxu0 0
      %1086 = vmatpush1.bf16.msra.mxu0 %v1070
      %1087 = vmatprep.subr.bf16.mxu0 0
      %1088 = vmatpush1.bf16.msra.mxu0 0
      %1089 = vmatprep.subr.bf16.mxu0 0
      %1090 = vmatpush1.bf16.msra.mxu0 0
      %1091 = vmatprep.subr.bf16.mxu0 0
      %1092 = vmatpush1.bf16.msra.mxu0 0
      %1093 = vmatprep.subr.bf16.mxu0 0
      %1094 = vmatpush1.bf16.msra.mxu0 0
      %1095 = vmatprep.subr.bf16.mxu0 0
      %1096 = vmatpush1.bf16.msra.mxu0 0
      %1097 = vmatprep.subr.bf16.mxu0 0
      %1098 = vmatpush1.bf16.msra.mxu0 0
      %1099 = vmatprep.subr.bf16.mxu0 0
      %1100 = vmatpush1.bf16.msra.mxu0 0
      %1101 = vmatprep.subr.bf16.mxu0 0
      %1102 = vmatpush1.bf16.msra.mxu0 0
      %1103 = vmatprep.subr.bf16.mxu0 0
      %1104 = vmatpush1.bf16.msra.mxu0 0
      %1105 = vmatprep.subr.bf16.mxu0 0
      %1106 = vmatpush1.bf16.msra.mxu0 0
      %1107 = vmatprep.subr.bf16.mxu0 0
      %1108 = vmatpush1.bf16.msra.mxu0 0
      %1109 = vmatprep.subr.bf16.mxu0 0
      %1110 = vmatpush1.bf16.msra.mxu0 0
      %1111 = vmatprep.mubr.bf16.mxu0 0
      %1112 = vmatmul.mubr.bf16.gmra.mrb[0].mxu0 %v1077
      %v1113 = vpop.f32.mrb[0].mxu0
      %v1114 = vadd.f32 %v1049, %v1113
      %v1115 = vpop.f32.mrb[0].mxu0
      %v1116 = vpop.f32.mrb[0].mxu0
      %v1117 = vpop.f32.mrb[0].mxu0
      %1118 = vdwg.mxu0
      %vm1119 = vcmp.gt.f32.partialorder %v1114, 0.0
      %v1120 = vmul.f32 %v1114, 0.2
      %v1121 = vsel %vm1119, %v1114, %v1120
      %v1122 = vpack.c.bf16 %v1121, %v1121
      %v1124 = vlaneseq
      %v1125 = vshrl.u32 %v1124, 7
      %v1126 = vsub.s32 0, %v1125
      %v1127 = vrot.slane %v1043, %v1126
      %v1133 = vunpack.c.l.b16 %v1039
      %v1134 = vunpack.c.l.b16 %v1040
      %v1135 = vunpack.c.l.b16 %v1041
      %v1136 = vunpack.c.l.b16 %v1042
      %v1137 = vpack.c.b16 %v1134, %v1133
      %v1138 = vpack.c.b16 %v1136, %v1135
      %vm1141 = vcmask 261120
      %v1143 = vsel %vm1141, %v1122, 0
      %1145 = vmatprep.subr.bf16.mxu0 0
      %1146 = vmatpush1.bf16.msra.mxu0 %v1137
      %1147 = vmatprep.subr.bf16.mxu0 0
      %1148 = vmatpush1.bf16.msra.mxu0 %v1138
      %1149 = vmatprep.subr.bf16.mxu0 0
      %1150 = vmatpush1.bf16.msra.mxu0 0
      %1151 = vmatprep.subr.bf16.mxu0 0
      %1152 = vmatpush1.bf16.msra.mxu0 0
      %1153 = vmatprep.subr.bf16.mxu0 0
      %1154 = vmatpush1.bf16.msra.mxu0 0
      %1155 = vmatprep.subr.bf16.mxu0 0
      %1156 = vmatpush1.bf16.msra.mxu0 0
      %1157 = vmatprep.subr.bf16.mxu0 0
      %1158 = vmatpush1.bf16.msra.mxu0 0
      %1159 = vmatprep.subr.bf16.mxu0 0
      %1160 = vmatpush1.bf16.msra.mxu0 0
      %1161 = vmatprep.subr.bf16.mxu0 0
      %1162 = vmatpush1.bf16.msra.mxu0 0
      %1163 = vmatprep.subr.bf16.mxu0 0
      %1164 = vmatpush1.bf16.msra.mxu0 0
      %1165 = vmatprep.subr.bf16.mxu0 0
      %1166 = vmatpush1.bf16.msra.mxu0 0
      %1167 = vmatprep.subr.bf16.mxu0 0
      %1168 = vmatpush1.bf16.msra.mxu0 0
      %1169 = vmatprep.subr.bf16.mxu0 0
      %1170 = vmatpush1.bf16.msra.mxu0 0
      %1171 = vmatprep.subr.bf16.mxu0 0
      %1172 = vmatpush1.bf16.msra.mxu0 0
      %1173 = vmatprep.subr.bf16.mxu0 0
      %1174 = vmatpush1.bf16.msra.mxu0 0
      %1175 = vmatprep.subr.bf16.mxu0 0
      %1176 = vmatpush1.bf16.msra.mxu0 0
      %1177 = vmatprep.mubr.bf16.mxu0 0
      %1178 = vmatmul.mubr.bf16.gmra.mrb[0].mxu0 %v1143
      %v1179 = vpop.f32.mrb[0].mxu0
      %v1180 = vadd.f32 %v1127, %v1179
      %v1181 = vpop.f32.mrb[0].mxu0
      %v1182 = vpop.f32.mrb[0].mxu0
      %v1183 = vpop.f32.mrb[0].mxu0
      %1184 = vdwg.mxu0
      %v1185 = vld [vmem:[%s9] sm:$0xff]
      %vm1186 = vcmask 130048
      %v1188 = vsel %vm1186, %v1185, 0
      %1190 = vmatprep.subr.mxu0 0.0
      %v1191 = vand.u32 %v1026, 4294901760
      %1192 = vmatpush1.msra.mxu0 %v1191
      %1193 = vmatprep.subr.mxu0 0.0
      %v1194 = vand.u32 %v1027, 4294901760
      %1195 = vmatpush1.msra.mxu0 %v1194
      %1196 = vmatprep.subr.mxu0 0.0
      %1197 = vmatpush1.msra.mxu0 0.0
      %1198 = vmatprep.subr.mxu0 0.0
      %1199 = vmatpush1.msra.mxu0 0.0
      %1200 = vmatprep.subr.mxu0 0.0
      %1201 = vmatpush1.msra.mxu0 0.0
      %1202 = vmatprep.subr.mxu0 0.0
      %1203 = vmatpush1.msra.mxu0 0.0
      %1204 = vmatprep.subr.mxu0 0.0
      %1205 = vmatpush1.msra.mxu0 0.0
      %1206 = vmatprep.subr.mxu0 0.0
      %1207 = vmatpush1.msra.mxu0 0.0
      %1208 = vmatprep.subr.mxu0 0.0
      %1209 = vmatpush1.msra.mxu0 0.0
      %1210 = vmatprep.subr.mxu0 0.0
      %1211 = vmatpush1.msra.mxu0 0.0
      %1212 = vmatprep.subr.mxu0 0.0
      %1213 = vmatpush1.msra.mxu0 0.0
      %1214 = vmatprep.subr.mxu0 0.0
      %1215 = vmatpush1.msra.mxu0 0.0
      %1216 = vmatprep.subr.mxu0 0.0
      %1217 = vmatpush1.msra.mxu0 0.0
      %1218 = vmatprep.subr.mxu0 0.0
      %1219 = vmatpush1.msra.mxu0 0.0
      %1220 = vmatprep.subr.mxu0 0.0
      %1221 = vmatpush1.msra.mxu0 0.0
      %1222 = vmatprep.subr.mxu0 0.0
      %1223 = vmatpush1.msra.mxu0 0.0
      %1224 = vmatprep.subr.mxu0 0.0
      %1225 = vmatpush1.msra.mxu0 0.0
      %1226 = vmatprep.subr.mxu0 0.0
      %1227 = vmatpush1.msra.mxu0 0.0
      %1228 = vmatprep.subr.mxu0 0.0
      %1229 = vmatpush1.msra.mxu0 0.0
      %1230 = vmatprep.subr.mxu0 0.0
      %1231 = vmatpush1.msra.mxu0 0.0
      %1232 = vmatprep.subr.mxu0 0.0
      %1233 = vmatpush1.msra.mxu0 0.0
      %1234 = vmatprep.subr.mxu0 0.0
      %1235 = vmatpush1.msra.mxu0 0.0
      %1236 = vmatprep.subr.mxu0 0.0
      %1237 = vmatpush1.msra.mxu0 0.0
      %1238 = vmatprep.subr.mxu0 0.0
      %1239 = vmatpush1.msra.mxu0 0.0
      %1240 = vmatprep.subr.mxu0 0.0
      %1241 = vmatpush1.msra.mxu0 0.0
      %1242 = vmatprep.subr.mxu0 0.0
      %1243 = vmatpush1.msra.mxu0 0.0
      %1244 = vmatprep.subr.mxu0 0.0
      %1245 = vmatpush1.msra.mxu0 0.0
      %1246 = vmatprep.subr.mxu0 0.0
      %1247 = vmatpush1.msra.mxu0 0.0
      %1248 = vmatprep.subr.mxu0 0.0
      %1249 = vmatpush1.msra.mxu0 0.0
      %1250 = vmatprep.subr.mxu0 0.0
      %1251 = vmatpush1.msra.mxu0 0.0
      %1252 = vmatprep.subr.mxu0 0.0
      %1253 = vmatpush1.msra.mxu0 0.0
      %1254 = vmatprep.subr.mxu0 0.0
      %1255 = vmatpush1.msra.mxu0 0.0
      %1256 = vmatprep.mubr.f32.mxu0 0.0
      %v1257 = vand.u32 %v1188, 4294901760
      %v1258 = vsub.f32 %v1188, %v1257
      %v1259 = vand.u32 %v1258, 4294901760
      %v1260 = vsub.f32 %v1258, %v1259
      %v1261 = vand.u32 %v1260, 4294901760
      %1262 = vmatmul.mubr.f32.gmra.mrb[0].mxu0 %v1261
      %v1263 = vpop.f32.mrb[0].mxu0
      %v1264 = vadd.f32 0.0, %v1263
      %v1265 = vpop.f32.mrb[0].mxu0
      %1266 = vdwg.mxu0
      %1267 = vmatprep.subr.mxu0 0.0
      %v1268 = vand.u32 %v1026, 4294901760
      %v1269 = vsub.f32 %v1026, %v1268
      %v1270 = vand.u32 %v1269, 4294901760
      %v1271 = vsub.f32 %v1269, %v1270
      %v1272 = vand.u32 %v1271, 4294901760
      %1273 = vmatpush1.msra.mxu0 %v1272
      %1274 = vmatprep.subr.mxu0 0.0
      %v1275 = vand.u32 %v1027, 4294901760
      %v1276 = vsub.f32 %v1027, %v1275
      %v1277 = vand.u32 %v1276, 4294901760
      %v1278 = vsub.f32 %v1276, %v1277
      %v1279 = vand.u32 %v1278, 4294901760
      %1280 = vmatpush1.msra.mxu0 %v1279
      %1281 = vmatprep.subr.mxu0 0.0
      %1282 = vmatpush1.msra.mxu0 0.0
      %1283 = vmatprep.subr.mxu0 0.0
      %1284 = vmatpush1.msra.mxu0 0.0
      %1285 = vmatprep.subr.mxu0 0.0
      %1286 = vmatpush1.msra.mxu0 0.0
      %1287 = vmatprep.subr.mxu0 0.0
      %1288 = vmatpush1.msra.mxu0 0.0
      %1289 = vmatprep.subr.mxu0 0.0
      %1290 = vmatpush1.msra.mxu0 0.0
      %1291 = vmatprep.subr.mxu0 0.0
      %1292 = vmatpush1.msra.mxu0 0.0
      %1293 = vmatprep.subr.mxu0 0.0
      %1294 = vmatpush1.msra.mxu0 0.0
      %1295 = vmatprep.subr.mxu0 0.0
      %1296 = vmatpush1.msra.mxu0 0.0
      %1297 = vmatprep.subr.mxu0 0.0
      %1298 = vmatpush1.msra.mxu0 0.0
      %1299 = vmatprep.subr.mxu0 0.0
      %1300 = vmatpush1.msra.mxu0 0.0
      %1301 = vmatprep.subr.mxu0 0.0
      %1302 = vmatpush1.msra.mxu0 0.0
      %1303 = vmatprep.subr.mxu0 0.0
      %1304 = vmatpush1.msra.mxu0 0.0
      %1305 = vmatprep.subr.mxu0 0.0
      %1306 = vmatpush1.msra.mxu0 0.0
      %1307 = vmatprep.subr.mxu0 0.0
      %1308 = vmatpush1.msra.mxu0 0.0
      %1309 = vmatprep.subr.mxu0 0.0
      %1310 = vmatpush1.msra.mxu0 0.0
      %1311 = vmatprep.subr.mxu0 0.0
      %1312 = vmatpush1.msra.mxu0 0.0
      %1313 = vmatprep.subr.mxu0 0.0
      %1314 = vmatpush1.msra.mxu0 0.0
      %1315 = vmatprep.subr.mxu0 0.0
      %1316 = vmatpush1.msra.mxu0 0.0
      %1317 = vmatprep.subr.mxu0 0.0
      %1318 = vmatpush1.msra.mxu0 0.0
      %1319 = vmatprep.subr.mxu0 0.0
      %1320 = vmatpush1.msra.mxu0 0.0
      %1321 = vmatprep.subr.mxu0 0.0
      %1322 = vmatpush1.msra.mxu0 0.0
      %1323 = vmatprep.subr.mxu0 0.0
      %1324 = vmatpush1.msra.mxu0 0.0
      %1325 = vmatprep.subr.mxu0 0.0
      %1326 = vmatpush1.msra.mxu0 0.0
      %1327 = vmatprep.subr.mxu0 0.0
      %1328 = vmatpush1.msra.mxu0 0.0
      %1329 = vmatprep.subr.mxu0 0.0
      %1330 = vmatpush1.msra.mxu0 0.0
      %1331 = vmatprep.subr.mxu0 0.0
      %1332 = vmatpush1.msra.mxu0 0.0
      %1333 = vmatprep.subr.mxu0 0.0
      %1334 = vmatpush1.msra.mxu0 0.0
      %1335 = vmatprep.subr.mxu0 0.0
      %1336 = vmatpush1.msra.mxu0 0.0
      %1337 = vmatprep.subr.mxu0 0.0
      %1338 = vmatpush1.msra.mxu0 0.0
      %1339 = vmatprep.subr.mxu0 0.0
      %1340 = vmatpush1.msra.mxu0 0.0
      %1341 = vmatprep.mubr.f32.mxu0 0.0
      %v1342 = vand.u32 %v1188, 4294901760
      %1343 = vmatmul.mubr.f32.gmra.mrb[0].mxu0 %v1342
      %v1344 = vpop.f32.mrb[0].mxu0
      %v1345 = vadd.f32 %v1264, %v1344
      %v1346 = vpop.f32.mrb[0].mxu0
      %1347 = vdwg.mxu0
      %1348 = vmatprep.subr.mxu0 0.0
      %v1349 = vand.u32 %v1026, 4294901760
      %v1350 = vsub.f32 %v1026, %v1349
      %1351 = vmatpush1.msra.mxu0 %v1350
      %1352 = vmatprep.subr.mxu0 0.0
      %v1353 = vand.u32 %v1027, 4294901760
      %v1354 = vsub.f32 %v1027, %v1353
      %1355 = vmatpush1.msra.mxu0 %v1354
      %1356 = vmatprep.subr.mxu0 0.0
      %1357 = vmatpush1.msra.mxu0 0.0
      %1358 = vmatprep.subr.mxu0 0.0
      %1359 = vmatpush1.msra.mxu0 0.0
      %1360 = vmatprep.subr.mxu0 0.0
      %1361 = vmatpush1.msra.mxu0 0.0
      %1362 = vmatprep.subr.mxu0 0.0
      %1363 = vmatpush1.msra.mxu0 0.0
      %1364 = vmatprep.subr.mxu0 0.0
      %1365 = vmatpush1.msra.mxu0 0.0
      %1366 = vmatprep.subr.mxu0 0.0
      %1367 = vmatpush1.msra.mxu0 0.0
      %1368 = vmatprep.subr.mxu0 0.0
      %1369 = vmatpush1.msra.mxu0 0.0
      %1370 = vmatprep.subr.mxu0 0.0
      %1371 = vmatpush1.msra.mxu0 0.0
      %1372 = vmatprep.subr.mxu0 0.0
      %1373 = vmatpush1.msra.mxu0 0.0
      %1374 = vmatprep.subr.mxu0 0.0
      %1375 = vmatpush1.msra.mxu0 0.0
      %1376 = vmatprep.subr.mxu0 0.0
      %1377 = vmatpush1.msra.mxu0 0.0
      %1378 = vmatprep.subr.mxu0 0.0
      %1379 = vmatpush1.msra.mxu0 0.0
      %1380 = vmatprep.subr.mxu0 0.0
      %1381 = vmatpush1.msra.mxu0 0.0
      %1382 = vmatprep.subr.mxu0 0.0
      %1383 = vmatpush1.msra.mxu0 0.0
      %1384 = vmatprep.subr.mxu0 0.0
      %1385 = vmatpush1.msra.mxu0 0.0
      %1386 = vmatprep.subr.mxu0 0.0
      %1387 = vmatpush1.msra.mxu0 0.0
      %1388 = vmatprep.subr.mxu0 0.0
      %1389 = vmatpush1.msra.mxu0 0.0
      %1390 = vmatprep.subr.mxu0 0.0
      %1391 = vmatpush1.msra.mxu0 0.0
      %1392 = vmatprep.subr.mxu0 0.0
      %1393 = vmatpush1.msra.mxu0 0.0
      %1394 = vmatprep.subr.mxu0 0.0
      %1395 = vmatpush1.msra.mxu0 0.0
      %1396 = vmatprep.subr.mxu0 0.0
      %1397 = vmatpush1.msra.mxu0 0.0
      %1398 = vmatprep.subr.mxu0 0.0
      %1399 = vmatpush1.msra.mxu0 0.0
      %1400 = vmatprep.subr.mxu0 0.0
      %1401 = vmatpush1.msra.mxu0 0.0
      %1402 = vmatprep.subr.mxu0 0.0
      %1403 = vmatpush1.msra.mxu0 0.0
      %1404 = vmatprep.subr.mxu0 0.0
      %1405 = vmatpush1.msra.mxu0 0.0
      %1406 = vmatprep.subr.mxu0 0.0
      %1407 = vmatpush1.msra.mxu0 0.0
      %1408 = vmatprep.subr.mxu0 0.0
      %1409 = vmatpush1.msra.mxu0 0.0
      %1410 = vmatprep.subr.mxu0 0.0
      %1411 = vmatpush1.msra.mxu0 0.0
      %1412 = vmatprep.subr.mxu0 0.0
      %1413 = vmatpush1.msra.mxu0 0.0
      %1414 = vmatprep.subr.mxu0 0.0
      %1415 = vmatpush1.msra.mxu0 0.0
      %1416 = vmatprep.mubr.f32.mxu0 0.0
      %v1417 = vand.u32 %v1188, 4294901760
      %v1418 = vsub.f32 %v1188, %v1417
      %1419 = vmatmul.mubr.f32.gmra.mrb[0].mxu0 %v1418
      %v1420 = vpop.f32.mrb[0].mxu0
      %v1421 = vadd.f32 %v1345, %v1420
      %v1422 = vpop.f32.mrb[0].mxu0
      %1423 = vdwg.mxu0
      %1424 = vmatprep.subr.mxu0 0.0
      %v1425 = vand.u32 %v1026, 4294901760
      %1426 = vmatpush1.msra.mxu0 %v1425
      %1427 = vmatprep.subr.mxu0 0.0
      %v1428 = vand.u32 %v1027, 4294901760
      %1429 = vmatpush1.msra.mxu0 %v1428
      %1430 = vmatprep.subr.mxu0 0.0
      %1431 = vmatpush1.msra.mxu0 0.0
      %1432 = vmatprep.subr.mxu0 0.0
      %1433 = vmatpush1.msra.mxu0 0.0
      %1434 = vmatprep.subr.mxu0 0.0
      %1435 = vmatpush1.msra.mxu0 0.0
      %1436 = vmatprep.subr.mxu0 0.0
      %1437 = vmatpush1.msra.mxu0 0.0
      %1438 = vmatprep.subr.mxu0 0.0
      %1439 = vmatpush1.msra.mxu0 0.0
      %1440 = vmatprep.subr.mxu0 0.0
      %1441 = vmatpush1.msra.mxu0 0.0
      %1442 = vmatprep.subr.mxu0 0.0
      %1443 = vmatpush1.msra.mxu0 0.0
      %1444 = vmatprep.subr.mxu0 0.0
      %1445 = vmatpush1.msra.mxu0 0.0
      %1446 = vmatprep.subr.mxu0 0.0
      %1447 = vmatpush1.msra.mxu0 0.0
      %1448 = vmatprep.subr.mxu0 0.0
      %1449 = vmatpush1.msra.mxu0 0.0
      %1450 = vmatprep.subr.mxu0 0.0
      %1451 = vmatpush1.msra.mxu0 0.0
      %1452 = vmatprep.subr.mxu0 0.0
      %1453 = vmatpush1.msra.mxu0 0.0
      %1454 = vmatprep.subr.mxu0 0.0
      %1455 = vmatpush1.msra.mxu0 0.0
      %1456 = vmatprep.subr.mxu0 0.0
      %1457 = vmatpush1.msra.mxu0 0.0
      %1458 = vmatprep.subr.mxu0 0.0
      %1459 = vmatpush1.msra.mxu0 0.0
      %1460 = vmatprep.subr.mxu0 0.0
      %1461 = vmatpush1.msra.mxu0 0.0
      %1462 = vmatprep.subr.mxu0 0.0
      %1463 = vmatpush1.msra.mxu0 0.0
      %1464 = vmatprep.subr.mxu0 0.0
      %1465 = vmatpush1.msra.mxu0 0.0
      %1466 = vmatprep.subr.mxu0 0.0
      %1467 = vmatpush1.msra.mxu0 0.0
      %1468 = vmatprep.subr.mxu0 0.0
      %1469 = vmatpush1.msra.mxu0 0.0
      %1470 = vmatprep.subr.mxu0 0.0
      %1471 = vmatpush1.msra.mxu0 0.0
      %1472 = vmatprep.subr.mxu0 0.0
      %1473 = vmatpush1.msra.mxu0 0.0
      %1474 = vmatprep.subr.mxu0 0.0
      %1475 = vmatpush1.msra.mxu0 0.0
      %1476 = vmatprep.subr.mxu0 0.0
      %1477 = vmatpush1.msra.mxu0 0.0
      %1478 = vmatprep.subr.mxu0 0.0
      %1479 = vmatpush1.msra.mxu0 0.0
      %1480 = vmatprep.subr.mxu0 0.0
      %1481 = vmatpush1.msra.mxu0 0.0
      %1482 = vmatprep.subr.mxu0 0.0
      %1483 = vmatpush1.msra.mxu0 0.0
      %1484 = vmatprep.subr.mxu0 0.0
      %1485 = vmatpush1.msra.mxu0 0.0
      %1486 = vmatprep.subr.mxu0 0.0
      %1487 = vmatpush1.msra.mxu0 0.0
      %1488 = vmatprep.subr.mxu0 0.0
      %1489 = vmatpush1.msra.mxu0 0.0
      %1490 = vmatprep.mubr.f32.mxu0 0.0
      %v1491 = vand.u32 %v1188, 4294901760
      %v1492 = vsub.f32 %v1188, %v1491
      %v1493 = vand.u32 %v1492, 4294901760
      %1494 = vmatmul.mubr.f32.gmra.mrb[0].mxu0 %v1493
      %v1495 = vpop.f32.mrb[0].mxu0
      %v1496 = vadd.f32 %v1421, %v1495
      %v1497 = vpop.f32.mrb[0].mxu0
      %1498 = vdwg.mxu0
      %1499 = vmatprep.subr.mxu0 0.0
      %v1500 = vand.u32 %v1026, 4294901760
      %v1501 = vsub.f32 %v1026, %v1500
      %v1502 = vand.u32 %v1501, 4294901760
      %1503 = vmatpush1.msra.mxu0 %v1502
      %1504 = vmatprep.subr.mxu0 0.0
      %v1505 = vand.u32 %v1027, 4294901760
      %v1506 = vsub.f32 %v1027, %v1505
      %v1507 = vand.u32 %v1506, 4294901760
      %1508 = vmatpush1.msra.mxu0 %v1507
      %1509 = vmatprep.subr.mxu0 0.0
      %1510 = vmatpush1.msra.mxu0 0.0
      %1511 = vmatprep.subr.mxu0 0.0
      %1512 = vmatpush1.msra.mxu0 0.0
      %1513 = vmatprep.subr.mxu0 0.0
      %1514 = vmatpush1.msra.mxu0 0.0
      %1515 = vmatprep.subr.mxu0 0.0
      %1516 = vmatpush1.msra.mxu0 0.0
      %1517 = vmatprep.subr.mxu0 0.0
      %1518 = vmatpush1.msra.mxu0 0.0
      %1519 = vmatprep.subr.mxu0 0.0
      %1520 = vmatpush1.msra.mxu0 0.0
      %1521 = vmatprep.subr.mxu0 0.0
      %1522 = vmatpush1.msra.mxu0 0.0
      %1523 = vmatprep.subr.mxu0 0.0
      %1524 = vmatpush1.msra.mxu0 0.0
      %1525 = vmatprep.subr.mxu0 0.0
      %1526 = vmatpush1.msra.mxu0 0.0
      %1527 = vmatprep.subr.mxu0 0.0
      %1528 = vmatpush1.msra.mxu0 0.0
      %1529 = vmatprep.subr.mxu0 0.0
      %1530 = vmatpush1.msra.mxu0 0.0
      %1531 = vmatprep.subr.mxu0 0.0
      %1532 = vmatpush1.msra.mxu0 0.0
      %1533 = vmatprep.subr.mxu0 0.0
      %1534 = vmatpush1.msra.mxu0 0.0
      %1535 = vmatprep.subr.mxu0 0.0
      %1536 = vmatpush1.msra.mxu0 0.0
      %1537 = vmatprep.subr.mxu0 0.0
      %1538 = vmatpush1.msra.mxu0 0.0
      %1539 = vmatprep.subr.mxu0 0.0
      %1540 = vmatpush1.msra.mxu0 0.0
      %1541 = vmatprep.subr.mxu0 0.0
      %1542 = vmatpush1.msra.mxu0 0.0
      %1543 = vmatprep.subr.mxu0 0.0
      %1544 = vmatpush1.msra.mxu0 0.0
      %1545 = vmatprep.subr.mxu0 0.0
      %1546 = vmatpush1.msra.mxu0 0.0
      %1547 = vmatprep.subr.mxu0 0.0
      %1548 = vmatpush1.msra.mxu0 0.0
      %1549 = vmatprep.subr.mxu0 0.0
      %1550 = vmatpush1.msra.mxu0 0.0
      %1551 = vmatprep.subr.mxu0 0.0
      %1552 = vmatpush1.msra.mxu0 0.0
      %1553 = vmatprep.subr.mxu0 0.0
      %1554 = vmatpush1.msra.mxu0 0.0
      %1555 = vmatprep.subr.mxu0 0.0
      %1556 = vmatpush1.msra.mxu0 0.0
      %1557 = vmatprep.subr.mxu0 0.0
      %1558 = vmatpush1.msra.mxu0 0.0
      %1559 = vmatprep.subr.mxu0 0.0
      %1560 = vmatpush1.msra.mxu0 0.0
      %1561 = vmatprep.subr.mxu0 0.0
      %1562 = vmatpush1.msra.mxu0 0.0
      %1563 = vmatprep.subr.mxu0 0.0
      %1564 = vmatpush1.msra.mxu0 0.0
      %1565 = vmatprep.subr.mxu0 0.0
      %1566 = vmatpush1.msra.mxu0 0.0
      %1567 = vmatprep.subr.mxu0 0.0
      %1568 = vmatpush1.msra.mxu0 0.0
      %1569 = vmatprep.mubr.f32.mxu0 0.0
      %v1570 = vand.u32 %v1188, 4294901760
      %1571 = vmatmul.mubr.f32.gmra.mrb[0].mxu0 %v1570
      %v1572 = vpop.f32.mrb[0].mxu0
      %v1573 = vadd.f32 %v1496, %v1572
      %v1574 = vpop.f32.mrb[0].mxu0
      %1575 = vdwg.mxu0
      %1576 = vmatprep.subr.mxu0 0.0
      %v1577 = vand.u32 %v1026, 4294901760
      %1578 = vmatpush1.msra.mxu0 %v1577
      %1579 = vmatprep.subr.mxu0 0.0
      %v1580 = vand.u32 %v1027, 4294901760
      %1581 = vmatpush1.msra.mxu0 %v1580
      %1582 = vmatprep.subr.mxu0 0.0
      %1583 = vmatpush1.msra.mxu0 0.0
      %1584 = vmatprep.subr.mxu0 0.0
      %1585 = vmatpush1.msra.mxu0 0.0
      %1586 = vmatprep.subr.mxu0 0.0
      %1587 = vmatpush1.msra.mxu0 0.0
      %1588 = vmatprep.subr.mxu0 0.0
      %1589 = vmatpush1.msra.mxu0 0.0
      %1590 = vmatprep.subr.mxu0 0.0
      %1591 = vmatpush1.msra.mxu0 0.0
      %1592 = vmatprep.subr.mxu0 0.0
      %1593 = vmatpush1.msra.mxu0 0.0
      %1594 = vmatprep.subr.mxu0 0.0
      %1595 = vmatpush1.msra.mxu0 0.0
      %1596 = vmatprep.subr.mxu0 0.0
      %1597 = vmatpush1.msra.mxu0 0.0
      %1598 = vmatprep.subr.mxu0 0.0
      %1599 = vmatpush1.msra.mxu0 0.0
      %1600 = vmatprep.subr.mxu0 0.0
      %1601 = vmatpush1.msra.mxu0 0.0
      %1602 = vmatprep.subr.mxu0 0.0
      %1603 = vmatpush1.msra.mxu0 0.0
      %1604 = vmatprep.subr.mxu0 0.0
      %1605 = vmatpush1.msra.mxu0 0.0
      %1606 = vmatprep.subr.mxu0 0.0
      %1607 = vmatpush1.msra.mxu0 0.0
      %1608 = vmatprep.subr.mxu0 0.0
      %1609 = vmatpush1.msra.mxu0 0.0
      %1610 = vmatprep.subr.mxu0 0.0
      %1611 = vmatpush1.msra.mxu0 0.0
      %1612 = vmatprep.subr.mxu0 0.0
      %1613 = vmatpush1.msra.mxu0 0.0
      %1614 = vmatprep.subr.mxu0 0.0
      %1615 = vmatpush1.msra.mxu0 0.0
      %1616 = vmatprep.subr.mxu0 0.0
      %1617 = vmatpush1.msra.mxu0 0.0
      %1618 = vmatprep.subr.mxu0 0.0
      %1619 = vmatpush1.msra.mxu0 0.0
      %1620 = vmatprep.subr.mxu0 0.0
      %1621 = vmatpush1.msra.mxu0 0.0
      %1622 = vmatprep.subr.mxu0 0.0
      %1623 = vmatpush1.msra.mxu0 0.0
      %1624 = vmatprep.subr.mxu0 0.0
      %1625 = vmatpush1.msra.mxu0 0.0
      %1626 = vmatprep.subr.mxu0 0.0
      %1627 = vmatpush1.msra.mxu0 0.0
      %1628 = vmatprep.subr.mxu0 0.0
      %1629 = vmatpush1.msra.mxu0 0.0
      %1630 = vmatprep.subr.mxu0 0.0
      %1631 = vmatpush1.msra.mxu0 0.0
      %1632 = vmatprep.subr.mxu0 0.0
      %1633 = vmatpush1.msra.mxu0 0.0
      %1634 = vmatprep.subr.mxu0 0.0
      %1635 = vmatpush1.msra.mxu0 0.0
      %1636 = vmatprep.subr.mxu0 0.0
      %1637 = vmatpush1.msra.mxu0 0.0
      %1638 = vmatprep.subr.mxu0 0.0
      %1639 = vmatpush1.msra.mxu0 0.0
      %1640 = vmatprep.subr.mxu0 0.0
      %1641 = vmatpush1.msra.mxu0 0.0
      %1642 = vmatprep.mubr.f32.mxu0 0.0
      %v1643 = vand.u32 %v1188, 4294901760
      %1644 = vmatmul.mubr.f32.gmra.mrb[0].mxu0 %v1643
      %v1645 = vpop.f32.mrb[0].mxu0
      %v1646 = vadd.f32 %v1573, %v1645
      %v1647 = vpop.f32.mrb[0].mxu0
      %1648 = vdwg.mxu0
      %v1649 = vld [vmem:[%s19] sm:$0xff]
      %v1650 = vld [vmem:[%s19 + $0x8] sm:$0xff]
      %v1651 = vld [vmem:[%s19 + $0x10] sm:$0xff]
      %v1652 = vld [vmem:[%s19 + $0x18] sm:$0xff]
      %v1653 = vld [vmem:[%s19 + $0x20] sm:$0xff]
      %v1654 = vld [vmem:[%s19 + $0x28] sm:$0xff]
      %v1655 = vld [vmem:[%s19 + $0x30] sm:$0xff]
      %v1656 = vld [vmem:[%s19 + $0x38] sm:$0xff]
      %v1657 = vld [vmem:[%s21] sm:$0x3]
      %v1658 = vld [vmem:[%s23] sm:$0xf]
      %v1659 = vld [vmem:[%s23 + $0x4] sm:$0xf]
      %v1660 = vld [vmem:[%s23 + $0x8] sm:$0xf]
      %v1661 = vld [vmem:[%s23 + $0xc] sm:$0xf]
      %v1662 = vld [vmem:[%s23 + $0x10] sm:$0xf]
      %v1663 = vld [vmem:[%s23 + $0x14] sm:$0xf]
      %v1664 = vld [vmem:[%s23 + $0x18] sm:$0xf]
      %v1665 = vld [vmem:[%s23 + $0x1c] sm:$0xf]
      %v1666 = vld [vmem:[%s23 + $0x20] sm:$0xf]
      %v1667 = vld [vmem:[%s23 + $0x24] sm:$0xf]
      %v1668 = vld [vmem:[%s23 + $0x28] sm:$0xf]
      %v1669 = vld [vmem:[%s23 + $0x2c] sm:$0xf]
      %v1670 = vld [vmem:[%s23 + $0x30] sm:$0xf]
      %v1671 = vld [vmem:[%s23 + $0x34] sm:$0xf]
      %v1672 = vld [vmem:[%s23 + $0x38] sm:$0xf]
      %v1673 = vld [vmem:[%s23 + $0x3c] sm:$0xf]
      %v1674 = vld [vmem:[%s23 + $0x40] sm:$0xf]
      %v1675 = vld [vmem:[%s23 + $0x44] sm:$0xf]
      %v1676 = vld [vmem:[%s23 + $0x48] sm:$0xf]
      %v1677 = vld [vmem:[%s23 + $0x4c] sm:$0xf]
      %v1678 = vld [vmem:[%s23 + $0x50] sm:$0xf]
      %v1679 = vld [vmem:[%s23 + $0x54] sm:$0xf]
      %v1680 = vld [vmem:[%s23 + $0x58] sm:$0xf]
      %v1681 = vld [vmem:[%s23 + $0x5c] sm:$0xf]
      %v1682 = vld [vmem:[%s23 + $0x60] sm:$0xf]
      %v1683 = vld [vmem:[%s23 + $0x64] sm:$0xf]
      %v1684 = vld [vmem:[%s23 + $0x68] sm:$0xf]
      %v1685 = vld [vmem:[%s23 + $0x6c] sm:$0xf]
      %v1686 = vld [vmem:[%s23 + $0x70] sm:$0xf]
      %v1687 = vld [vmem:[%s23 + $0x74] sm:$0xf]
      %v1688 = vld [vmem:[%s23 + $0x78] sm:$0xf]
      %v1689 = vld [vmem:[%s23 + $0x7c] sm:$0xf]
      %v1690 = vld [vmem:[#allocation2] sm:$0x1]
      %v1691 = vpack.c.bf16 %v1646, %v1646
      %v1693 = vlaneseq
      %v1694 = vshrl.u32 %v1693, 7
      %v1695 = vsub.s32 0, %v1694
      %v1696 = vrot.slane %v1657, %v1695
      %v1697 = vlaneseq
      %v1698 = vshrl.u32 %v1697, 7
      %v1699 = vsub.s32 1, %v1698
      %v1700 = vrot.slane %v1657, %v1699
      %v1711 = vunpack.c.l.b16 %v1649
      %v1712 = vunpack.c.h.b16 %v1649
      %v1713 = vunpack.c.l.b16 %v1650
      %v1714 = vunpack.c.h.b16 %v1650
      %v1715 = vunpack.c.l.b16 %v1651
      %v1716 = vunpack.c.h.b16 %v1651
      %v1717 = vunpack.c.l.b16 %v1652
      %v1718 = vunpack.c.h.b16 %v1652
      %v1719 = vunpack.c.l.b16 %v1653
      %v1720 = vunpack.c.h.b16 %v1653
      %v1721 = vunpack.c.l.b16 %v1654
      %v1722 = vunpack.c.h.b16 %v1654
      %v1723 = vunpack.c.l.b16 %v1655
      %v1724 = vunpack.c.h.b16 %v1655
      %v1725 = vunpack.c.l.b16 %v1656
      %v1726 = vunpack.c.h.b16 %v1656
      %v1727 = vpack.c.b16 %v1713, %v1711
      %v1728 = vpack.c.b16 %v1714, %v1712
      %v1729 = vpack.c.b16 %v1717, %v1715
      %v1730 = vpack.c.b16 %v1718, %v1716
      %v1731 = vpack.c.b16 %v1721, %v1719
      %v1732 = vpack.c.b16 %v1722, %v1720
      %v1733 = vpack.c.b16 %v1725, %v1723
      %v1734 = vpack.c.b16 %v1726, %v1724
      %v1744 = vsel %vm1075, %v1691, 0
      %1746 = vmatprep.subr.bf16.mxu0 %v1728
      %1747 = vmatpush1.bf16.msra.mxu0 %v1727
      %1748 = vmatprep.subr.bf16.mxu0 %v1730
      %1749 = vmatpush1.bf16.msra.mxu0 %v1729
      %1750 = vmatprep.subr.bf16.mxu0 %v1732
      %1751 = vmatpush1.bf16.msra.mxu0 %v1731
      %1752 = vmatprep.subr.bf16.mxu0 %v1734
      %1753 = vmatpush1.bf16.msra.mxu0 %v1733
      %1754 = vmatprep.subr.bf16.mxu0 0
      %1755 = vmatpush1.bf16.msra.mxu0 0
      %1756 = vmatprep.subr.bf16.mxu0 0
      %1757 = vmatpush1.bf16.msra.mxu0 0
      %1758 = vmatprep.subr.bf16.mxu0 0
      %1759 = vmatpush1.bf16.msra.mxu0 0
      %1760 = vmatprep.subr.bf16.mxu0 0
      %1761 = vmatpush1.bf16.msra.mxu0 0
      %1762 = vmatprep.subr.bf16.mxu0 0
      %1763 = vmatpush1.bf16.msra.mxu0 0
      %1764 = vmatprep.subr.bf16.mxu0 0
      %1765 = vmatpush1.bf16.msra.mxu0 0
      %1766 = vmatprep.subr.bf16.mxu0 0
      %1767 = vmatpush1.bf16.msra.mxu0 0
      %1768 = vmatprep.subr.bf16.mxu0 0
      %1769 = vmatpush1.bf16.msra.mxu0 0
      %1770 = vmatprep.subr.bf16.mxu0 0
      %1771 = vmatpush1.bf16.msra.mxu0 0
      %1772 = vmatprep.subr.bf16.mxu0 0
      %1773 = vmatpush1.bf16.msra.mxu0 0
      %1774 = vmatprep.subr.bf16.mxu0 0
      %1775 = vmatpush1.bf16.msra.mxu0 0
      %1776 = vmatprep.subr.bf16.mxu0 0
      %1777 = vmatpush1.bf16.msra.mxu0 0
      %1778 = vmatprep.mubr.bf16.mxu0 0
      %1779 = vmatmul.mubr.bf16.gmra.mrb[0].mxu0 %v1744
      %v1780 = vpop.f32.mrb[0].mxu0
      %v1781 = vadd.f32 %v1696, %v1780
      %v1782 = vpop.f32.mrb[0].mxu0
      %v1783 = vadd.f32 %v1700, %v1782
      %v1784 = vpop.f32.mrb[0].mxu0
      %v1785 = vpop.f32.mrb[0].mxu0
      %1786 = vdwg.mxu0
      %vm1787 = vcmp.gt.f32.partialorder %v1781, 0.0
      %vm1788 = vcmp.gt.f32.partialorder %v1783, 0.0
      %v1789 = vmul.f32 %v1781, 0.2
      %v1790 = vmul.f32 %v1783, 0.2
      %v1791 = vsel %vm1787, %v1781, %v1789
      %v1792 = vsel %vm1788, %v1783, %v1790
      %v1793 = vpack.c.bf16 %v1791, %v1791
      %v1794 = vpack.c.bf16 %v1792, %v1792
      %v1796 = vlaneseq
      %v1797 = vshrl.u32 %v1796, 7
      %v1798 = vsub.s32 0, %v1797
      %v1799 = vrot.slane %v1690, %v1798
      %v1833 = vunpack.c.l.b16 %v1658
      %v1834 = vunpack.c.l.b16 %v1659
      %v1835 = vunpack.c.l.b16 %v1660
      %v1836 = vunpack.c.l.b16 %v1661
      %v1837 = vunpack.c.l.b16 %v1662
      %v1838 = vunpack.c.l.b16 %v1663
      %v1839 = vunpack.c.l.b16 %v1664
      %v1840 = vunpack.c.l.b16 %v1665
      %v1841 = vunpack.c.l.b16 %v1666
      %v1842 = vunpack.c.l.b16 %v1667
      %v1843 = vunpack.c.l.b16 %v1668
      %v1844 = vunpack.c.l.b16 %v1669
      %v1845 = vunpack.c.l.b16 %v1670
      %v1846 = vunpack.c.l.b16 %v1671
      %v1847 = vunpack.c.l.b16 %v1672
      %v1848 = vunpack.c.l.b16 %v1673
      %v1849 = vunpack.c.l.b16 %v1674
      %v1850 = vunpack.c.l.b16 %v1675
      %v1851 = vunpack.c.l.b16 %v1676
      %v1852 = vunpack.c.l.b16 %v1677
      %v1853 = vunpack.c.l.b16 %v1678
      %v1854 = vunpack.c.l.b16 %v1679
      %v1855 = vunpack.c.l.b16 %v1680
      %v1856 = vunpack.c.l.b16 %v1681
      %v1857 = vunpack.c.l.b16 %v1682
      %v1858 = vunpack.c.l.b16 %v1683
      %v1859 = vunpack.c.l.b16 %v1684
      %v1860 = vunpack.c.l.b16 %v1685
      %v1861 = vunpack.c.l.b16 %v1686
      %v1862 = vunpack.c.l.b16 %v1687
      %v1863 = vunpack.c.l.b16 %v1688
      %v1864 = vunpack.c.l.b16 %v1689
      %v1865 = vpack.c.b16 %v1834, %v1833
      %v1866 = vpack.c.b16 %v1836, %v1835
      %v1867 = vpack.c.b16 %v1838, %v1837
      %v1868 = vpack.c.b16 %v1840, %v1839
      %v1869 = vpack.c.b16 %v1842, %v1841
      %v1870 = vpack.c.b16 %v1844, %v1843
      %v1871 = vpack.c.b16 %v1846, %v1845
      %v1872 = vpack.c.b16 %v1848, %v1847
      %v1873 = vpack.c.b16 %v1850, %v1849
      %v1874 = vpack.c.b16 %v1852, %v1851
      %v1875 = vpack.c.b16 %v1854, %v1853
      %v1876 = vpack.c.b16 %v1856, %v1855
      %v1877 = vpack.c.b16 %v1858, %v1857
      %v1878 = vpack.c.b16 %v1860, %v1859
      %v1879 = vpack.c.b16 %v1862, %v1861
      %v1880 = vpack.c.b16 %v1864, %v1863
      %1897 = vmatprep.subr.bf16.mxu0 0
      %1898 = vmatpush1.bf16.msra.mxu0 %v1865
      %1899 = vmatprep.subr.bf16.mxu0 0
      %1900 = vmatpush1.bf16.msra.mxu0 %v1866
      %1901 = vmatprep.subr.bf16.mxu0 0
      %1902 = vmatpush1.bf16.msra.mxu0 %v1867
      %1903 = vmatprep.subr.bf16.mxu0 0
      %1904 = vmatpush1.bf16.msra.mxu0 %v1868
      %1905 = vmatprep.subr.bf16.mxu0 0
      %1906 = vmatpush1.bf16.msra.mxu0 %v1869
      %1907 = vmatprep.subr.bf16.mxu0 0
      %1908 = vmatpush1.bf16.msra.mxu0 %v1870
      %1909 = vmatprep.subr.bf16.mxu0 0
      %1910 = vmatpush1.bf16.msra.mxu0 %v1871
      %1911 = vmatprep.subr.bf16.mxu0 0
      %1912 = vmatpush1.bf16.msra.mxu0 %v1872
      %1913 = vmatprep.subr.bf16.mxu0 0
      %1914 = vmatpush1.bf16.msra.mxu0 %v1873
      %1915 = vmatprep.subr.bf16.mxu0 0
      %1916 = vmatpush1.bf16.msra.mxu0 %v1874
      %1917 = vmatprep.subr.bf16.mxu0 0
      %1918 = vmatpush1.bf16.msra.mxu0 %v1875
      %1919 = vmatprep.subr.bf16.mxu0 0
      %1920 = vmatpush1.bf16.msra.mxu0 %v1876
      %1921 = vmatprep.subr.bf16.mxu0 0
      %1922 = vmatpush1.bf16.msra.mxu0 %v1877
      %1923 = vmatprep.subr.bf16.mxu0 0
      %1924 = vmatpush1.bf16.msra.mxu0 %v1878
      %1925 = vmatprep.subr.bf16.mxu0 0
      %1926 = vmatpush1.bf16.msra.mxu0 %v1879
      %1927 = vmatprep.subr.bf16.mxu0 0
      %1928 = vmatpush1.bf16.msra.mxu0 %v1880
      %1929 = vmatprep.mubr.bf16.mxu0 %v1794
      %1930 = vmatmul.mubr.bf16.gmra.mrb[0].mxu0 %v1793
      %v1931 = vpop.f32.mrb[0].mxu0
      %v1932 = vadd.f32 %v1799, %v1931
      %v1933 = vpop.f32.mrb[0].mxu0
      %v1934 = vpop.f32.mrb[0].mxu0
      %v1935 = vpop.f32.mrb[0].mxu0
      %1936 = vdwg.mxu0
      %v1937 = vld [vmem:[%s27] sm:$0xff]
      %v1938 = vld [vmem:[%s27 + $0x8] sm:$0xff]
      %v1939 = vld [vmem:[%s27 + $0x10] sm:$0xff]
      %v1940 = vld [vmem:[%s27 + $0x18] sm:$0xff]
      %v1941 = vld [vmem:[%s27 + $0x20] sm:$0xff]
      %v1942 = vld [vmem:[%s27 + $0x28] sm:$0xff]
      %v1943 = vld [vmem:[%s27 + $0x30] sm:$0xff]
      %v1944 = vld [vmem:[%s27 + $0x38] sm:$0xff]
      %v1945 = vld [vmem:[%s27 + $0x40] sm:$0xff]
      %v1946 = vld [vmem:[%s27 + $0x48] sm:$0xff]
      %v1947 = vld [vmem:[%s27 + $0x50] sm:$0xff]
      %v1948 = vld [vmem:[%s27 + $0x58] sm:$0xff]
      %v1949 = vld [vmem:[%s27 + $0x60] sm:$0xff]
      %v1950 = vld [vmem:[%s27 + $0x68] sm:$0xff]
      %v1951 = vld [vmem:[%s27 + $0x70] sm:$0xff]
      %v1952 = vld [vmem:[%s27 + $0x78] sm:$0xff]
      %v1953 = vld [vmem:[%s27 + $0x80] sm:$0xff]
      %v1954 = vld [vmem:[%s27 + $0x88] sm:$0xff]
      %v1955 = vld [vmem:[%s27 + $0x90] sm:$0xff]
      %v1956 = vld [vmem:[%s27 + $0x98] sm:$0xff]
      %v1957 = vld [vmem:[%s27 + $0xa0] sm:$0xff]
      %v1958 = vld [vmem:[%s27 + $0xa8] sm:$0xff]
      %v1959 = vld [vmem:[%s27 + $0xb0] sm:$0xff]
      %v1960 = vld [vmem:[%s27 + $0xb8] sm:$0xff]
      %v1961 = vld [vmem:[%s27 + $0xc0] sm:$0xff]
      %v1962 = vld [vmem:[%s27 + $0xc8] sm:$0xff]
      %v1963 = vld [vmem:[%s27 + $0xd0] sm:$0xff]
      %v1964 = vld [vmem:[%s27 + $0xd8] sm:$0xff]
      %v1965 = vld [vmem:[%s27 + $0xe0] sm:$0xff]
      %v1966 = vld [vmem:[%s27 + $0xe8] sm:$0xff]
      %v1967 = vld [vmem:[%s27 + $0xf0] sm:$0xff]
      %v1968 = vld [vmem:[%s27 + $0xf8] sm:$0xff]
      %v1969 = vld [vmem:[%s27 + $0x100] sm:$0xff]
      %v1970 = vld [vmem:[%s27 + $0x108] sm:$0xff]
      %v1971 = vld [vmem:[%s27 + $0x110] sm:$0xff]
      %v1972 = vld [vmem:[%s27 + $0x118] sm:$0xff]
      %v1973 = vld [vmem:[%s27 + $0x120] sm:$0xff]
      %v1974 = vld [vmem:[%s27 + $0x128] sm:$0xff]
      %v1975 = vld [vmem:[%s27 + $0x130] sm:$0xff]
      %v1976 = vld [vmem:[%s27 + $0x138] sm:$0xff]
      %v1977 = vld [vmem:[%s27 + $0x140] sm:$0xff]
      %v1978 = vld [vmem:[%s27 + $0x148] sm:$0xff]
      %v1979 = vld [vmem:[%s27 + $0x150] sm:$0xff]
      %v1980 = vld [vmem:[%s27 + $0x158] sm:$0xff]
      %v1981 = vld [vmem:[%s27 + $0x160] sm:$0xff]
      %v1982 = vld [vmem:[%s27 + $0x168] sm:$0xff]
      %v1983 = vld [vmem:[%s27 + $0x170] sm:$0xff]
      %v1984 = vld [vmem:[%s27 + $0x178] sm:$0xff]
      %v1985 = vld [vmem:[%s27 + $0x180] sm:$0xff]
      %v1986 = vld [vmem:[%s27 + $0x188] sm:$0xff]
      %v1987 = vld [vmem:[%s27 + $0x190] sm:$0xff]
      %v1988 = vld [vmem:[%s27 + $0x198] sm:$0xff]
      %v1989 = vld [vmem:[%s27 + $0x1a0] sm:$0xff]
      %v1990 = vld [vmem:[%s27 + $0x1a8] sm:$0xff]
      %v1991 = vld [vmem:[%s27 + $0x1b0] sm:$0xff]
      %v1992 = vld [vmem:[%s27 + $0x1b8] sm:$0xff]
      %v1993 = vld [vmem:[%s27 + $0x1c0] sm:$0xff]
      %v1994 = vld [vmem:[%s27 + $0x1c8] sm:$0xff]
      %v1995 = vld [vmem:[%s27 + $0x1d0] sm:$0xff]
      %v1996 = vld [vmem:[%s27 + $0x1d8] sm:$0xff]
      %v1997 = vld [vmem:[%s27 + $0x1e0] sm:$0xff]
      %v1998 = vld [vmem:[%s27 + $0x1e8] sm:$0xff]
      %v1999 = vld [vmem:[%s27 + $0x1f0] sm:$0xff]
      %v2000 = vld [vmem:[%s27 + $0x1f8] sm:$0xff]
      %v2001 = vld [vmem:[%s27 + $0x200] sm:$0xff]
      %v2002 = vld [vmem:[%s27 + $0x208] sm:$0xff]
      %v2003 = vld [vmem:[%s27 + $0x210] sm:$0xff]
      %v2004 = vld [vmem:[%s27 + $0x218] sm:$0xff]
      %v2005 = vld [vmem:[%s27 + $0x220] sm:$0xff]
      %v2006 = vld [vmem:[%s27 + $0x228] sm:$0xff]
      %v2007 = vld [vmem:[%s27 + $0x230] sm:$0xff]
      %v2008 = vld [vmem:[%s27 + $0x238] sm:$0xff]
      %v2009 = vld [vmem:[%s27 + $0x240] sm:$0xff]
      %v2010 = vld [vmem:[%s27 + $0x248] sm:$0xff]
      %v2011 = vld [vmem:[%s27 + $0x250] sm:$0xff]
      %v2012 = vld [vmem:[%s27 + $0x258] sm:$0xff]
      %v2013 = vld [vmem:[%s27 + $0x260] sm:$0xff]
      %v2014 = vld [vmem:[%s27 + $0x268] sm:$0xff]
      %v2015 = vld [vmem:[%s27 + $0x270] sm:$0xff]
      %v2016 = vld [vmem:[%s27 + $0x278] sm:$0xff]
      %v2017 = vld [vmem:[%s27 + $0x280] sm:$0xff]
      %v2018 = vld [vmem:[%s27 + $0x288] sm:$0xff]
      %v2019 = vld [vmem:[%s27 + $0x290] sm:$0xff]
      %v2020 = vld [vmem:[%s27 + $0x298] sm:$0xff]
      %v2021 = vld [vmem:[%s27 + $0x2a0] sm:$0xff]
      %v2022 = vld [vmem:[%s27 + $0x2a8] sm:$0xff]
      %v2023 = vld [vmem:[%s27 + $0x2b0] sm:$0xff]
      %v2024 = vld [vmem:[%s27 + $0x2b8] sm:$0xff]
      %v2025 = vld [vmem:[%s27 + $0x2c0] sm:$0xff]
      %v2026 = vld [vmem:[%s27 + $0x2c8] sm:$0xff]
      %v2027 = vld [vmem:[%s27 + $0x2d0] sm:$0xff]
      %v2028 = vld [vmem:[%s27 + $0x2d8] sm:$0xff]
      %v2029 = vld [vmem:[%s27 + $0x2e0] sm:$0xff]
      %v2030 = vld [vmem:[%s27 + $0x2e8] sm:$0xff]
      %v2031 = vld [vmem:[%s27 + $0x2f0] sm:$0xff]
      %v2032 = vld [vmem:[%s27 + $0x2f8] sm:$0xff]
      %v2033 = vld [vmem:[%s27 + $0x300] sm:$0xff]
      %v2034 = vld [vmem:[%s27 + $0x308] sm:$0xff]
      %v2035 = vld [vmem:[%s27 + $0x310] sm:$0xff]
      %v2036 = vld [vmem:[%s27 + $0x318] sm:$0xff]
      %v2037 = vld [vmem:[%s27 + $0x320] sm:$0xff]
      %v2038 = vld [vmem:[%s27 + $0x328] sm:$0xff]
      %v2039 = vld [vmem:[%s27 + $0x330] sm:$0xff]
      %v2040 = vld [vmem:[%s27 + $0x338] sm:$0xff]
      %v2041 = vld [vmem:[%s27 + $0x340] sm:$0xff]
      %v2042 = vld [vmem:[%s27 + $0x348] sm:$0xff]
      %v2043 = vld [vmem:[%s27 + $0x350] sm:$0xff]
      %v2044 = vld [vmem:[%s27 + $0x358] sm:$0xff]
      %v2045 = vld [vmem:[%s27 + $0x360] sm:$0xff]
      %v2046 = vld [vmem:[%s27 + $0x368] sm:$0xff]
      %v2047 = vld [vmem:[%s27 + $0x370] sm:$0xff]
      %v2048 = vld [vmem:[%s27 + $0x378] sm:$0xff]
      %v2049 = vld [vmem:[%s27 + $0x380] sm:$0xff]
      %v2050 = vld [vmem:[%s27 + $0x388] sm:$0xff]
      %v2051 = vld [vmem:[%s27 + $0x390] sm:$0xff]
      %v2052 = vld [vmem:[%s27 + $0x398] sm:$0xff]
      %v2053 = vld [vmem:[%s27 + $0x3a0] sm:$0xff]
      %v2054 = vld [vmem:[%s27 + $0x3a8] sm:$0xff]
      %v2055 = vld [vmem:[%s27 + $0x3b0] sm:$0xff]
      %v2056 = vld [vmem:[%s27 + $0x3b8] sm:$0xff]
      %v2057 = vld [vmem:[%s27 + $0x3c0] sm:$0xff]
      %v2058 = vld [vmem:[%s27 + $0x3c8] sm:$0xff]
      %v2059 = vld [vmem:[%s27 + $0x3d0] sm:$0xff]
      %v2060 = vld [vmem:[%s27 + $0x3d8] sm:$0xff]
      %v2061 = vld [vmem:[%s27 + $0x3e0] sm:$0xff]
      %v2062 = vld [vmem:[%s27 + $0x3e8] sm:$0xff]
      %v2063 = vld [vmem:[%s27 + $0x3f0] sm:$0xff]
      %v2064 = vld [vmem:[%s27 + $0x3f8] sm:$0xff]
      %v2065 = vld [vmem:[%s31] sm:$0xf]
      %v2066 = vld [vmem:[%s31 + $0x4] sm:$0xf]
      %v2067 = vld [vmem:[%s31 + $0x8] sm:$0xf]
      %v2068 = vld [vmem:[%s31 + $0xc] sm:$0xf]
      %v2069 = vld [vmem:[%s31 + $0x10] sm:$0xf]
      %v2070 = vld [vmem:[%s31 + $0x14] sm:$0xf]
      %v2071 = vld [vmem:[%s31 + $0x18] sm:$0xf]
      %v2072 = vld [vmem:[%s31 + $0x1c] sm:$0xf]
      %v2073 = vld [vmem:[%s31 + $0x20] sm:$0xf]
      %v2074 = vld [vmem:[%s31 + $0x24] sm:$0xf]
      %v2075 = vld [vmem:[%s31 + $0x28] sm:$0xf]
      %v2076 = vld [vmem:[%s31 + $0x2c] sm:$0xf]
      %v2077 = vld [vmem:[%s31 + $0x30] sm:$0xf]
      %v2078 = vld [vmem:[%s31 + $0x34] sm:$0xf]
      %v2079 = vld [vmem:[%s31 + $0x38] sm:$0xf]
      %v2080 = vld [vmem:[%s31 + $0x3c] sm:$0xf]
      %v2081 = vld [vmem:[%s31 + $0x40] sm:$0xf]
      %v2082 = vld [vmem:[%s31 + $0x44] sm:$0xf]
      %v2083 = vld [vmem:[%s31 + $0x48] sm:$0xf]
      %v2084 = vld [vmem:[%s31 + $0x4c] sm:$0xf]
      %v2085 = vld [vmem:[%s31 + $0x50] sm:$0xf]
      %v2086 = vld [vmem:[%s31 + $0x54] sm:$0xf]
      %v2087 = vld [vmem:[%s31 + $0x58] sm:$0xf]
      %v2088 = vld [vmem:[%s31 + $0x5c] sm:$0xf]
      %v2089 = vld [vmem:[%s31 + $0x60] sm:$0xf]
      %v2090 = vld [vmem:[%s31 + $0x64] sm:$0xf]
      %v2091 = vld [vmem:[%s31 + $0x68] sm:$0xf]
      %v2092 = vld [vmem:[%s31 + $0x6c] sm:$0xf]
      %v2093 = vld [vmem:[%s31 + $0x70] sm:$0xf]
      %v2094 = vld [vmem:[%s31 + $0x74] sm:$0xf]
      %v2095 = vld [vmem:[%s31 + $0x78] sm:$0xf]
      %v2096 = vld [vmem:[%s31 + $0x7c] sm:$0xf]
      %v2097 = vld [vmem:[%s31 + $0x80] sm:$0xf]
      %v2098 = vld [vmem:[%s31 + $0x84] sm:$0xf]
      %v2099 = vld [vmem:[%s31 + $0x88] sm:$0xf]
      %v2100 = vld [vmem:[%s31 + $0x8c] sm:$0xf]
      %v2101 = vld [vmem:[%s31 + $0x90] sm:$0xf]
      %v2102 = vld [vmem:[%s31 + $0x94] sm:$0xf]
      %v2103 = vld [vmem:[%s31 + $0x98] sm:$0xf]
      %v2104 = vld [vmem:[%s31 + $0x9c] sm:$0xf]
      %v2105 = vld [vmem:[%s31 + $0xa0] sm:$0xf]
      %v2106 = vld [vmem:[%s31 + $0xa4] sm:$0xf]
      %v2107 = vld [vmem:[%s31 + $0xa8] sm:$0xf]
      %v2108 = vld [vmem:[%s31 + $0xac] sm:$0xf]
      %v2109 = vld [vmem:[%s31 + $0xb0] sm:$0xf]
      %v2110 = vld [vmem:[%s31 + $0xb4] sm:$0xf]
      %v2111 = vld [vmem:[%s31 + $0xb8] sm:$0xf]
      %v2112 = vld [vmem:[%s31 + $0xbc] sm:$0xf]
      %v2113 = vld [vmem:[%s31 + $0xc0] sm:$0xf]
      %v2114 = vld [vmem:[%s31 + $0xc4] sm:$0xf]
      %v2115 = vld [vmem:[%s31 + $0xc8] sm:$0xf]
      %v2116 = vld [vmem:[%s31 + $0xcc] sm:$0xf]
      %v2117 = vld [vmem:[%s31 + $0xd0] sm:$0xf]
      %v2118 = vld [vmem:[%s31 + $0xd4] sm:$0xf]
      %v2119 = vld [vmem:[%s31 + $0xd8] sm:$0xf]
      %v2120 = vld [vmem:[%s31 + $0xdc] sm:$0xf]
      %v2121 = vld [vmem:[%s31 + $0xe0] sm:$0xf]
      %v2122 = vld [vmem:[%s31 + $0xe4] sm:$0xf]
      %v2123 = vld [vmem:[%s31 + $0xe8] sm:$0xf]
      %v2124 = vld [vmem:[%s31 + $0xec] sm:$0xf]
      %v2125 = vld [vmem:[%s31 + $0xf0] sm:$0xf]
      %v2126 = vld [vmem:[%s31 + $0xf4] sm:$0xf]
      %v2127 = vld [vmem:[%s31 + $0xf8] sm:$0xf]
      %v2128 = vld [vmem:[%s31 + $0xfc] sm:$0xf]
      %v2130 = vcombine.high %v1028, %v1028
      %v2132 = vunpack.c.l.s4 1983009808
      %v2133 = vunpack.c.0.s8 %v2132
      %v2134 = vlaneseq
      %v2135 = vshrl.u32 %v2134, 7
      %v2136 = vsub.s32 %v2133, %v2135
      %v2137 = vrot.slane %v1028, %v2136
      %v2139 = vunpack.c.l.s4 1983009808
      %v2140 = vunpack.c.0.s8 %v2139
      %v2141 = vlaneseq
      %v2142 = vshrl.u32 %v2141, 7
      %v2143 = vsub.s32 %v2140, %v2142
      %v2144 = vrot.slane %v2130, %v2143
      %v2145 = vcombine.high %v2137, %v2137
      %v2146 = vcombine.high %v2144, %v2144
      %v2151 = vpack.c.bf16 %v2137, %v2137
      %v2152 = vpack.c.bf16 %v2145, %v2145
      %v2153 = vpack.c.bf16 %v2144, %v2144
      %v2154 = vpack.c.bf16 %v2146, %v2146
      %v2155 = vld [vmem:[%s29] sm:$0xf]
      %v2157 = vlaneseq
      %v2158 = vshrl.u32 %v2157, 7
      %v2159 = vsub.s32 0, %v2158
      %v2160 = vrot.slane %v2155, %v2159
      %v2161 = vlaneseq
      %v2162 = vshrl.u32 %v2161, 7
      %v2163 = vsub.s32 1, %v2162
      %v2164 = vrot.slane %v2155, %v2163
      %v2165 = vlaneseq
      %v2166 = vshrl.u32 %v2165, 7
      %v2167 = vsub.s32 2, %v2166
      %v2168 = vrot.slane %v2155, %v2167
      %v2169 = vlaneseq
      %v2170 = vshrl.u32 %v2169, 7
      %v2171 = vsub.s32 3, %v2170
      %v2172 = vrot.slane %v2155, %v2171
      %v2305 = vunpack.c.l.b16 %v1937
      %v2306 = vunpack.c.h.b16 %v1937
      %v2307 = vunpack.c.l.b16 %v1938
      %v2308 = vunpack.c.h.b16 %v1938
      %v2309 = vunpack.c.l.b16 %v1939
      %v2310 = vunpack.c.h.b16 %v1939
      %v2311 = vunpack.c.l.b16 %v1940
      %v2312 = vunpack.c.h.b16 %v1940
      %v2313 = vunpack.c.l.b16 %v1941
      %v2314 = vunpack.c.h.b16 %v1941
      %v2315 = vunpack.c.l.b16 %v1942
      %v2316 = vunpack.c.h.b16 %v1942
      %v2317 = vunpack.c.l.b16 %v1943
      %v2318 = vunpack.c.h.b16 %v1943
      %v2319 = vunpack.c.l.b16 %v1944
      %v2320 = vunpack.c.h.b16 %v1944
      %v2321 = vunpack.c.l.b16 %v1945
      %v2322 = vunpack.c.h.b16 %v1945
      %v2323 = vunpack.c.l.b16 %v1946
      %v2324 = vunpack.c.h.b16 %v1946
      %v2325 = vunpack.c.l.b16 %v1947
      %v2326 = vunpack.c.h.b16 %v1947
      %v2327 = vunpack.c.l.b16 %v1948
      %v2328 = vunpack.c.h.b16 %v1948
      %v2329 = vunpack.c.l.b16 %v1949
      %v2330 = vunpack.c.h.b16 %v1949
      %v2331 = vunpack.c.l.b16 %v1950
      %v2332 = vunpack.c.h.b16 %v1950
      %v2333 = vunpack.c.l.b16 %v1951
      %v2334 = vunpack.c.h.b16 %v1951
      %v2335 = vunpack.c.l.b16 %v1952
      %v2336 = vunpack.c.h.b16 %v1952
      %v2337 = vunpack.c.l.b16 %v1953
      %v2338 = vunpack.c.h.b16 %v1953
      %v2339 = vunpack.c.l.b16 %v1954
      %v2340 = vunpack.c.h.b16 %v1954
      %v2341 = vunpack.c.l.b16 %v1955
      %v2342 = vunpack.c.h.b16 %v1955
      %v2343 = vunpack.c.l.b16 %v1956
      %v2344 = vunpack.c.h.b16 %v1956
      %v2345 = vunpack.c.l.b16 %v1957
      %v2346 = vunpack.c.h.b16 %v1957
      %v2347 = vunpack.c.l.b16 %v1958
      %v2348 = vunpack.c.h.b16 %v1958
      %v2349 = vunpack.c.l.b16 %v1959
      %v2350 = vunpack.c.h.b16 %v1959
      %v2351 = vunpack.c.l.b16 %v1960
      %v2352 = vunpack.c.h.b16 %v1960
      %v2353 = vunpack.c.l.b16 %v1961
      %v2354 = vunpack.c.h.b16 %v1961
      %v2355 = vunpack.c.l.b16 %v1962
      %v2356 = vunpack.c.h.b16 %v1962
      %v2357 = vunpack.c.l.b16 %v1963
      %v2358 = vunpack.c.h.b16 %v1963
      %v2359 = vunpack.c.l.b16 %v1964
      %v2360 = vunpack.c.h.b16 %v1964
      %v2361 = vunpack.c.l.b16 %v1965
      %v2362 = vunpack.c.h.b16 %v1965
      %v2363 = vunpack.c.l.b16 %v1966
      %v2364 = vunpack.c.h.b16 %v1966
      %v2365 = vunpack.c.l.b16 %v1967
      %v2366 = vunpack.c.h.b16 %v1967
      %v2367 = vunpack.c.l.b16 %v1968
      %v2368 = vunpack.c.h.b16 %v1968
      %v2369 = vunpack.c.l.b16 %v1969
      %v2370 = vunpack.c.h.b16 %v1969
      %v2371 = vunpack.c.l.b16 %v1970
      %v2372 = vunpack.c.h.b16 %v1970
      %v2373 = vunpack.c.l.b16 %v1971
      %v2374 = vunpack.c.h.b16 %v1971
      %v2375 = vunpack.c.l.b16 %v1972
      %v2376 = vunpack.c.h.b16 %v1972
      %v2377 = vunpack.c.l.b16 %v1973
      %v2378 = vunpack.c.h.b16 %v1973
      %v2379 = vunpack.c.l.b16 %v1974
      %v2380 = vunpack.c.h.b16 %v1974
      %v2381 = vunpack.c.l.b16 %v1975
      %v2382 = vunpack.c.h.b16 %v1975
      %v2383 = vunpack.c.l.b16 %v1976
      %v2384 = vunpack.c.h.b16 %v1976
      %v2385 = vunpack.c.l.b16 %v1977
      %v2386 = vunpack.c.h.b16 %v1977
      %v2387 = vunpack.c.l.b16 %v1978
      %v2388 = vunpack.c.h.b16 %v1978
      %v2389 = vunpack.c.l.b16 %v1979
      %v2390 = vunpack.c.h.b16 %v1979
      %v2391 = vunpack.c.l.b16 %v1980
      %v2392 = vunpack.c.h.b16 %v1980
      %v2393 = vunpack.c.l.b16 %v1981
      %v2394 = vunpack.c.h.b16 %v1981
      %v2395 = vunpack.c.l.b16 %v1982
      %v2396 = vunpack.c.h.b16 %v1982
      %v2397 = vunpack.c.l.b16 %v1983
      %v2398 = vunpack.c.h.b16 %v1983
      %v2399 = vunpack.c.l.b16 %v1984
      %v2400 = vunpack.c.h.b16 %v1984
      %v2401 = vunpack.c.l.b16 %v1985
      %v2402 = vunpack.c.h.b16 %v1985
      %v2403 = vunpack.c.l.b16 %v1986
      %v2404 = vunpack.c.h.b16 %v1986
      %v2405 = vunpack.c.l.b16 %v1987
      %v2406 = vunpack.c.h.b16 %v1987
      %v2407 = vunpack.c.l.b16 %v1988
      %v2408 = vunpack.c.h.b16 %v1988
      %v2409 = vunpack.c.l.b16 %v1989
      %v2410 = vunpack.c.h.b16 %v1989
      %v2411 = vunpack.c.l.b16 %v1990
      %v2412 = vunpack.c.h.b16 %v1990
      %v2413 = vunpack.c.l.b16 %v1991
      %v2414 = vunpack.c.h.b16 %v1991
      %v2415 = vunpack.c.l.b16 %v1992
      %v2416 = vunpack.c.h.b16 %v1992
      %v2417 = vunpack.c.l.b16 %v1993
      %v2418 = vunpack.c.h.b16 %v1993
      %v2419 = vunpack.c.l.b16 %v1994
      %v2420 = vunpack.c.h.b16 %v1994
      %v2421 = vunpack.c.l.b16 %v1995
      %v2422 = vunpack.c.h.b16 %v1995
      %v2423 = vunpack.c.l.b16 %v1996
      %v2424 = vunpack.c.h.b16 %v1996
      %v2425 = vunpack.c.l.b16 %v1997
      %v2426 = vunpack.c.h.b16 %v1997
      %v2427 = vunpack.c.l.b16 %v1998
      %v2428 = vunpack.c.h.b16 %v1998
      %v2429 = vunpack.c.l.b16 %v1999
      %v2430 = vunpack.c.h.b16 %v1999
      %v2431 = vunpack.c.l.b16 %v2000
      %v2432 = vunpack.c.h.b16 %v2000
      %v2433 = vunpack.c.l.b16 %v2001
      %v2434 = vunpack.c.h.b16 %v2001
      %v2435 = vunpack.c.l.b16 %v2002
      %v2436 = vunpack.c.h.b16 %v2002
      %v2437 = vunpack.c.l.b16 %v2003
      %v2438 = vunpack.c.h.b16 %v2003
      %v2439 = vunpack.c.l.b16 %v2004
      %v2440 = vunpack.c.h.b16 %v2004
      %v2441 = vunpack.c.l.b16 %v2005
      %v2442 = vunpack.c.h.b16 %v2005
      %v2443 = vunpack.c.l.b16 %v2006
      %v2444 = vunpack.c.h.b16 %v2006
      %v2445 = vunpack.c.l.b16 %v2007
      %v2446 = vunpack.c.h.b16 %v2007
      %v2447 = vunpack.c.l.b16 %v2008
      %v2448 = vunpack.c.h.b16 %v2008
      %v2449 = vunpack.c.l.b16 %v2009
      %v2450 = vunpack.c.h.b16 %v2009
      %v2451 = vunpack.c.l.b16 %v2010
      %v2452 = vunpack.c.h.b16 %v2010
      %v2453 = vunpack.c.l.b16 %v2011
      %v2454 = vunpack.c.h.b16 %v2011
      %v2455 = vunpack.c.l.b16 %v2012
      %v2456 = vunpack.c.h.b16 %v2012
      %v2457 = vunpack.c.l.b16 %v2013
      %v2458 = vunpack.c.h.b16 %v2013
      %v2459 = vunpack.c.l.b16 %v2014
      %v2460 = vunpack.c.h.b16 %v2014
      %v2461 = vunpack.c.l.b16 %v2015
      %v2462 = vunpack.c.h.b16 %v2015
      %v2463 = vunpack.c.l.b16 %v2016
      %v2464 = vunpack.c.h.b16 %v2016
      %v2465 = vunpack.c.l.b16 %v2017
      %v2466 = vunpack.c.h.b16 %v2017
      %v2467 = vunpack.c.l.b16 %v2018
      %v2468 = vunpack.c.h.b16 %v2018
      %v2469 = vunpack.c.l.b16 %v2019
      %v2470 = vunpack.c.h.b16 %v2019
      %v2471 = vunpack.c.l.b16 %v2020
      %v2472 = vunpack.c.h.b16 %v2020
      %v2473 = vunpack.c.l.b16 %v2021
      %v2474 = vunpack.c.h.b16 %v2021
      %v2475 = vunpack.c.l.b16 %v2022
      %v2476 = vunpack.c.h.b16 %v2022
      %v2477 = vunpack.c.l.b16 %v2023
      %v2478 = vunpack.c.h.b16 %v2023
      %v2479 = vunpack.c.l.b16 %v2024
      %v2480 = vunpack.c.h.b16 %v2024
      %v2481 = vunpack.c.l.b16 %v2025
      %v2482 = vunpack.c.h.b16 %v2025
      %v2483 = vunpack.c.l.b16 %v2026
      %v2484 = vunpack.c.h.b16 %v2026
      %v2485 = vunpack.c.l.b16 %v2027
      %v2486 = vunpack.c.h.b16 %v2027
      %v2487 = vunpack.c.l.b16 %v2028
      %v2488 = vunpack.c.h.b16 %v2028
      %v2489 = vunpack.c.l.b16 %v2029
      %v2490 = vunpack.c.h.b16 %v2029
      %v2491 = vunpack.c.l.b16 %v2030
      %v2492 = vunpack.c.h.b16 %v2030
      %v2493 = vunpack.c.l.b16 %v2031
      %v2494 = vunpack.c.h.b16 %v2031
      %v2495 = vunpack.c.l.b16 %v2032
      %v2496 = vunpack.c.h.b16 %v2032
      %v2497 = vunpack.c.l.b16 %v2033
      %v2498 = vunpack.c.h.b16 %v2033
      %v2499 = vunpack.c.l.b16 %v2034
      %v2500 = vunpack.c.h.b16 %v2034
      %v2501 = vunpack.c.l.b16 %v2035
      %v2502 = vunpack.c.h.b16 %v2035
      %v2503 = vunpack.c.l.b16 %v2036
      %v2504 = vunpack.c.h.b16 %v2036
      %v2505 = vunpack.c.l.b16 %v2037
      %v2506 = vunpack.c.h.b16 %v2037
      %v2507 = vunpack.c.l.b16 %v2038
      %v2508 = vunpack.c.h.b16 %v2038
      %v2509 = vunpack.c.l.b16 %v2039
      %v2510 = vunpack.c.h.b16 %v2039
      %v2511 = vunpack.c.l.b16 %v2040
      %v2512 = vunpack.c.h.b16 %v2040
      %v2513 = vunpack.c.l.b16 %v2041
      %v2514 = vunpack.c.h.b16 %v2041
      %v2515 = vunpack.c.l.b16 %v2042
      %v2516 = vunpack.c.h.b16 %v2042
      %v2517 = vunpack.c.l.b16 %v2043
      %v2518 = vunpack.c.h.b16 %v2043
      %v2519 = vunpack.c.l.b16 %v2044
      %v2520 = vunpack.c.h.b16 %v2044
      %v2521 = vunpack.c.l.b16 %v2045
      %v2522 = vunpack.c.h.b16 %v2045
      %v2523 = vunpack.c.l.b16 %v2046
      %v2524 = vunpack.c.h.b16 %v2046
      %v2525 = vunpack.c.l.b16 %v2047
      %v2526 = vunpack.c.h.b16 %v2047
      %v2527 = vunpack.c.l.b16 %v2048
      %v2528 = vunpack.c.h.b16 %v2048
      %v2529 = vunpack.c.l.b16 %v2049
      %v2530 = vunpack.c.h.b16 %v2049
      %v2531 = vunpack.c.l.b16 %v2050
      %v2532 = vunpack.c.h.b16 %v2050
      %v2533 = vunpack.c.l.b16 %v2051
      %v2534 = vunpack.c.h.b16 %v2051
      %v2535 = vunpack.c.l.b16 %v2052
      %v2536 = vunpack.c.h.b16 %v2052
      %v2537 = vunpack.c.l.b16 %v2053
      %v2538 = vunpack.c.h.b16 %v2053
      %v2539 = vunpack.c.l.b16 %v2054
      %v2540 = vunpack.c.h.b16 %v2054
      %v2541 = vunpack.c.l.b16 %v2055
      %v2542 = vunpack.c.h.b16 %v2055
      %v2543 = vunpack.c.l.b16 %v2056
      %v2544 = vunpack.c.h.b16 %v2056
      %v2545 = vunpack.c.l.b16 %v2057
      %v2546 = vunpack.c.h.b16 %v2057
      %v2547 = vunpack.c.l.b16 %v2058
      %v2548 = vunpack.c.h.b16 %v2058
      %v2549 = vunpack.c.l.b16 %v2059
      %v2550 = vunpack.c.h.b16 %v2059
      %v2551 = vunpack.c.l.b16 %v2060
      %v2552 = vunpack.c.h.b16 %v2060
      %v2553 = vunpack.c.l.b16 %v2061
      %v2554 = vunpack.c.h.b16 %v2061
      %v2555 = vunpack.c.l.b16 %v2062
      %v2556 = vunpack.c.h.b16 %v2062
      %v2557 = vunpack.c.l.b16 %v2063
      %v2558 = vunpack.c.h.b16 %v2063
      %v2559 = vunpack.c.l.b16 %v2064
      %v2560 = vunpack.c.h.b16 %v2064
      %v2561 = vpack.c.b16 %v2309, %v2305
      %v2562 = vpack.c.b16 %v2310, %v2306
      %v2563 = vpack.c.b16 %v2311, %v2307
      %v2564 = vpack.c.b16 %v2312, %v2308
      %v2565 = vpack.c.b16 %v2317, %v2313
      %v2566 = vpack.c.b16 %v2318, %v2314
      %v2567 = vpack.c.b16 %v2319, %v2315
      %v2568 = vpack.c.b16 %v2320, %v2316
      %v2569 = vpack.c.b16 %v2325, %v2321
      %v2570 = vpack.c.b16 %v2326, %v2322
      %v2571 = vpack.c.b16 %v2327, %v2323
      %v2572 = vpack.c.b16 %v2328, %v2324
      %v2573 = vpack.c.b16 %v2333, %v2329
      %v2574 = vpack.c.b16 %v2334, %v2330
      %v2575 = vpack.c.b16 %v2335, %v2331
      %v2576 = vpack.c.b16 %v2336, %v2332
      %v2577 = vpack.c.b16 %v2341, %v2337
      %v2578 = vpack.c.b16 %v2342, %v2338
      %v2579 = vpack.c.b16 %v2343, %v2339
      %v2580 = vpack.c.b16 %v2344, %v2340
      %v2581 = vpack.c.b16 %v2349, %v2345
      %v2582 = vpack.c.b16 %v2350, %v2346
      %v2583 = vpack.c.b16 %v2351, %v2347
      %v2584 = vpack.c.b16 %v2352, %v2348
      %v2585 = vpack.c.b16 %v2357, %v2353
      %v2586 = vpack.c.b16 %v2358, %v2354
      %v2587 = vpack.c.b16 %v2359, %v2355
      %v2588 = vpack.c.b16 %v2360, %v2356
      %v2589 = vpack.c.b16 %v2365, %v2361
      %v2590 = vpack.c.b16 %v2366, %v2362
      %v2591 = vpack.c.b16 %v2367, %v2363
      %v2592 = vpack.c.b16 %v2368, %v2364
      %v2593 = vpack.c.b16 %v2373, %v2369
      %v2594 = vpack.c.b16 %v2374, %v2370
      %v2595 = vpack.c.b16 %v2375, %v2371
      %v2596 = vpack.c.b16 %v2376, %v2372
      %v2597 = vpack.c.b16 %v2381, %v2377
      %v2598 = vpack.c.b16 %v2382, %v2378
      %v2599 = vpack.c.b16 %v2383, %v2379
      %v2600 = vpack.c.b16 %v2384, %v2380
      %v2601 = vpack.c.b16 %v2389, %v2385
      %v2602 = vpack.c.b16 %v2390, %v2386
      %v2603 = vpack.c.b16 %v2391, %v2387
      %v2604 = vpack.c.b16 %v2392, %v2388
      %v2605 = vpack.c.b16 %v2397, %v2393
      %v2606 = vpack.c.b16 %v2398, %v2394
      %v2607 = vpack.c.b16 %v2399, %v2395
      %v2608 = vpack.c.b16 %v2400, %v2396
      %v2609 = vpack.c.b16 %v2405, %v2401
      %v2610 = vpack.c.b16 %v2406, %v2402
      %v2611 = vpack.c.b16 %v2407, %v2403
      %v2612 = vpack.c.b16 %v2408, %v2404
      %v2613 = vpack.c.b16 %v2413, %v2409
      %v2614 = vpack.c.b16 %v2414, %v2410
      %v2615 = vpack.c.b16 %v2415, %v2411
      %v2616 = vpack.c.b16 %v2416, %v2412
      %v2617 = vpack.c.b16 %v2421, %v2417
      %v2618 = vpack.c.b16 %v2422, %v2418
      %v2619 = vpack.c.b16 %v2423, %v2419
      %v2620 = vpack.c.b16 %v2424, %v2420
      %v2621 = vpack.c.b16 %v2429, %v2425
      %v2622 = vpack.c.b16 %v2430, %v2426
      %v2623 = vpack.c.b16 %v2431, %v2427
      %v2624 = vpack.c.b16 %v2432, %v2428
      %v2625 = vpack.c.b16 %v2437, %v2433
      %v2626 = vpack.c.b16 %v2438, %v2434
      %v2627 = vpack.c.b16 %v2439, %v2435
      %v2628 = vpack.c.b16 %v2440, %v2436
      %v2629 = vpack.c.b16 %v2445, %v2441
      %v2630 = vpack.c.b16 %v2446, %v2442
      %v2631 = vpack.c.b16 %v2447, %v2443
      %v2632 = vpack.c.b16 %v2448, %v2444
      %v2633 = vpack.c.b16 %v2453, %v2449
      %v2634 = vpack.c.b16 %v2454, %v2450
      %v2635 = vpack.c.b16 %v2455, %v2451
      %v2636 = vpack.c.b16 %v2456, %v2452
      %v2637 = vpack.c.b16 %v2461, %v2457
      %v2638 = vpack.c.b16 %v2462, %v2458
      %v2639 = vpack.c.b16 %v2463, %v2459
      %v2640 = vpack.c.b16 %v2464, %v2460
      %v2641 = vpack.c.b16 %v2469, %v2465
      %v2642 = vpack.c.b16 %v2470, %v2466
      %v2643 = vpack.c.b16 %v2471, %v2467
      %v2644 = vpack.c.b16 %v2472, %v2468
      %v2645 = vpack.c.b16 %v2477, %v2473
      %v2646 = vpack.c.b16 %v2478, %v2474
      %v2647 = vpack.c.b16 %v2479, %v2475
      %v2648 = vpack.c.b16 %v2480, %v2476
      %v2649 = vpack.c.b16 %v2485, %v2481
      %v2650 = vpack.c.b16 %v2486, %v2482
      %v2651 = vpack.c.b16 %v2487, %v2483
      %v2652 = vpack.c.b16 %v2488, %v2484
      %v2653 = vpack.c.b16 %v2493, %v2489
      %v2654 = vpack.c.b16 %v2494, %v2490
      %v2655 = vpack.c.b16 %v2495, %v2491
      %v2656 = vpack.c.b16 %v2496, %v2492
      %v2657 = vpack.c.b16 %v2501, %v2497
      %v2658 = vpack.c.b16 %v2502, %v2498
      %v2659 = vpack.c.b16 %v2503, %v2499
      %v2660 = vpack.c.b16 %v2504, %v2500
      %v2661 = vpack.c.b16 %v2509, %v2505
      %v2662 = vpack.c.b16 %v2510, %v2506
      %v2663 = vpack.c.b16 %v2511, %v2507
      %v2664 = vpack.c.b16 %v2512, %v2508
      %v2665 = vpack.c.b16 %v2517, %v2513
      %v2666 = vpack.c.b16 %v2518, %v2514
      %v2667 = vpack.c.b16 %v2519, %v2515
      %v2668 = vpack.c.b16 %v2520, %v2516
      %v2669 = vpack.c.b16 %v2525, %v2521
      %v2670 = vpack.c.b16 %v2526, %v2522
      %v2671 = vpack.c.b16 %v2527, %v2523
      %v2672 = vpack.c.b16 %v2528, %v2524
      %v2673 = vpack.c.b16 %v2533, %v2529
      %v2674 = vpack.c.b16 %v2534, %v2530
      %v2675 = vpack.c.b16 %v2535, %v2531
      %v2676 = vpack.c.b16 %v2536, %v2532
      %v2677 = vpack.c.b16 %v2541, %v2537
      %v2678 = vpack.c.b16 %v2542, %v2538
      %v2679 = vpack.c.b16 %v2543, %v2539
      %v2680 = vpack.c.b16 %v2544, %v2540
      %v2681 = vpack.c.b16 %v2549, %v2545
      %v2682 = vpack.c.b16 %v2550, %v2546
      %v2683 = vpack.c.b16 %v2551, %v2547
      %v2684 = vpack.c.b16 %v2552, %v2548
      %v2685 = vpack.c.b16 %v2557, %v2553
      %v2686 = vpack.c.b16 %v2558, %v2554
      %v2687 = vpack.c.b16 %v2559, %v2555
      %v2688 = vpack.c.b16 %v2560, %v2556
      %2817 = vmatprep.subr.bf16.mxu0 %v2562
      %2818 = vmatpush1.bf16.msra.mxu0 %v2561
      %2819 = vmatprep.subr.bf16.mxu0 %v2566
      %2820 = vmatpush1.bf16.msra.mxu0 %v2565
      %2821 = vmatprep.subr.bf16.mxu0 %v2570
      %2822 = vmatpush1.bf16.msra.mxu0 %v2569
      %2823 = vmatprep.subr.bf16.mxu0 %v2574
      %2824 = vmatpush1.bf16.msra.mxu0 %v2573
      %2825 = vmatprep.subr.bf16.mxu0 %v2578
      %2826 = vmatpush1.bf16.msra.mxu0 %v2577
      %2827 = vmatprep.subr.bf16.mxu0 %v2582
      %2828 = vmatpush1.bf16.msra.mxu0 %v2581
      %2829 = vmatprep.subr.bf16.mxu0 %v2586
      %2830 = vmatpush1.bf16.msra.mxu0 %v2585
      %2831 = vmatprep.subr.bf16.mxu0 %v2590
      %2832 = vmatpush1.bf16.msra.mxu0 %v2589
      %2833 = vmatprep.subr.bf16.mxu0 %v2594
      %2834 = vmatpush1.bf16.msra.mxu0 %v2593
      %2835 = vmatprep.subr.bf16.mxu0 %v2598
      %2836 = vmatpush1.bf16.msra.mxu0 %v2597
      %2837 = vmatprep.subr.bf16.mxu0 %v2602
      %2838 = vmatpush1.bf16.msra.mxu0 %v2601
      %2839 = vmatprep.subr.bf16.mxu0 %v2606
      %2840 = vmatpush1.bf16.msra.mxu0 %v2605
      %2841 = vmatprep.subr.bf16.mxu0 %v2610
      %2842 = vmatpush1.bf16.msra.mxu0 %v2609
      %2843 = vmatprep.subr.bf16.mxu0 %v2614
      %2844 = vmatpush1.bf16.msra.mxu0 %v2613
      %2845 = vmatprep.subr.bf16.mxu0 %v2618
      %2846 = vmatpush1.bf16.msra.mxu0 %v2617
      %2847 = vmatprep.subr.bf16.mxu0 %v2622
      %2848 = vmatpush1.bf16.msra.mxu0 %v2621
      %2849 = vmatprep.mubr.bf16.mxu0 %v2152
      %2850 = vmatmul.mubr.bf16.gmra.mrb[0].mxu0 %v2151
      %v2851 = vpop.f32.mrb[0].mxu0
      %v2852 = vadd.f32 %v2160, %v2851
      %v2853 = vpop.f32.mrb[0].mxu0
      %v2854 = vadd.f32 %v2164, %v2853
      %v2855 = vpop.f32.mrb[0].mxu0
      %v2856 = vpop.f32.mrb[0].mxu0
      %2857 = vdwg.mxu0
      %2858 = vmatprep.subr.bf16.mxu0 %v2626
      %2859 = vmatpush1.bf16.msra.mxu0 %v2625
      %2860 = vmatprep.subr.bf16.mxu0 %v2630
      %2861 = vmatpush1.bf16.msra.mxu0 %v2629
      %2862 = vmatprep.subr.bf16.mxu0 %v2634
      %2863 = vmatpush1.bf16.msra.mxu0 %v2633
      %2864 = vmatprep.subr.bf16.mxu0 %v2638
      %2865 = vmatpush1.bf16.msra.mxu0 %v2637
      %2866 = vmatprep.subr.bf16.mxu0 %v2642
      %2867 = vmatpush1.bf16.msra.mxu0 %v2641
      %2868 = vmatprep.subr.bf16.mxu0 %v2646
      %2869 = vmatpush1.bf16.msra.mxu0 %v2645
      %2870 = vmatprep.subr.bf16.mxu0 %v2650
      %2871 = vmatpush1.bf16.msra.mxu0 %v2649
      %2872 = vmatprep.subr.bf16.mxu0 %v2654
      %2873 = vmatpush1.bf16.msra.mxu0 %v2653
      %2874 = vmatprep.subr.bf16.mxu0 %v2658
      %2875 = vmatpush1.bf16.msra.mxu0 %v2657
      %2876 = vmatprep.subr.bf16.mxu0 %v2662
      %2877 = vmatpush1.bf16.msra.mxu0 %v2661
      %2878 = vmatprep.subr.bf16.mxu0 %v2666
      %2879 = vmatpush1.bf16.msra.mxu0 %v2665
      %2880 = vmatprep.subr.bf16.mxu0 %v2670
      %2881 = vmatpush1.bf16.msra.mxu0 %v2669
      %2882 = vmatprep.subr.bf16.mxu0 %v2674
      %2883 = vmatpush1.bf16.msra.mxu0 %v2673
      %2884 = vmatprep.subr.bf16.mxu0 %v2678
      %2885 = vmatpush1.bf16.msra.mxu0 %v2677
      %2886 = vmatprep.subr.bf16.mxu0 %v2682
      %2887 = vmatpush1.bf16.msra.mxu0 %v2681
      %2888 = vmatprep.subr.bf16.mxu0 %v2686
      %2889 = vmatpush1.bf16.msra.mxu0 %v2685
      %2890 = vmatprep.mubr.bf16.mxu0 %v2154
      %2891 = vmatmul.mubr.bf16.gmra.mrb[0].mxu0 %v2153
      %v2892 = vpop.f32.mrb[0].mxu0
      %v2893 = vadd.f32 %v2852, %v2892
      %v2894 = vpop.f32.mrb[0].mxu0
      %v2895 = vadd.f32 %v2854, %v2894
      %v2896 = vpop.f32.mrb[0].mxu0
      %v2897 = vpop.f32.mrb[0].mxu0
      %2898 = vdwg.mxu0
      %2899 = vmatprep.subr.bf16.mxu0 %v2564
      %2900 = vmatpush1.bf16.msra.mxu0 %v2563
      %2901 = vmatprep.subr.bf16.mxu0 %v2568
      %2902 = vmatpush1.bf16.msra.mxu0 %v2567
      %2903 = vmatprep.subr.bf16.mxu0 %v2572
      %2904 = vmatpush1.bf16.msra.mxu0 %v2571
      %2905 = vmatprep.subr.bf16.mxu0 %v2576
      %2906 = vmatpush1.bf16.msra.mxu0 %v2575
      %2907 = vmatprep.subr.bf16.mxu0 %v2580
      %2908 = vmatpush1.bf16.msra.mxu0 %v2579
      %2909 = vmatprep.subr.bf16.mxu0 %v2584
      %2910 = vmatpush1.bf16.msra.mxu0 %v2583
      %2911 = vmatprep.subr.bf16.mxu0 %v2588
      %2912 = vmatpush1.bf16.msra.mxu0 %v2587
      %2913 = vmatprep.subr.bf16.mxu0 %v2592
      %2914 = vmatpush1.bf16.msra.mxu0 %v2591
      %2915 = vmatprep.subr.bf16.mxu0 %v2596
      %2916 = vmatpush1.bf16.msra.mxu0 %v2595
      %2917 = vmatprep.subr.bf16.mxu0 %v2600
      %2918 = vmatpush1.bf16.msra.mxu0 %v2599
      %2919 = vmatprep.subr.bf16.mxu0 %v2604
      %2920 = vmatpush1.bf16.msra.mxu0 %v2603
      %2921 = vmatprep.subr.bf16.mxu0 %v2608
      %2922 = vmatpush1.bf16.msra.mxu0 %v2607
      %2923 = vmatprep.subr.bf16.mxu0 %v2612
      %2924 = vmatpush1.bf16.msra.mxu0 %v2611
      %2925 = vmatprep.subr.bf16.mxu0 %v2616
      %2926 = vmatpush1.bf16.msra.mxu0 %v2615
      %2927 = vmatprep.subr.bf16.mxu0 %v2620
      %2928 = vmatpush1.bf16.msra.mxu0 %v2619
      %2929 = vmatprep.subr.bf16.mxu0 %v2624
      %2930 = vmatpush1.bf16.msra.mxu0 %v2623
      %2931 = vmatprep.mubr.bf16.mxu0 %v2152
      %2932 = vmatmul.mubr.bf16.gmra.mrb[0].mxu0 %v2151
      %v2933 = vpop.f32.mrb[0].mxu0
      %v2934 = vadd.f32 %v2168, %v2933
      %v2935 = vpop.f32.mrb[0].mxu0
      %v2936 = vadd.f32 %v2172, %v2935
      %v2937 = vpop.f32.mrb[0].mxu0
      %v2938 = vpop.f32.mrb[0].mxu0
      %2939 = vdwg.mxu0
      %2940 = vmatprep.subr.bf16.mxu0 %v2628
      %2941 = vmatpush1.bf16.msra.mxu0 %v2627
      %2942 = vmatprep.subr.bf16.mxu0 %v2632
      %2943 = vmatpush1.bf16.msra.mxu0 %v2631
      %2944 = vmatprep.subr.bf16.mxu0 %v2636
      %2945 = vmatpush1.bf16.msra.mxu0 %v2635
      %2946 = vmatprep.subr.bf16.mxu0 %v2640
      %2947 = vmatpush1.bf16.msra.mxu0 %v2639
      %2948 = vmatprep.subr.bf16.mxu0 %v2644
      %2949 = vmatpush1.bf16.msra.mxu0 %v2643
      %2950 = vmatprep.subr.bf16.mxu0 %v2648
      %2951 = vmatpush1.bf16.msra.mxu0 %v2647
      %2952 = vmatprep.subr.bf16.mxu0 %v2652
      %2953 = vmatpush1.bf16.msra.mxu0 %v2651
      %2954 = vmatprep.subr.bf16.mxu0 %v2656
      %2955 = vmatpush1.bf16.msra.mxu0 %v2655
      %2956 = vmatprep.subr.bf16.mxu0 %v2660
      %2957 = vmatpush1.bf16.msra.mxu0 %v2659
      %2958 = vmatprep.subr.bf16.mxu0 %v2664
      %2959 = vmatpush1.bf16.msra.mxu0 %v2663
      %2960 = vmatprep.subr.bf16.mxu0 %v2668
      %2961 = vmatpush1.bf16.msra.mxu0 %v2667
      %2962 = vmatprep.subr.bf16.mxu0 %v2672
      %2963 = vmatpush1.bf16.msra.mxu0 %v2671
      %2964 = vmatprep.subr.bf16.mxu0 %v2676
      %2965 = vmatpush1.bf16.msra.mxu0 %v2675
      %2966 = vmatprep.subr.bf16.mxu0 %v2680
      %2967 = vmatpush1.bf16.msra.mxu0 %v2679
      %2968 = vmatprep.subr.bf16.mxu0 %v2684
      %2969 = vmatpush1.bf16.msra.mxu0 %v2683
      %2970 = vmatprep.subr.bf16.mxu0 %v2688
      %2971 = vmatpush1.bf16.msra.mxu0 %v2687
      %2972 = vmatprep.mubr.bf16.mxu0 %v2154
      %2973 = vmatmul.mubr.bf16.gmra.mrb[0].mxu0 %v2153
      %v2974 = vpop.f32.mrb[0].mxu0
      %v2975 = vadd.f32 %v2934, %v2974
      %v2976 = vpop.f32.mrb[0].mxu0
      %v2977 = vadd.f32 %v2936, %v2976
      %v2978 = vpop.f32.mrb[0].mxu0
      %v2979 = vpop.f32.mrb[0].mxu0
      %2980 = vdwg.mxu0
      %vm2981 = vcmp.gt.f32.partialorder %v2893, 0.0
      %vm2982 = vcmp.gt.f32.partialorder %v2895, 0.0
      %vm2983 = vcmp.gt.f32.partialorder %v2975, 0.0
      %vm2984 = vcmp.gt.f32.partialorder %v2977, 0.0
      %v2985 = vmul.f32 %v2893, 0.2
      %v2986 = vmul.f32 %v2895, 0.2
      %v2987 = vmul.f32 %v2975, 0.2
      %v2988 = vmul.f32 %v2977, 0.2
      %v2989 = vsel %vm2981, %v2893, %v2985
      %v2990 = vsel %vm2982, %v2895, %v2986
      %v2991 = vsel %vm2983, %v2975, %v2987
      %v2992 = vsel %vm2984, %v2977, %v2988
      %v2993 = vpack.c.bf16 %v2989, %v2989
      %v2994 = vpack.c.bf16 %v2990, %v2990
      %v2995 = vpack.c.bf16 %v2991, %v2991
      %v2996 = vpack.c.bf16 %v2992, %v2992
      %v2997 = vld [vmem:[%s33] sm:$0x1]
      %v2999 = vlaneseq
      %v3000 = vshrl.u32 %v2999, 7
      %v3001 = vsub.s32 0, %v3000
      %v3002 = vrot.slane %v2997, %v3001
      %v3068 = vunpack.c.l.b16 %v2065
      %v3069 = vunpack.c.l.b16 %v2066
      %v3070 = vunpack.c.l.b16 %v2067
      %v3071 = vunpack.c.l.b16 %v2068
      %v3072 = vunpack.c.l.b16 %v2069
      %v3073 = vunpack.c.l.b16 %v2070
      %v3074 = vunpack.c.l.b16 %v2071
      %v3075 = vunpack.c.l.b16 %v2072
      %v3076 = vunpack.c.l.b16 %v2073
      %v3077 = vunpack.c.l.b16 %v2074
      %v3078 = vunpack.c.l.b16 %v2075
      %v3079 = vunpack.c.l.b16 %v2076
      %v3080 = vunpack.c.l.b16 %v2077
      %v3081 = vunpack.c.l.b16 %v2078
      %v3082 = vunpack.c.l.b16 %v2079
      %v3083 = vunpack.c.l.b16 %v2080
      %v3084 = vunpack.c.l.b16 %v2081
      %v3085 = vunpack.c.l.b16 %v2082
      %v3086 = vunpack.c.l.b16 %v2083
      %v3087 = vunpack.c.l.b16 %v2084
      %v3088 = vunpack.c.l.b16 %v2085
      %v3089 = vunpack.c.l.b16 %v2086
      %v3090 = vunpack.c.l.b16 %v2087
      %v3091 = vunpack.c.l.b16 %v2088
      %v3092 = vunpack.c.l.b16 %v2089
      %v3093 = vunpack.c.l.b16 %v2090
      %v3094 = vunpack.c.l.b16 %v2091
      %v3095 = vunpack.c.l.b16 %v2092
      %v3096 = vunpack.c.l.b16 %v2093
      %v3097 = vunpack.c.l.b16 %v2094
      %v3098 = vunpack.c.l.b16 %v2095
      %v3099 = vunpack.c.l.b16 %v2096
      %v3100 = vunpack.c.l.b16 %v2097
      %v3101 = vunpack.c.l.b16 %v2098
      %v3102 = vunpack.c.l.b16 %v2099
      %v3103 = vunpack.c.l.b16 %v2100
      %v3104 = vunpack.c.l.b16 %v2101
      %v3105 = vunpack.c.l.b16 %v2102
      %v3106 = vunpack.c.l.b16 %v2103
      %v3107 = vunpack.c.l.b16 %v2104
      %v3108 = vunpack.c.l.b16 %v2105
      %v3109 = vunpack.c.l.b16 %v2106
      %v3110 = vunpack.c.l.b16 %v2107
      %v3111 = vunpack.c.l.b16 %v2108
      %v3112 = vunpack.c.l.b16 %v2109
      %v3113 = vunpack.c.l.b16 %v2110
      %v3114 = vunpack.c.l.b16 %v2111
      %v3115 = vunpack.c.l.b16 %v2112
      %v3116 = vunpack.c.l.b16 %v2113
      %v3117 = vunpack.c.l.b16 %v2114
      %v3118 = vunpack.c.l.b16 %v2115
      %v3119 = vunpack.c.l.b16 %v2116
      %v3120 = vunpack.c.l.b16 %v2117
      %v3121 = vunpack.c.l.b16 %v2118
      %v3122 = vunpack.c.l.b16 %v2119
      %v3123 = vunpack.c.l.b16 %v2120
      %v3124 = vunpack.c.l.b16 %v2121
      %v3125 = vunpack.c.l.b16 %v2122
      %v3126 = vunpack.c.l.b16 %v2123
      %v3127 = vunpack.c.l.b16 %v2124
      %v3128 = vunpack.c.l.b16 %v2125
      %v3129 = vunpack.c.l.b16 %v2126
      %v3130 = vunpack.c.l.b16 %v2127
      %v3131 = vunpack.c.l.b16 %v2128
      %v3132 = vpack.c.b16 %v3069, %v3068
      %v3133 = vpack.c.b16 %v3071, %v3070
      %v3134 = vpack.c.b16 %v3073, %v3072
      %v3135 = vpack.c.b16 %v3075, %v3074
      %v3136 = vpack.c.b16 %v3077, %v3076
      %v3137 = vpack.c.b16 %v3079, %v3078
      %v3138 = vpack.c.b16 %v3081, %v3080
      %v3139 = vpack.c.b16 %v3083, %v3082
      %v3140 = vpack.c.b16 %v3085, %v3084
      %v3141 = vpack.c.b16 %v3087, %v3086
      %v3142 = vpack.c.b16 %v3089, %v3088
      %v3143 = vpack.c.b16 %v3091, %v3090
      %v3144 = vpack.c.b16 %v3093, %v3092
      %v3145 = vpack.c.b16 %v3095, %v3094
      %v3146 = vpack.c.b16 %v3097, %v3096
      %v3147 = vpack.c.b16 %v3099, %v3098
      %v3148 = vpack.c.b16 %v3101, %v3100
      %v3149 = vpack.c.b16 %v3103, %v3102
      %v3150 = vpack.c.b16 %v3105, %v3104
      %v3151 = vpack.c.b16 %v3107, %v3106
      %v3152 = vpack.c.b16 %v3109, %v3108
      %v3153 = vpack.c.b16 %v3111, %v3110
      %v3154 = vpack.c.b16 %v3113, %v3112
      %v3155 = vpack.c.b16 %v3115, %v3114
      %v3156 = vpack.c.b16 %v3117, %v3116
      %v3157 = vpack.c.b16 %v3119, %v3118
      %v3158 = vpack.c.b16 %v3121, %v3120
      %v3159 = vpack.c.b16 %v3123, %v3122
      %v3160 = vpack.c.b16 %v3125, %v3124
      %v3161 = vpack.c.b16 %v3127, %v3126
      %v3162 = vpack.c.b16 %v3129, %v3128
      %v3163 = vpack.c.b16 %v3131, %v3130
      %3196 = vmatprep.subr.bf16.mxu0 0
      %3197 = vmatpush1.bf16.msra.mxu0 %v3132
      %3198 = vmatprep.subr.bf16.mxu0 0
      %3199 = vmatpush1.bf16.msra.mxu0 %v3133
      %3200 = vmatprep.subr.bf16.mxu0 0
      %3201 = vmatpush1.bf16.msra.mxu0 %v3134
      %3202 = vmatprep.subr.bf16.mxu0 0
      %3203 = vmatpush1.bf16.msra.mxu0 %v3135
      %3204 = vmatprep.subr.bf16.mxu0 0
      %3205 = vmatpush1.bf16.msra.mxu0 %v3136
      %3206 = vmatprep.subr.bf16.mxu0 0
      %3207 = vmatpush1.bf16.msra.mxu0 %v3137
      %3208 = vmatprep.subr.bf16.mxu0 0
      %3209 = vmatpush1.bf16.msra.mxu0 %v3138
      %3210 = vmatprep.subr.bf16.mxu0 0
      %3211 = vmatpush1.bf16.msra.mxu0 %v3139
      %3212 = vmatprep.subr.bf16.mxu0 0
      %3213 = vmatpush1.bf16.msra.mxu0 %v3140
      %3214 = vmatprep.subr.bf16.mxu0 0
      %3215 = vmatpush1.bf16.msra.mxu0 %v3141
      %3216 = vmatprep.subr.bf16.mxu0 0
      %3217 = vmatpush1.bf16.msra.mxu0 %v3142
      %3218 = vmatprep.subr.bf16.mxu0 0
      %3219 = vmatpush1.bf16.msra.mxu0 %v3143
      %3220 = vmatprep.subr.bf16.mxu0 0
      %3221 = vmatpush1.bf16.msra.mxu0 %v3144
      %3222 = vmatprep.subr.bf16.mxu0 0
      %3223 = vmatpush1.bf16.msra.mxu0 %v3145
      %3224 = vmatprep.subr.bf16.mxu0 0
      %3225 = vmatpush1.bf16.msra.mxu0 %v3146
      %3226 = vmatprep.subr.bf16.mxu0 0
      %3227 = vmatpush1.bf16.msra.mxu0 %v3147
      %3228 = vmatprep.mubr.bf16.mxu0 %v2994
      %3229 = vmatmul.mubr.bf16.gmra.mrb[0].mxu0 %v2993
      %v3230 = vpop.f32.mrb[0].mxu0
      %v3231 = vadd.f32 %v3002, %v3230
      %v3232 = vpop.f32.mrb[0].mxu0
      %v3233 = vpop.f32.mrb[0].mxu0
      %v3234 = vpop.f32.mrb[0].mxu0
      %3235 = vdwg.mxu0
      %3236 = vmatprep.subr.bf16.mxu0 0
      %3237 = vmatpush1.bf16.msra.mxu0 %v3148
      %3238 = vmatprep.subr.bf16.mxu0 0
      %3239 = vmatpush1.bf16.msra.mxu0 %v3149
      %3240 = vmatprep.subr.bf16.mxu0 0
      %3241 = vmatpush1.bf16.msra.mxu0 %v3150
      %3242 = vmatprep.subr.bf16.mxu0 0
      %3243 = vmatpush1.bf16.msra.mxu0 %v3151
      %3244 = vmatprep.subr.bf16.mxu0 0
      %3245 = vmatpush1.bf16.msra.mxu0 %v3152
      %3246 = vmatprep.subr.bf16.mxu0 0
      %3247 = vmatpush1.bf16.msra.mxu0 %v3153
      %3248 = vmatprep.subr.bf16.mxu0 0
      %3249 = vmatpush1.bf16.msra.mxu0 %v3154
      %3250 = vmatprep.subr.bf16.mxu0 0
      %3251 = vmatpush1.bf16.msra.mxu0 %v3155
      %3252 = vmatprep.subr.bf16.mxu0 0
      %3253 = vmatpush1.bf16.msra.mxu0 %v3156
      %3254 = vmatprep.subr.bf16.mxu0 0
      %3255 = vmatpush1.bf16.msra.mxu0 %v3157
      %3256 = vmatprep.subr.bf16.mxu0 0
      %3257 = vmatpush1.bf16.msra.mxu0 %v3158
      %3258 = vmatprep.subr.bf16.mxu0 0
      %3259 = vmatpush1.bf16.msra.mxu0 %v3159
      %3260 = vmatprep.subr.bf16.mxu0 0
      %3261 = vmatpush1.bf16.msra.mxu0 %v3160
      %3262 = vmatprep.subr.bf16.mxu0 0
      %3263 = vmatpush1.bf16.msra.mxu0 %v3161
      %3264 = vmatprep.subr.bf16.mxu0 0
      %3265 = vmatpush1.bf16.msra.mxu0 %v3162
      %3266 = vmatprep.subr.bf16.mxu0 0
      %3267 = vmatpush1.bf16.msra.mxu0 %v3163
      %3268 = vmatprep.mubr.bf16.mxu0 %v2996
      %3269 = vmatmul.mubr.bf16.gmra.mrb[0].mxu0 %v2995
      %v3270 = vpop.f32.mrb[0].mxu0
      %v3271 = vadd.f32 %v3231, %v3270
      %v3272 = vpop.f32.mrb[0].mxu0
      %v3273 = vpop.f32.mrb[0].mxu0
      %v3274 = vpop.f32.mrb[0].mxu0
      %3275 = vdwg.mxu0
      %v3276 = vld [vmem:[%s35] sm:$0xf]
      %v3277 = vld [vmem:[%s35 + $0x4] sm:$0xf]
      %v3278 = vld [vmem:[%s35 + $0x8] sm:$0xf]
      %v3279 = vld [vmem:[%s35 + $0xc] sm:$0xf]
      %v3280 = vld [vmem:[%s35 + $0x10] sm:$0xf]
      %v3281 = vld [vmem:[%s35 + $0x14] sm:$0xf]
      %v3282 = vld [vmem:[%s35 + $0x18] sm:$0xf]
      %v3283 = vld [vmem:[%s35 + $0x1c] sm:$0xf]
      %v3284 = vld [vmem:[%s35 + $0x20] sm:$0xf]
      %v3285 = vld [vmem:[%s35 + $0x24] sm:$0xf]
      %v3286 = vld [vmem:[%s35 + $0x28] sm:$0xf]
      %v3287 = vld [vmem:[%s35 + $0x2c] sm:$0xf]
      %v3288 = vld [vmem:[%s35 + $0x30] sm:$0xf]
      %v3289 = vld [vmem:[%s35 + $0x34] sm:$0xf]
      %v3290 = vld [vmem:[%s35 + $0x38] sm:$0xf]
      %v3291 = vld [vmem:[%s35 + $0x3c] sm:$0xf]
      %v3292 = vld [vmem:[%s37] sm:$0x1]
      %v3293 = vld [vmem:[%s39] sm:$0xf]
      %v3294 = vld [vmem:[%s39 + $0x4] sm:$0xf]
      %v3295 = vld [vmem:[%s39 + $0x8] sm:$0xf]
      %v3296 = vld [vmem:[%s39 + $0xc] sm:$0xf]
      %v3297 = vld [vmem:[%s41] sm:$0x1]
      %v3298 = vpack.c.bf16 %v1029, %v1029
      %v3300 = vlaneseq
      %v3301 = vshrl.u32 %v3300, 7
      %v3302 = vsub.s32 0, %v3301
      %v3303 = vrot.slane %v3292, %v3302
      %v3321 = vunpack.c.l.b16 %v3276
      %v3322 = vunpack.c.l.b16 %v3277
      %v3323 = vunpack.c.l.b16 %v3278
      %v3324 = vunpack.c.l.b16 %v3279
      %v3325 = vunpack.c.l.b16 %v3280
      %v3326 = vunpack.c.l.b16 %v3281
      %v3327 = vunpack.c.l.b16 %v3282
      %v3328 = vunpack.c.l.b16 %v3283
      %v3329 = vunpack.c.l.b16 %v3284
      %v3330 = vunpack.c.l.b16 %v3285
      %v3331 = vunpack.c.l.b16 %v3286
      %v3332 = vunpack.c.l.b16 %v3287
      %v3333 = vunpack.c.l.b16 %v3288
      %v3334 = vunpack.c.l.b16 %v3289
      %v3335 = vunpack.c.l.b16 %v3290
      %v3336 = vunpack.c.l.b16 %v3291
      %v3337 = vpack.c.b16 %v3322, %v3321
      %v3338 = vpack.c.b16 %v3324, %v3323
      %v3339 = vpack.c.b16 %v3326, %v3325
      %v3340 = vpack.c.b16 %v3328, %v3327
      %v3341 = vpack.c.b16 %v3330, %v3329
      %v3342 = vpack.c.b16 %v3332, %v3331
      %v3343 = vpack.c.b16 %v3334, %v3333
      %v3344 = vpack.c.b16 %v3336, %v3335
      %3353 = vmatprep.subr.bf16.mxu0 0
      %3354 = vmatpush1.bf16.msra.mxu0 %v3337
      %3355 = vmatprep.subr.bf16.mxu0 0
      %3356 = vmatpush1.bf16.msra.mxu0 %v3338
      %3357 = vmatprep.subr.bf16.mxu0 0
      %3358 = vmatpush1.bf16.msra.mxu0 %v3339
      %3359 = vmatprep.subr.bf16.mxu0 0
      %3360 = vmatpush1.bf16.msra.mxu0 %v3340
      %3361 = vmatprep.subr.bf16.mxu0 0
      %3362 = vmatpush1.bf16.msra.mxu0 %v3341
      %3363 = vmatprep.subr.bf16.mxu0 0
      %3364 = vmatpush1.bf16.msra.mxu0 %v3342
      %3365 = vmatprep.subr.bf16.mxu0 0
      %3366 = vmatpush1.bf16.msra.mxu0 %v3343
      %3367 = vmatprep.subr.bf16.mxu0 0
      %3368 = vmatpush1.bf16.msra.mxu0 %v3344
      %3369 = vmatprep.subr.bf16.mxu0 0
      %3370 = vmatpush1.bf16.msra.mxu0 0
      %3371 = vmatprep.subr.bf16.mxu0 0
      %3372 = vmatpush1.bf16.msra.mxu0 0
      %3373 = vmatprep.subr.bf16.mxu0 0
      %3374 = vmatpush1.bf16.msra.mxu0 0
      %3375 = vmatprep.subr.bf16.mxu0 0
      %3376 = vmatpush1.bf16.msra.mxu0 0
      %3377 = vmatprep.subr.bf16.mxu0 0
      %3378 = vmatpush1.bf16.msra.mxu0 0
      %3379 = vmatprep.subr.bf16.mxu0 0
      %3380 = vmatpush1.bf16.msra.mxu0 0
      %3381 = vmatprep.subr.bf16.mxu0 0
      %3382 = vmatpush1.bf16.msra.mxu0 0
      %3383 = vmatprep.subr.bf16.mxu0 0
      %3384 = vmatpush1.bf16.msra.mxu0 0
      %3385 = vmatprep.mubr.bf16.mxu0 0
      %3386 = vmatmul.mubr.bf16.gmra.mrb[0].mxu0 %v3298
      %v3387 = vpop.f32.mrb[0].mxu0
      %v3388 = vadd.f32 %v3303, %v3387
      %v3389 = vpop.f32.mrb[0].mxu0
      %v3390 = vpop.f32.mrb[0].mxu0
      %v3391 = vpop.f32.mrb[0].mxu0
      %3392 = vdwg.mxu0
      %vm3393 = vcmp.gt.f32.partialorder %v3388, 0.0
      %v3394 = vmul.f32 %v3388, 0.2
      %v3395 = vsel %vm3393, %v3388, %v3394
      %v3396 = vpack.c.bf16 %v3395, %v3395
      %v3398 = vlaneseq
      %v3399 = vshrl.u32 %v3398, 7
      %v3400 = vsub.s32 0, %v3399
      %v3401 = vrot.slane %v3297, %v3400
      %v3407 = vunpack.c.l.b16 %v3293
      %v3408 = vunpack.c.l.b16 %v3294
      %v3409 = vunpack.c.l.b16 %v3295
      %v3410 = vunpack.c.l.b16 %v3296
      %v3411 = vpack.c.b16 %v3408, %v3407
      %v3412 = vpack.c.b16 %v3410, %v3409
      %v3416 = vsel %vm1141, %v3396, 0
      %3418 = vmatprep.subr.bf16.mxu0 0
      %3419 = vmatpush1.bf16.msra.mxu0 %v3411
      %3420 = vmatprep.subr.bf16.mxu0 0
      %3421 = vmatpush1.bf16.msra.mxu0 %v3412
      %3422 = vmatprep.subr.bf16.mxu0 0
      %3423 = vmatpush1.bf16.msra.mxu0 0
      %3424 = vmatprep.subr.bf16.mxu0 0
      %3425 = vmatpush1.bf16.msra.mxu0 0
      %3426 = vmatprep.subr.bf16.mxu0 0
      %3427 = vmatpush1.bf16.msra.mxu0 0
      %3428 = vmatprep.subr.bf16.mxu0 0
      %3429 = vmatpush1.bf16.msra.mxu0 0
      %3430 = vmatprep.subr.bf16.mxu0 0
      %3431 = vmatpush1.bf16.msra.mxu0 0
      %3432 = vmatprep.subr.bf16.mxu0 0
      %3433 = vmatpush1.bf16.msra.mxu0 0
      %3434 = vmatprep.subr.bf16.mxu0 0
      %3435 = vmatpush1.bf16.msra.mxu0 0
      %3436 = vmatprep.subr.bf16.mxu0 0
      %3437 = vmatpush1.bf16.msra.mxu0 0
      %3438 = vmatprep.subr.bf16.mxu0 0
      %3439 = vmatpush1.bf16.msra.mxu0 0
      %3440 = vmatprep.subr.bf16.mxu0 0
      %3441 = vmatpush1.bf16.msra.mxu0 0
      %3442 = vmatprep.subr.bf16.mxu0 0
      %3443 = vmatpush1.bf16.msra.mxu0 0
      %3444 = vmatprep.subr.bf16.mxu0 0
      %3445 = vmatpush1.bf16.msra.mxu0 0
      %3446 = vmatprep.subr.bf16.mxu0 0
      %3447 = vmatpush1.bf16.msra.mxu0 0
      %3448 = vmatprep.subr.bf16.mxu0 0
      %3449 = vmatpush1.bf16.msra.mxu0 0
      %3450 = vmatprep.mubr.bf16.mxu0 0
      %3451 = vmatmul.mubr.bf16.gmra.mrb[0].mxu0 %v3416
      %v3452 = vpop.f32.mrb[0].mxu0
      %v3453 = vadd.f32 %v3401, %v3452
      %v3454 = vpop.f32.mrb[0].mxu0
      %v3455 = vpop.f32.mrb[0].mxu0
      %v3456 = vpop.f32.mrb[0].mxu0
      %3457 = vdwg.mxu0
      %v3458 = vmul.f32 %v3453, %v3453
      %vm3459 = vcmask 64512
      %v3460 = vsel %vm3459, %v3458, 0.0
      %3461 = vadd.xlane.f32.xlu0 %v3460
      %v3462 = vpop.xlane.xlu0 %3461
      %v3463 = vrot.slane %v3462, 4
      %v3464 = vadd.f32 %v3462, %v3463
      %v3465 = vrot.slane %v3464, 2
      %v3466 = vadd.f32 %v3464, %v3465
      %v3467 = vrot.slane %v3466, 1
      %v3468 = vadd.f32 %v3466, %v3467
      %s3469 = vtos %v3468
      %v3470 = vstv %s3469
      %v3471 = vrsqrt.pop %v3470
      %v3472 = vmul.f32 %v3470, %v3471
      %vm3473 = vcmp.eq.f32.partialorder %v3470, inf
      %v3474 = vsel %vm3473, %v3470, %v3472
      %vm3475 = vcmp.eq.f32.partialorder %v3470, 0.0
      %v3476 = vand.u32 %v3470, 2147483648
      %v3477 = vsel %vm3475, %v3476, %v3474
      %s3478 = vtos %v3477
      %v3479 = vmul.f32 %v3271, %v3271
      %vm3480 = vcmask 253952
      %v3481 = vsel %vm3480, %v3479, 0.0
      %3482 = vadd.xlane.f32.xlu0 %v3481
      %v3483 = vpop.xlane.xlu0 %3482
      %v3484 = vrot.slane %v3483, 4
      %v3485 = vadd.f32 %v3483, %v3484
      %v3486 = vrot.slane %v3485, 2
      %v3487 = vadd.f32 %v3485, %v3486
      %v3488 = vrot.slane %v3487, 1
      %v3489 = vadd.f32 %v3487, %v3488
      %s3490 = vtos %v3489
      %v3491 = vstv %s3490
      %v3492 = vrsqrt.pop %v3491
      %v3493 = vmul.f32 %v3491, %v3492
      %vm3494 = vcmp.eq.f32.partialorder %v3491, inf
      %v3495 = vsel %vm3494, %v3491, %v3493
      %vm3496 = vcmp.eq.f32.partialorder %v3491, 0.0
      %v3497 = vand.u32 %v3491, 2147483648
      %v3498 = vsel %vm3496, %v3497, %v3495
      %s3499 = vtos %v3498
      %v3501 = vrot.slane %v3479, 1
      %3502 = vrot.lane.b32.xlu0 %v3501, 96
      %v3503 = vpop.permute.xlu0 %3502
      %v3505 = vsel %vm3480, %v3503, 0.0
      %3506 = vadd.xlane.f32.xlu0 %v3505
      %v3507 = vpop.xlane.xlu0 %3506
      %v3508 = vrot.slane %v3507, 4
      %v3509 = vadd.f32 %v3507, %v3508
      %v3510 = vrot.slane %v3509, 2
      %v3511 = vadd.f32 %v3509, %v3510
      %v3512 = vrot.slane %v3511, 1
      %v3513 = vadd.f32 %v3511, %v3512
      %s3514 = vtos %v3513
      %v3515 = vstv %s3514
      %v3516 = vrsqrt.pop %v3515
      %v3517 = vmul.f32 %v3515, %v3516
      %vm3518 = vcmp.eq.f32.partialorder %v3515, inf
      %v3519 = vsel %vm3518, %v3515, %v3517
      %vm3520 = vcmp.eq.f32.partialorder %v3515, 0.0
      %v3521 = vand.u32 %v3515, 2147483648
      %v3522 = vsel %vm3520, %v3521, %v3519
      %s3523 = vtos %v3522
      %s3524 = sadd.f32 %s3499, 1e-08
      %v3525 = vstv %s3524
      %v3526 = vrcp.pop %v3525
      %v3527 = vmul.f32 %v1932, %v3526
      %v3528 = vlaneseq
      %v3529 = vshrl.u32 %v3528, 7
      %v3530 = vsub.s32 0, %v3529
      %v3531 = vrot.slane %v3271, %v3530
      %3533 = vset.pattern.permute.xlu0 0
      %3534 = vperm.xlu0 %3533, %v3527
      %v3535 = vpop.permute.xlu0 %3534
      %v3537 = vmul.f32 %v3531, %v3535
      %s3538 = sadd.f32 %s3523, 1e-08
      %v3539 = vstv %s3538
      %v3540 = vrcp.pop %v3539
      %v3541 = vmul.f32 %v1932, %v3540
      %v3542 = vlaneseq
      %v3543 = vshrl.u32 %v3542, 7
      %v3544 = vsub.s32 1, %v3543
      %v3545 = vrot.slane %v3271, %v3544
      %3547 = vset.pattern.permute.xlu0 0
      %3548 = vperm.xlu0 %3547, %v3541
      %v3549 = vpop.permute.xlu0 %3548
      %v3551 = vmul.f32 %v3545, %v3549
      %3553 = vrot.lane.b32.xlu0 %v3551, 96
      %v3554 = vpop.permute.xlu0 %3553
      %v3556 = vld [vmem:[%s43] sm:$0xf]
      %v3557 = vld [vmem:[%s43 + $0x4] sm:$0xf]
      %v3558 = vld [vmem:[%s43 + $0x8] sm:$0xf]
      %v3559 = vld [vmem:[%s43 + $0xc] sm:$0xf]
      %v3560 = vld [vmem:[%s45] sm:$0x1]
      %v3561 = vld [vmem:[%s47] sm:$0xf]
      %v3562 = vld [vmem:[%s47 + $0x4] sm:$0xf]
      %v3563 = vld [vmem:[%s47 + $0x8] sm:$0xf]
      %v3564 = vld [vmem:[%s47 + $0xc] sm:$0xf]
      %v3565 = vld [vmem:[%s49] sm:$0x1]
      %v3566 = vpack.c.bf16 %v3554, %v3537
      %v3568 = vlaneseq
      %v3569 = vshrl.u32 %v3568, 7
      %v3570 = vsub.s32 0, %v3569
      %v3571 = vrot.slane %v3560, %v3570
      %v3577 = vunpack.c.l.b16 %v3556
      %v3578 = vunpack.c.l.b16 %v3557
      %v3579 = vunpack.c.l.b16 %v3558
      %v3580 = vunpack.c.l.b16 %v3559
      %v3581 = vpack.c.b16 %v3578, %v3577
      %v3582 = vpack.c.b16 %v3580, %v3579
      %v3586 = vsel %vm1141, %v3566, 0
      %3588 = vmatprep.subr.bf16.mxu0 0
      %3589 = vmatpush1.bf16.msra.mxu0 %v3581
      %3590 = vmatprep.subr.bf16.mxu0 0
      %3591 = vmatpush1.bf16.msra.mxu0 %v3582
      %3592 = vmatprep.subr.bf16.mxu0 0
      %3593 = vmatpush1.bf16.msra.mxu0 0
      %3594 = vmatprep.subr.bf16.mxu0 0
      %3595 = vmatpush1.bf16.msra.mxu0 0
      %3596 = vmatprep.subr.bf16.mxu0 0
      %3597 = vmatpush1.bf16.msra.mxu0 0
      %3598 = vmatprep.subr.bf16.mxu0 0
      %3599 = vmatpush1.bf16.msra.mxu0 0
      %3600 = vmatprep.subr.bf16.mxu0 0
      %3601 = vmatpush1.bf16.msra.mxu0 0
      %3602 = vmatprep.subr.bf16.mxu0 0
      %3603 = vmatpush1.bf16.msra.mxu0 0
      %3604 = vmatprep.subr.bf16.mxu0 0
      %3605 = vmatpush1.bf16.msra.mxu0 0
      %3606 = vmatprep.subr.bf16.mxu0 0
      %3607 = vmatpush1.bf16.msra.mxu0 0
      %3608 = vmatprep.subr.bf16.mxu0 0
      %3609 = vmatpush1.bf16.msra.mxu0 0
      %3610 = vmatprep.subr.bf16.mxu0 0
      %3611 = vmatpush1.bf16.msra.mxu0 0
      %3612 = vmatprep.subr.bf16.mxu0 0
      %3613 = vmatpush1.bf16.msra.mxu0 0
      %3614 = vmatprep.subr.bf16.mxu0 0
      %3615 = vmatpush1.bf16.msra.mxu0 0
      %3616 = vmatprep.subr.bf16.mxu0 0
      %3617 = vmatpush1.bf16.msra.mxu0 0
      %3618 = vmatprep.subr.bf16.mxu0 0
      %3619 = vmatpush1.bf16.msra.mxu0 0
      %3620 = vmatprep.mubr.bf16.mxu0 0
      %3621 = vmatmul.mubr.bf16.gmra.mrb[0].mxu0 %v3586
      %v3622 = vpop.f32.mrb[0].mxu0
      %v3623 = vadd.f32 %v3571, %v3622
      %v3624 = vpop.f32.mrb[0].mxu0
      %v3625 = vpop.f32.mrb[0].mxu0
      %v3626 = vadd.f32 %v3571, %v3625
      %v3627 = vpop.f32.mrb[0].mxu0
      %3628 = vdwg.mxu0
      %vm3629 = vcmp.gt.f32.partialorder %v3623, 0.0
      %vm3630 = vcmp.gt.f32.partialorder %v3626, 0.0
      %v3631 = vmul.f32 %v3623, 0.2
      %v3632 = vmul.f32 %v3626, 0.2
      %v3633 = vsel %vm3629, %v3623, %v3631
      %v3634 = vsel %vm3630, %v3626, %v3632
      %v3635 = vpack.c.bf16 %v3634, %v3633
      %v3637 = vlaneseq
      %v3638 = vshrl.u32 %v3637, 7
      %v3639 = vsub.s32 0, %v3638
      %v3640 = vrot.slane %v3565, %v3639
      %v3646 = vunpack.c.l.b16 %v3561
      %v3647 = vunpack.c.l.b16 %v3562
      %v3648 = vunpack.c.l.b16 %v3563
      %v3649 = vunpack.c.l.b16 %v3564
      %v3650 = vpack.c.b16 %v3647, %v3646
      %v3651 = vpack.c.b16 %v3649, %v3648
      %v3655 = vsel %vm1141, %v3635, 0
      %3657 = vmatprep.subr.bf16.mxu0 0
      %3658 = vmatpush1.bf16.msra.mxu0 %v3650
      %3659 = vmatprep.subr.bf16.mxu0 0
      %3660 = vmatpush1.bf16.msra.mxu0 %v3651
      %3661 = vmatprep.subr.bf16.mxu0 0
      %3662 = vmatpush1.bf16.msra.mxu0 0
      %3663 = vmatprep.subr.bf16.mxu0 0
      %3664 = vmatpush1.bf16.msra.mxu0 0
      %3665 = vmatprep.subr.bf16.mxu0 0
      %3666 = vmatpush1.bf16.msra.mxu0 0
      %3667 = vmatprep.subr.bf16.mxu0 0
      %3668 = vmatpush1.bf16.msra.mxu0 0
      %3669 = vmatprep.subr.bf16.mxu0 0
      %3670 = vmatpush1.bf16.msra.mxu0 0
      %3671 = vmatprep.subr.bf16.mxu0 0
      %3672 = vmatpush1.bf16.msra.mxu0 0
      %3673 = vmatprep.subr.bf16.mxu0 0
      %3674 = vmatpush1.bf16.msra.mxu0 0
      %3675 = vmatprep.subr.bf16.mxu0 0
      %3676 = vmatpush1.bf16.msra.mxu0 0
      %3677 = vmatprep.subr.bf16.mxu0 0
      %3678 = vmatpush1.bf16.msra.mxu0 0
      %3679 = vmatprep.subr.bf16.mxu0 0
      %3680 = vmatpush1.bf16.msra.mxu0 0
      %3681 = vmatprep.subr.bf16.mxu0 0
      %3682 = vmatpush1.bf16.msra.mxu0 0
      %3683 = vmatprep.subr.bf16.mxu0 0
      %3684 = vmatpush1.bf16.msra.mxu0 0
      %3685 = vmatprep.subr.bf16.mxu0 0
      %3686 = vmatpush1.bf16.msra.mxu0 0
      %3687 = vmatprep.subr.bf16.mxu0 0
      %3688 = vmatpush1.bf16.msra.mxu0 0
      %3689 = vmatprep.mubr.bf16.mxu0 0
      %3690 = vmatmul.mubr.bf16.gmra.mrb[0].mxu0 %v3655
      %v3691 = vpop.f32.mrb[0].mxu0
      %v3692 = vadd.f32 %v3640, %v3691
      %v3693 = vpop.f32.mrb[0].mxu0
      %v3694 = vpop.f32.mrb[0].mxu0
      %v3695 = vadd.f32 %v3640, %v3694
      %v3696 = vpop.f32.mrb[0].mxu0
      %3697 = vdwg.mxu0
      %v3698 = vld [vmem:[%s51] sm:$0xf]
      %v3699 = vld [vmem:[%s53] sm:$0xf]
      %v3700 = vld [vmem:[%s57] sm:$0xf]
      %v3701 = vld [vmem:[%s57 + $0x4] sm:$0xf]
      %v3702 = vld [vmem:[%s57 + $0x8] sm:$0xf]
      %v3703 = vld [vmem:[%s57 + $0xc] sm:$0xf]
      %v3704 = vpack.c.bf16 %v1180, %v1180
      %v3706 = vsel %vm3459, %v3704, 0
      %vm3708 = vcmask 1043456
      %v3710 = vsel %vm3708, %v3699, 0
      %3712 = vmatprep.subr.bf16.mxu0 0
      %3713 = vmatpush1.bf16.msra.mxu0 %v3710
      %3714 = vmatprep.subr.bf16.mxu0 0
      %3715 = vmatpush1.bf16.msra.mxu0 0
      %3716 = vmatprep.subr.bf16.mxu0 0
      %3717 = vmatpush1.bf16.msra.mxu0 0
      %3718 = vmatprep.subr.bf16.mxu0 0
      %3719 = vmatpush1.bf16.msra.mxu0 0
      %3720 = vmatprep.subr.bf16.mxu0 0
      %3721 = vmatpush1.bf16.msra.mxu0 0
      %3722 = vmatprep.subr.bf16.mxu0 0
      %3723 = vmatpush1.bf16.msra.mxu0 0
      %3724 = vmatprep.subr.bf16.mxu0 0
      %3725 = vmatpush1.bf16.msra.mxu0 0
      %3726 = vmatprep.subr.bf16.mxu0 0
      %3727 = vmatpush1.bf16.msra.mxu0 0
      %3728 = vmatprep.subr.bf16.mxu0 0
      %3729 = vmatpush1.bf16.msra.mxu0 0
      %3730 = vmatprep.subr.bf16.mxu0 0
      %3731 = vmatpush1.bf16.msra.mxu0 0
      %3732 = vmatprep.subr.bf16.mxu0 0
      %3733 = vmatpush1.bf16.msra.mxu0 0
      %3734 = vmatprep.subr.bf16.mxu0 0
      %3735 = vmatpush1.bf16.msra.mxu0 0
      %3736 = vmatprep.subr.bf16.mxu0 0
      %3737 = vmatpush1.bf16.msra.mxu0 0
      %3738 = vmatprep.subr.bf16.mxu0 0
      %3739 = vmatpush1.bf16.msra.mxu0 0
      %3740 = vmatprep.subr.bf16.mxu0 0
      %3741 = vmatpush1.bf16.msra.mxu0 0
      %3742 = vmatprep.subr.bf16.mxu0 0
      %3743 = vmatpush1.bf16.msra.mxu0 0
      %3744 = vmatprep.mubr.bf16.mxu0 0
      %3745 = vmatmul.mubr.bf16.gmra.mrb[0].mxu0 %v3706
      %v3746 = vpop.f32.mrb[0].mxu0
      %v3747 = vadd.f32 0.0, %v3746
      %v3748 = vpop.f32.mrb[0].mxu0
      %v3749 = vpop.f32.mrb[0].mxu0
      %v3750 = vpop.f32.mrb[0].mxu0
      %3751 = vdwg.mxu0
      %v3752 = vpack.c.bf16 %v3695, %v3692
      %v3754 = vsel %vm3459, %v3752, 0
      %v3757 = vsel %vm3708, %v3698, 0
      %3759 = vmatprep.subr.bf16.mxu0 0
      %3760 = vmatpush1.bf16.msra.mxu0 %v3757
      %3761 = vmatprep.subr.bf16.mxu0 0
      %3762 = vmatpush1.bf16.msra.mxu0 0
      %3763 = vmatprep.subr.bf16.mxu0 0
      %3764 = vmatpush1.bf16.msra.mxu0 0
      %3765 = vmatprep.subr.bf16.mxu0 0
      %3766 = vmatpush1.bf16.msra.mxu0 0
      %3767 = vmatprep.subr.bf16.mxu0 0
      %3768 = vmatpush1.bf16.msra.mxu0 0
      %3769 = vmatprep.subr.bf16.mxu0 0
      %3770 = vmatpush1.bf16.msra.mxu0 0
      %3771 = vmatprep.subr.bf16.mxu0 0
      %3772 = vmatpush1.bf16.msra.mxu0 0
      %3773 = vmatprep.subr.bf16.mxu0 0
      %3774 = vmatpush1.bf16.msra.mxu0 0
      %3775 = vmatprep.subr.bf16.mxu0 0
      %3776 = vmatpush1.bf16.msra.mxu0 0
      %3777 = vmatprep.subr.bf16.mxu0 0
      %3778 = vmatpush1.bf16.msra.mxu0 0
      %3779 = vmatprep.subr.bf16.mxu0 0
      %3780 = vmatpush1.bf16.msra.mxu0 0
      %3781 = vmatprep.subr.bf16.mxu0 0
      %3782 = vmatpush1.bf16.msra.mxu0 0
      %3783 = vmatprep.subr.bf16.mxu0 0
      %3784 = vmatpush1.bf16.msra.mxu0 0
      %3785 = vmatprep.subr.bf16.mxu0 0
      %3786 = vmatpush1.bf16.msra.mxu0 0
      %3787 = vmatprep.subr.bf16.mxu0 0
      %3788 = vmatpush1.bf16.msra.mxu0 0
      %3789 = vmatprep.subr.bf16.mxu0 0
      %3790 = vmatpush1.bf16.msra.mxu0 0
      %3791 = vmatprep.mubr.bf16.mxu0 0
      %3792 = vmatmul.mubr.bf16.gmra.mrb[0].mxu0 %v3754
      %v3793 = vpop.f32.mrb[0].mxu0
      %v3794 = vadd.f32 %v3747, %v3793
      %v3795 = vpop.f32.mrb[0].mxu0
      %v3796 = vpop.f32.mrb[0].mxu0
      %v3797 = vadd.f32 %v3747, %v3796
      %v3798 = vpop.f32.mrb[0].mxu0
      %3799 = vdwg.mxu0
      %v3800 = vld [vmem:[%s55] sm:$0x1]
      %v3802 = vlaneseq
      %v3803 = vshrl.u32 %v3802, 7
      %v3804 = vsub.s32 0, %v3803
      %v3805 = vrot.slane %v3800, %v3804
      %v3807 = vadd.f32 %v3794, %v3805
      %v3808 = vadd.f32 %v3797, %v3805
      %vm3809 = vcmp.gt.f32.partialorder %v3807, 0.0
      %vm3810 = vcmp.gt.f32.partialorder %v3808, 0.0
      %v3811 = vmul.f32 %v3807, 0.2
      %v3812 = vmul.f32 %v3808, 0.2
      %v3813 = vsel %vm3809, %v3807, %v3811
      %v3814 = vsel %vm3810, %v3808, %v3812
      %v3815 = vpack.c.bf16 %v3814, %v3813
      %v3816 = vld [vmem:[%s59] sm:$0x1]
      %v3818 = vlaneseq
      %v3819 = vshrl.u32 %v3818, 7
      %v3820 = vsub.s32 0, %v3819
      %v3821 = vrot.slane %v3816, %v3820
      %v3827 = vunpack.c.l.b16 %v3700
      %v3828 = vunpack.c.l.b16 %v3701
      %v3829 = vunpack.c.l.b16 %v3702
      %v3830 = vunpack.c.l.b16 %v3703
      %v3831 = vpack.c.b16 %v3828, %v3827
      %v3832 = vpack.c.b16 %v3830, %v3829
      %v3836 = vsel %vm1141, %v3815, 0
      %3838 = vmatprep.subr.bf16.mxu0 0
      %3839 = vmatpush1.bf16.msra.mxu0 %v3831
      %3840 = vmatprep.subr.bf16.mxu0 0
      %3841 = vmatpush1.bf16.msra.mxu0 %v3832
      %3842 = vmatprep.subr.bf16.mxu0 0
      %3843 = vmatpush1.bf16.msra.mxu0 0
      %3844 = vmatprep.subr.bf16.mxu0 0
      %3845 = vmatpush1.bf16.msra.mxu0 0
      %3846 = vmatprep.subr.bf16.mxu0 0
      %3847 = vmatpush1.bf16.msra.mxu0 0
      %3848 = vmatprep.subr.bf16.mxu0 0
      %3849 = vmatpush1.bf16.msra.mxu0 0
      %3850 = vmatprep.subr.bf16.mxu0 0
      %3851 = vmatpush1.bf16.msra.mxu0 0
      %3852 = vmatprep.subr.bf16.mxu0 0
      %3853 = vmatpush1.bf16.msra.mxu0 0
      %3854 = vmatprep.subr.bf16.mxu0 0
      %3855 = vmatpush1.bf16.msra.mxu0 0
      %3856 = vmatprep.subr.bf16.mxu0 0
      %3857 = vmatpush1.bf16.msra.mxu0 0
      %3858 = vmatprep.subr.bf16.mxu0 0
      %3859 = vmatpush1.bf16.msra.mxu0 0
      %3860 = vmatprep.subr.bf16.mxu0 0
      %3861 = vmatpush1.bf16.msra.mxu0 0
      %3862 = vmatprep.subr.bf16.mxu0 0
      %3863 = vmatpush1.bf16.msra.mxu0 0
      %3864 = vmatprep.subr.bf16.mxu0 0
      %3865 = vmatpush1.bf16.msra.mxu0 0
      %3866 = vmatprep.subr.bf16.mxu0 0
      %3867 = vmatpush1.bf16.msra.mxu0 0
      %3868 = vmatprep.subr.bf16.mxu0 0
      %3869 = vmatpush1.bf16.msra.mxu0 0
      %3870 = vmatprep.mubr.bf16.mxu0 0
      %3871 = vmatmul.mubr.bf16.gmra.mrb[0].mxu0 %v3836
      %v3872 = vpop.f32.mrb[0].mxu0
      %v3873 = vadd.f32 %v3821, %v3872
      %v3874 = vpop.f32.mrb[0].mxu0
      %v3875 = vpop.f32.mrb[0].mxu0
      %v3876 = vadd.f32 %v3821, %v3875
      %v3877 = vpop.f32.mrb[0].mxu0
      %3878 = vdwg.mxu0
      %3879 = vst [vmem:[%s1020] sm:$0xff] %v3873
      %3880 = vst [vmem:[%s1020 + $0x8] sm:$0xff] %v3876
      %v3881 = vsub.f32 %v3873, %v1029
      %v3882 = vsub.f32 %v3876, %v1029
      %v3883 = vmul.f32 %v3881, %v3881
      %v3884 = vmul.f32 %v3882, %v3882
      %v3885 = vadd.f32 %v3883, %v3884
      %3886 = vadd.xlane.f32.xlu0 %v3885
      %v3887 = vpop.xlane.xlu0 %3886
      %v3888 = vrot.slane %v3887, 4
      %v3889 = vadd.f32 %v3887, %v3888
      %v3890 = vrot.slane %v3889, 2
      %v3891 = vadd.f32 %v3889, %v3890
      %v3892 = vrot.slane %v3891, 1
      %v3893 = vadd.f32 %v3891, %v3892
      %s3894 = vtos %v3893
      %s3895 = smul.f32 %s3894, 0.0078125
      %v3896 = vmul.f32 %v3692, %v3692
      %v3897 = vsel %vm3459, %v3896, 0.0
      %3898 = vadd.xlane.f32.xlu0 %v3897
      %v3899 = vpop.xlane.xlu0 %3898
      %v3900 = vrot.slane %v3899, 4
      %v3901 = vadd.f32 %v3899, %v3900
      %v3902 = vrot.slane %v3901, 2
      %v3903 = vadd.f32 %v3901, %v3902
      %v3904 = vrot.slane %v3903, 1
      %v3905 = vadd.f32 %v3903, %v3904
      %s3906 = vtos %v3905
      %v3907 = vstv %s3906
      %v3908 = vrsqrt.pop %v3907
      %v3909 = vmul.f32 %v3907, %v3908
      %vm3910 = vcmp.eq.f32.partialorder %v3907, inf
      %v3911 = vsel %vm3910, %v3907, %v3909
      %vm3912 = vcmp.eq.f32.partialorder %v3907, 0.0
      %v3913 = vand.u32 %v3907, 2147483648
      %v3914 = vsel %vm3912, %v3913, %v3911
      %s3915 = vtos %v3914
      %v3916 = vmul.f32 %v3695, %v3695
      %v3917 = vsel %vm3459, %v3916, 0.0
      %3918 = vadd.xlane.f32.xlu0 %v3917
      %v3919 = vpop.xlane.xlu0 %3918
      %v3920 = vrot.slane %v3919, 4
      %v3921 = vadd.f32 %v3919, %v3920
      %v3922 = vrot.slane %v3921, 2
      %v3923 = vadd.f32 %v3921, %v3922
      %v3924 = vrot.slane %v3923, 1
      %v3925 = vadd.f32 %v3923, %v3924
      %s3926 = vtos %v3925
      %v3927 = vstv %s3926
      %v3928 = vrsqrt.pop %v3927
      %v3929 = vmul.f32 %v3927, %v3928
      %vm3930 = vcmp.eq.f32.partialorder %v3927, inf
      %v3931 = vsel %vm3930, %v3927, %v3929
      %vm3932 = vcmp.eq.f32.partialorder %v3927, 0.0
      %v3933 = vand.u32 %v3927, 2147483648
      %v3934 = vsel %vm3932, %v3933, %v3931
      %s3935 = vtos %v3934
      %v3936 = vmul.f32 %v3692, %v3453
      %v3937 = vsel %vm3459, %v3936, 0.0
      %3938 = vadd.xlane.f32.xlu0 %v3937
      %v3939 = vpop.xlane.xlu0 %3938
      %v3940 = vrot.slane %v3939, 4
      %v3941 = vadd.f32 %v3939, %v3940
      %v3942 = vrot.slane %v3941, 2
      %v3943 = vadd.f32 %v3941, %v3942
      %v3944 = vrot.slane %v3943, 1
      %v3945 = vadd.f32 %v3943, %v3944
      %s3946 = vtos %v3945
      %s3947 = smax.f32 %s3915, 1e-08
      %s3948 = smax.f32 %s3478, 1e-08
      %s3949 = smul.f32 %s3947, %s3948
      %v3950 = vstv %s3949
      %v3951 = vrcp.pop %v3950
      %s3952 = vtos %v3951
      %s3953 = smul.f32 %s3946, %s3952
      %v3954 = vmul.f32 %v3695, %v3453
      %v3955 = vsel %vm3459, %v3954, 0.0
      %3956 = vadd.xlane.f32.xlu0 %v3955
      %v3957 = vpop.xlane.xlu0 %3956
      %v3958 = vrot.slane %v3957, 4
      %v3959 = vadd.f32 %v3957, %v3958
      %v3960 = vrot.slane %v3959, 2
      %v3961 = vadd.f32 %v3959, %v3960
      %v3962 = vrot.slane %v3961, 1
      %v3963 = vadd.f32 %v3961, %v3962
      %s3964 = vtos %v3963
      %s3965 = smax.f32 %s3935, 1e-08
      %s3966 = smul.f32 %s3965, %s3948
      %v3967 = vstv %s3966
      %v3968 = vrcp.pop %v3967
      %s3969 = vtos %v3968
      %s3970 = smul.f32 %s3964, %s3969
      %s3971 = ssub.f32 2.0, %s3970
      %s3972 = ssub.f32 %s3971, %s3953
      %s3973 = smul.f32 %s3972, 0.1
      %s3974 = sadd.f32 %s3895, %s3973
      %v3975 = vlaneseq
      %v3976 = vand.u32 %v3975, 127
      %vm3977 = vcmp.eq.s32.totalorder %v3976, 0
      %v3978 = vstv %s3895
      %v3979 = vsel %vm3977, %v3978, 0.0
      %vm3980 = vcmp.eq.s32.totalorder %v3976, 1
      %v3981 = vstv %s3972
      %v3982 = vsel %vm3980, %v3981, %v3979
      %vm3983 = vcmp.eq.s32.totalorder %v3976, 2
      %v3984 = vstv %s3974
      %v3985 = vsel %vm3983, %v3984, %v3982
      %3986 = vst [vmem:[%s1023] sm:$0x1] %v3985
      %p3987 = scmp.lt.s32.totalorder %s77, 1
      %s3988 = scalar_select %p3987, %s77, 1
      %s3989 = smul.addr %s3988, 2
      %s3990 = smul.addr %s3989, 8
      %s3991 = scalar_lea.vmem %s61, %s3990
      %p3992 = scmp.lt.s32.totalorder %s77, 1
      %s3993 = scalar_select %p3992, %s77, 1
      %s3994 = scalar_lea.vmem %s63, %s3993
      // Predicated region
      $region141: #{clipnet_forward.1} parent=139 // pred_check
        %p3995 = pneg %p745
      $region142: #{clipnet_forward.1} parent=139 // pred_check_branch
        %3997 = sbr.rel (%p3995) target = $region144
      $region143: #{clipnet_forward.1} parent=139 // pred_region
        _
      $region144: #{clipnet_forward.1} parent=139 // pred_fallthru
        _
      // Predicated region
      $region145: #{clipnet_forward.1} parent=139 // pred_check
        %p3998 = pneg %p771
      $region146: #{clipnet_forward.1} parent=139 // pred_check_branch
        %4000 = sbr.rel (%p3998) target = $region148
      $region147: #{clipnet_forward.1} parent=139 // pred_region
        _
      $region148: #{clipnet_forward.1} parent=139 // pred_fallthru
        _
    $region140: #{clipnet_forward.1} parent=5 // pred_fallthru
      _
    %p4001 = scmp.le.s32.totalorder 2, %s72
    // Predicated region
    $region149: #{clipnet_forward.1} parent=5 // pred_check
      %p4002 = pneg %p4001
    $region150: #{clipnet_forward.1} parent=5 // pred_check_branch
      %4004 = sbr.rel (%p4002) target = $region152
    $region151: #{clipnet_forward.1} parent=5 // pred_region
      %s4005 = ssub.s32 %s72, 2
      // Predicated region
      $region153: #{clipnet_forward.1} parent=151 // pred_check
        %p4006 = pneg %p751
      $region154: #{clipnet_forward.1} parent=151 // pred_check_branch
        %4008 = sbr.rel (%p4006) target = $region156
      $region155: #{clipnet_forward.1} parent=151 // pred_region
        %p4009 = scmp.lt.s32.totalorder %s78, 1
        %s4010 = scalar_select %p4009, %s78, 1
        %s4011 = smul.addr %s4010, 2
        %s4012 = smul.addr %s4011, 8
        %s4013 = scalar_lea.vmem %s61, %s4012
      $region156: #{clipnet_forward.1} parent=151 // pred_fallthru
        _
      // Predicated region
      $region157: #{clipnet_forward.1} parent=151 // pred_check
        %p4014 = pneg %p777
      $region158: #{clipnet_forward.1} parent=151 // pred_check_branch
        %4016 = sbr.rel (%p4014) target = $region160
      $region159: #{clipnet_forward.1} parent=151 // pred_region
        %p4017 = scmp.lt.s32.totalorder %s78, 1
        %s4018 = scalar_select %p4017, %s78, 1
        %s4019 = scalar_lea.vmem %s63, %s4018
      $region160: #{clipnet_forward.1} parent=151 // pred_fallthru
        _
    $region152: #{clipnet_forward.1} parent=5 // pred_fallthru
      _
  $region6: #{clipnet_forward.1} parent=0 // loop_footer
    %s76 = sadd.s32 1, %s72
  $region7: #{clipnet_forward.1} parent=0 // loop_footer_branch
    %71 = sbr.rel target = $region3
  $region8: #{clipnet_forward.1} parent=0 // loop_exit
    _

</llo_original>
